<compile_context>
chip_gen: v5e
topology: v5e:2x2
jax: 0.10.0
libtpu: 0.0.40
codegen_flags: <defaults>
</compile_context>

<pallas_src>
import math

import jax
import jax.numpy as jnp
from jax.experimental import pallas as pl
from jax.experimental.pallas import tpu as pltpu

LANES = 128


def _tpu_vmem_capacity_bytes():
    try:
        return int(pltpu.get_tpu_info().vmem_capacity_bytes)
    except Exception:
        return 64 * 1024 * 1024   # conservative fallback: assume v7x-sized VMEM


# Chip-adaptive defaults:
#   v5e / v6e (128 MiB VMEM, 1 TC): 32K-row tiles, 64 MiB scoped VMEM limit.
#   v7x (64 MiB VMEM, 2 TCs):       16K-row tiles, 48 MiB scoped VMEM limit,
#   so double-buffered f32 x tiles + the [TILE_B, 64] f32 intermediates fit
#   with headroom and both TensorCores get multiple tiles each.
if _tpu_vmem_capacity_bytes() >= (100 << 20):
    TILE_B_DEFAULT = 32768
    VMEM_LIMIT = 64 * 1024 * 1024
else:
    TILE_B_DEFAULT = 16384
    VMEM_LIMIT = 48 * 1024 * 1024


def mlp_kernel(x_ref, w1_ref, b1_ref, w2_ref, b2_ref, o_ref):
    # In-kernel bf16 cast of the streamed f32 x tile (rides on idle VPU
    # slots; avoids a separate full-HBM cast pass in the wrapper).
    xb = x_ref[...].astype(jnp.bfloat16)
    # Layer 1: Linear(D, 64) on the MXU; bf16 operands, f32 accumulation.
    h = jnp.dot(xb, w1_ref[...], preferred_element_type=jnp.float32)
    # Bias + Tanh in f32 (VPU + EUP).  Kept f32 on all chips: matches the
    # f32 reference tightly and works on v5e (no bf16 VPU/EUP).  On v6e/v7x
    # a bf16 elementwise path would halve the h footprint if EUP ever binds.
    h = jnp.tanh(h + b1_ref[...])
    # Layer 2: Linear(64, 1) as VPU multiply + 64-wide cross-lane reduce
    # (XLU), scalar bias read from SMEM.  Avoids a 1-lane-wide MXU matmul.
    y = jnp.sum(h * w2_ref[...], axis=-1) + b2_ref[0, 0]        # [tile_b] f32
    # Lane-dense store: batch packed 128-per-row along the lane axis.
    o_ref[...] = y.reshape(o_ref.shape).astype(o_ref.dtype)


def mlp_forward(x, w1, b1, w2, b2, *, tile_b=None):
    """x: [B, D] f32; w1: [D, 64]; b1: [1, 64]; w2: [1, 64]; b2: [1, 1].
    Returns [B, 1] f32 == tanh(x @ w1 + b1) @ w2.T + b2."""
    B, D = x.shape
    H = w1.shape[1]

    if tile_b is None:
        tile_b = TILE_B_DEFAULT
    # Never use a tile much larger than the batch; keep it a multiple of
    # 1024 so the lane-dense output block stays a legal (>=8, 128) tile.
    eff_tile = max(LANES * 8, min(tile_b, -(-B // 1024) * 1024))
    n_tiles = pl.cdiv(B, eff_tile)
    b_pad = n_tiles * eff_tile          # only the *output* is padded
    rows = eff_tile // LANES

    # Weights are tiny and stay VMEM-resident across the whole grid; the
    # bf16 cast of w1 here is a negligible one-off (D*H elements).
    w1_bf = w1.astype(jnp.bfloat16)

    out2d = pl.pallas_call(
        mlp_kernel,
        out_shape=jax.ShapeDtypeStruct((b_pad // LANES, LANES), jnp.float32),
        grid_spec=pltpu.PrefetchScalarGridSpec(
            num_scalar_prefetch=0,
            grid=(n_tiles,),
            in_specs=[
                # x streamed as f32; last tile may be partial (over-read
                # rows are garbage, bounded row-wise, sliced off below).
                # If xprof ever shows exposed DMA here, add
                # pipeline_mode=pl.Buffered(3) to this spec only.
                pl.BlockSpec((eff_tile, D), lambda i: (i, 0)),
                pl.BlockSpec((D, H), lambda i: (0, 0)),             # w1: resident
                pl.BlockSpec((1, H), lambda i: (0, 0)),             # b1: resident
                pl.BlockSpec((1, H), lambda i: (0, 0)),             # w2 row: resident
                pl.BlockSpec(memory_space=pltpu.MemorySpace.SMEM),  # b2 scalar
            ],
            out_specs=pl.BlockSpec((rows, LANES), lambda i: (i, 0)),
        ),
        compiler_params=pltpu.CompilerParams(
            # Batch tiles are independent -> shard across TensorCores on
            # v7x (harmless no-op on single-TC v5e/v6e).
            dimension_semantics=("parallel",),
            vmem_limit_bytes=VMEM_LIMIT,
        ),
        cost_estimate=pl.CostEstimate(
            flops=2 * b_pad * D * H + 3 * b_pad * H,
            transcendentals=b_pad * H,
            # f32 x read once, lane-dense f32 output written once, tiny weights.
            bytes_accessed=B * D * 4 + b_pad * 4 + D * H * 2 + H * 4 * 2 + 4,
        ),
    )(x, w1_bf, b1, w2, b2)

    # Undo the lane-dense packing and the batch-tail padding.
    return out2d.reshape(-1)[:B].reshape(B, 1)


def init_params(key, dim, hidden=64):
    """Deterministic init matching the PyTorch module:
       xavier_uniform on weights, default Linear uniform on biases."""
    k1, k2, k3, k4 = jax.random.split(key, 4)

    # Layer 1: Linear(dim, hidden). xavier_uniform bound = sqrt(6/(fan_in+fan_out))
    bound1 = math.sqrt(6.0 / (dim + hidden))
    w1 = jax.random.uniform(k1, (hidden, dim), jnp.float32, -bound1, bound1)
    bb1 = 1.0 / math.sqrt(dim)
    b1 = jax.random.uniform(k2, (hidden,), jnp.float32, -bb1, bb1)

    # Layer 2: Linear(hidden, 1)
    bound2 = math.sqrt(6.0 / (hidden + 1))
    w2 = jax.random.uniform(k3, (1, hidden), jnp.float32, -bound2, bound2)
    bb2 = 1.0 / math.sqrt(hidden)
    b2 = jax.random.uniform(k4, (1,), jnp.float32, -bb2, bb2)

    # Kernel layout: w1 as [D, H] (x @ w1), w2 as a [1, H] row, b2 as [1, 1].
    return w1.T, b1.reshape(1, hidden), w2, b2.reshape(1, 1)


if __name__ == "__main__":
    key = jax.random.PRNGKey(0)
    kx, kp = jax.random.split(key)

    # Small tabular batch of min-max-normalized features in [0, 1].
    # B=2500 is deliberately NOT a multiple of the tile so the partial
    # last-x-block (no-pad) path is exercised.
    B, D = 2500, 32
    x = jax.random.uniform(kx, (B, D), jnp.float32, 0.0, 1.0)
    w1, b1, w2, b2 = init_params(kp, D)

    # Default chip-adaptive tile (single partial tile at this small B).
    out = jax.block_until_ready(mlp_forward(x, w1, b1, w2, b2))
    # Forced small tile: exercises the multi-tile grid + tail handling.
    out_small = jax.block_until_ready(
        mlp_forward(x, w1, b1, w2, b2, tile_b=1024))

    # Reference in plain JAX with the same bf16 layer-1 operands (f32 math).
    xb = x.astype(jnp.bfloat16).astype(jnp.float32)
    w1b = w1.astype(jnp.bfloat16).astype(jnp.float32)
    h = jnp.tanh(xb @ w1b + b1)
    ref = (h * w2).sum(axis=-1, keepdims=True) + b2

    assert out.shape == (B, 1)
    assert out_small.shape == (B, 1)
    assert jnp.allclose(out, ref, atol=1e-4, rtol=1e-4), float(
        jnp.max(jnp.abs(out - ref)))
    assert jnp.allclose(out_small, ref, atol=1e-4, rtol=1e-4), float(
        jnp.max(jnp.abs(out_small - ref)))

    print("KERNEL_OK")
</pallas_src>

<mosaic_0001>
module attributes {stable_mosaic.version = 11 : i64} {
  func.func @mlp_kernel(%arg0: i32, %arg1: memref<3072x32xf32, #tpu.memory_space<vmem>>, %arg2: memref<32x64xbf16, #tpu.memory_space<vmem>>, %arg3: memref<1x64xf32, #tpu.memory_space<vmem>>, %arg4: memref<1x64xf32, #tpu.memory_space<vmem>>, %arg5: memref<1x1xf32, #tpu.memory_space<smem>>, %arg6: memref<24x128xf32, #tpu.memory_space<vmem>>) attributes {dimension_semantics = [#tpu.dimension_semantics<parallel>], iteration_bounds = array<i64: 1>, scalar_prefetch = 0 : i64, scratch_operands = 0 : i64, tpu.core_type = #tpu.core_type<tc>, window_params = [{transform_indices = @transform_0, window_bounds = array<i64: 3072, 32>}, {pipeline_mode = #tpu.pipeline_mode<synchronous>, transform_indices = @transform_1, window_bounds = array<i64: 32, 64>}, {pipeline_mode = #tpu.pipeline_mode<synchronous>, transform_indices = @transform_2, window_bounds = array<i64: 1, 64>}, {pipeline_mode = #tpu.pipeline_mode<synchronous>, transform_indices = @transform_3, window_bounds = array<i64: 1, 64>}, {transform_indices = @transform_4, window_bounds = array<i64: 1, 1>}, {transform_indices = @transform_5, window_bounds = array<i64: 24, 128>}]} {
    %c0 = arith.constant 0 : index
    %c0_0 = arith.constant 0 : index
    %0 = vector.load %arg1[%c0, %c0_0] : memref<3072x32xf32, #tpu.memory_space<vmem>>, vector<3072x32xf32>
    %1 = arith.truncf %0 : vector<3072x32xf32> to vector<3072x32xbf16>
    %c0_1 = arith.constant 0 : index
    %c0_2 = arith.constant 0 : index
    %2 = vector.load %arg2[%c0_1, %c0_2] : memref<32x64xbf16, #tpu.memory_space<vmem>>, vector<32x64xbf16>
    %cst = arith.constant dense<0.000000e+00> : vector<3072x64xf32>
    %3 = tpu.matmul %1, %2, %cst {dimension_numbers = #tpu.dot_dimension_numbers<[1], [0], [0], [1], [0, 0, 1, 1], [], []>} : vector<3072x32xbf16>, vector<32x64xbf16>, vector<3072x64xf32> -> vector<3072x64xf32>
    %c0_3 = arith.constant 0 : index
    %c0_4 = arith.constant 0 : index
    %4 = vector.load %arg3[%c0_3, %c0_4] : memref<1x64xf32, #tpu.memory_space<vmem>>, vector<1x64xf32>
    %5 = vector.broadcast %4 : vector<1x64xf32> to vector<3072x64xf32>
    %6 = arith.addf %3, %5 : vector<3072x64xf32>
    %7 = math.tanh %6 : vector<3072x64xf32>
    %c0_5 = arith.constant 0 : index
    %c0_6 = arith.constant 0 : index
    %8 = vector.load %arg4[%c0_5, %c0_6] : memref<1x64xf32, #tpu.memory_space<vmem>>, vector<1x64xf32>
    %9 = vector.broadcast %8 : vector<1x64xf32> to vector<3072x64xf32>
    %10 = arith.mulf %7, %9 : vector<3072x64xf32>
    %cst_7 = arith.constant dense<0.000000e+00> : vector<3072xf32>
    %11 = vector.multi_reduction <add>, %10, %cst_7 [1] : vector<3072x64xf32> to vector<3072xf32>
    %c0_8 = arith.constant 0 : index
    %c0_9 = arith.constant 0 : index
    %12 = memref.load %arg5[%c0_8, %c0_9] : memref<1x1xf32, #tpu.memory_space<smem>>
    %13 = vector.broadcast %12 : f32 to vector<3072xf32>
    %14 = arith.addf %11, %13 : vector<3072xf32>
    %15 = vector.shape_cast %14 : vector<3072xf32> to vector<24x128xf32>
    %c0_10 = arith.constant 0 : index
    %c0_11 = arith.constant 0 : index
    %16 = vector.load %arg6[%c0_10, %c0_11] : memref<24x128xf32, #tpu.memory_space<vmem>>, vector<24x128xf32>
    tpu.vector_store %arg6[%c0_10, %c0_11], %15 {strides = array<i32>} : memref<24x128xf32, #tpu.memory_space<vmem>>, vector<24x128xf32>,
    return
  }
  func.func @transform_0(%arg0: i32) -> (i32, i32) {
    %c0_i32 = arith.constant 0 : i32
    %c0_i32_0 = arith.constant 0 : i32
    return %arg0, %c0_i32 : i32, i32
  }
  func.func @transform_1(%arg0: i32) -> (i32, i32) {
    %c0_i32 = arith.constant 0 : i32
    %c0_i32_0 = arith.constant 0 : i32
    %c0_i32_1 = arith.constant 0 : i32
    return %c0_i32, %c0_i32_0 : i32, i32
  }
  func.func @transform_2(%arg0: i32) -> (i32, i32) {
    %c0_i32 = arith.constant 0 : i32
    %c0_i32_0 = arith.constant 0 : i32
    %c0_i32_1 = arith.constant 0 : i32
    return %c0_i32, %c0_i32_0 : i32, i32
  }
  func.func @transform_3(%arg0: i32) -> (i32, i32) {
    %c0_i32 = arith.constant 0 : i32
    %c0_i32_0 = arith.constant 0 : i32
    %c0_i32_1 = arith.constant 0 : i32
    return %c0_i32, %c0_i32_0 : i32, i32
  }
  func.func @transform_4(%arg0: i32) -> (i32, i32) {
    %c0_i32 = arith.constant 0 : i32
    %c0_i32_0 = arith.constant 0 : i32
    %c0_i32_1 = arith.constant 0 : i32
    return %c0_i32, %c0_i32_0 : i32, i32
  }
  func.func @transform_5(%arg0: i32) -> (i32, i32) {
    %c0_i32 = arith.constant 0 : i32
    %c0_i32_0 = arith.constant 0 : i32
    return %arg0, %c0_i32 : i32, i32
  }
}

</mosaic_0001>

<llo_original>
// kernel: tpu_custom_call.1
$region0: #{tpu_custom_call.1}
  #allocation0 [shape = 'u32[]', space=smem, size = 0x4, offset = 0x4, fixed_abs, tag = 'smem constant byte address 0x4 - core index']
  #allocation1 [shape = 'u32[72,128]{1,0:T(1,128)}', space=vmem, size = 0x9000, scoped, tag = 'internal scratch']
  #allocation2 [shape = 'f32[1,1]{1,0:T(1,128)S(6)}', space=smem, size = 0x200, scoped, tag = 'scoped memory for tpu_custom_call.1']
  %s0 = inlined_call_operand.vmem [shape: f32[2500,32], index: 0, kind: input, shape index: {}]
  %s1 = inlined_call_operand.vmem [shape: bf16[32,64], index: 1, kind: input, shape index: {}]
  %s2 = inlined_call_operand.vmem [shape: f32[1,64], index: 2, kind: input, shape index: {}]
  %s3 = inlined_call_operand.vmem [shape: f32[1,64], index: 3, kind: input, shape index: {}]
  %s4 = inlined_call_operand.<no memory space> [shape: f32[1,1], index: 4, kind: input, shape index: {}]
  %s5 = inlined_call_operand.hbm [shape: f32[24,128], index: 5, kind: output, shape index: {}]
  %s6 = sld [smem:[#allocation0]]
  $region30: #{tpu_custom_call.1} parent=0
    _
  %s8 = ssub.s32 1, %s6
  %s9 = scalar_select 0, %s8, %s6
  %10 = sst [smem:[#allocation2]] %s4
  $region1: #{tpu_custom_call.1} parent=0
    #allocation3 [shape = 'u8[12288]{0}', space=vmem, size = 0x3000, scoped, tag = 'output window, operand 0, single buffered']
    #allocation4 [shape = 's32[1]{0}', space=sflag, size = 0x4, scoped, tag = 'scoped memory for tpu_custom_call.1']
    %11 = vsyncpa [#allocation4], 0
    // Predicated region
    $region2: #{tpu_custom_call.1} parent=1 // pred_check
      _
    $region3: #{tpu_custom_call.1} parent=1 // pred_check_branch
      %13 = sbr.rel (0) target = $region5
    $region4: #{tpu_custom_call.1} parent=1 // pred_region
      _
    $region5: #{tpu_custom_call.1} parent=1 // pred_fallthru
      _
    // Predicated region
    $region6: #{tpu_custom_call.1} parent=1 // pred_check
      _
    $region7: #{tpu_custom_call.1} parent=1 // pred_check_branch
      %15 = sbr.rel (0) target = $region9
    $region8: #{tpu_custom_call.1} parent=1 // pred_region
      _
    $region9: #{tpu_custom_call.1} parent=1 // pred_fallthru
      _
    // Predicated region
    $region10: #{tpu_custom_call.1} parent=1 // pred_check
      _
    $region11: #{tpu_custom_call.1} parent=1 // pred_check_branch
      %17 = sbr.rel (0) target = $region13
    $region12: #{tpu_custom_call.1} parent=1 // pred_region
      _
    $region13: #{tpu_custom_call.1} parent=1 // pred_fallthru
      _
    // Predicated region
    $region14: #{tpu_custom_call.1} parent=1 // pred_check
      _
    $region15: #{tpu_custom_call.1} parent=1 // pred_check_branch
      %19 = sbr.rel (0) target = $region17
    $region16: #{tpu_custom_call.1} parent=1 // pred_region
      _
    $region17: #{tpu_custom_call.1} parent=1 // pred_fallthru
      _
    // Predicated region
    $region18: #{tpu_custom_call.1} parent=1 // pred_check
      _
    $region19: #{tpu_custom_call.1} parent=1 // pred_check_branch
      %21 = sbr.rel (0) target = $region21
    $region20: #{tpu_custom_call.1} parent=1 // pred_region
      _
    $region21: #{tpu_custom_call.1} parent=1 // pred_fallthru
      _
    %v23 = vld [vmem:[%s0] sm:$0xff]
    %v24 = vld [vmem:[%s0 + $0x8] sm:$0xff]
    %v25 = vld [vmem:[%s0 + $0x10] sm:$0xff]
    %v26 = vld [vmem:[%s0 + $0x18] sm:$0xff]
    %v27 = vld [vmem:[%s0 + $0x20] sm:$0xff]
    %v28 = vld [vmem:[%s0 + $0x28] sm:$0xff]
    %v29 = vld [vmem:[%s0 + $0x30] sm:$0xff]
    %v30 = vld [vmem:[%s0 + $0x38] sm:$0xff]
    %v31 = vld [vmem:[%s0 + $0x40] sm:$0xff]
    %v32 = vld [vmem:[%s0 + $0x48] sm:$0xff]
    %v33 = vld [vmem:[%s0 + $0x50] sm:$0xff]
    %v34 = vld [vmem:[%s0 + $0x58] sm:$0xff]
    %v35 = vld [vmem:[%s0 + $0x60] sm:$0xff]
    %v36 = vld [vmem:[%s0 + $0x68] sm:$0xff]
    %v37 = vld [vmem:[%s0 + $0x70] sm:$0xff]
    %v38 = vld [vmem:[%s0 + $0x78] sm:$0xff]
    %v39 = vld [vmem:[%s0 + $0x80] sm:$0xff]
    %v40 = vld [vmem:[%s0 + $0x88] sm:$0xff]
    %v41 = vld [vmem:[%s0 + $0x90] sm:$0xff]
    %v42 = vld [vmem:[%s0 + $0x98] sm:$0xff]
    %v43 = vld [vmem:[%s0 + $0xa0] sm:$0xff]
    %v44 = vld [vmem:[%s0 + $0xa8] sm:$0xff]
    %v45 = vld [vmem:[%s0 + $0xb0] sm:$0xff]
    %v46 = vld [vmem:[%s0 + $0xb8] sm:$0xff]
    %v47 = vld [vmem:[%s0 + $0xc0] sm:$0xff]
    %v48 = vld [vmem:[%s0 + $0xc8] sm:$0xff]
    %v49 = vld [vmem:[%s0 + $0xd0] sm:$0xff]
    %v50 = vld [vmem:[%s0 + $0xd8] sm:$0xff]
    %v51 = vld [vmem:[%s0 + $0xe0] sm:$0xff]
    %v52 = vld [vmem:[%s0 + $0xe8] sm:$0xff]
    %v53 = vld [vmem:[%s0 + $0xf0] sm:$0xff]
    %v54 = vld [vmem:[%s0 + $0xf8] sm:$0xff]
    %v55 = vld [vmem:[%s0 + $0x100] sm:$0xff]
    %v56 = vld [vmem:[%s0 + $0x108] sm:$0xff]
    %v57 = vld [vmem:[%s0 + $0x110] sm:$0xff]
    %v58 = vld [vmem:[%s0 + $0x118] sm:$0xff]
    %v59 = vld [vmem:[%s0 + $0x120] sm:$0xff]
    %v60 = vld [vmem:[%s0 + $0x128] sm:$0xff]
    %v61 = vld [vmem:[%s0 + $0x130] sm:$0xff]
    %v62 = vld [vmem:[%s0 + $0x138] sm:$0xff]
    %v63 = vld [vmem:[%s0 + $0x140] sm:$0xff]
    %v64 = vld [vmem:[%s0 + $0x148] sm:$0xff]
    %v65 = vld [vmem:[%s0 + $0x150] sm:$0xff]
    %v66 = vld [vmem:[%s0 + $0x158] sm:$0xff]
    %v67 = vld [vmem:[%s0 + $0x160] sm:$0xff]
    %v68 = vld [vmem:[%s0 + $0x168] sm:$0xff]
    %v69 = vld [vmem:[%s0 + $0x170] sm:$0xff]
    %v70 = vld [vmem:[%s0 + $0x178] sm:$0xff]
    %v71 = vld [vmem:[%s0 + $0x180] sm:$0xff]
    %v72 = vld [vmem:[%s0 + $0x188] sm:$0xff]
    %v73 = vld [vmem:[%s0 + $0x190] sm:$0xff]
    %v74 = vld [vmem:[%s0 + $0x198] sm:$0xff]
    %v75 = vld [vmem:[%s0 + $0x1a0] sm:$0xff]
    %v76 = vld [vmem:[%s0 + $0x1a8] sm:$0xff]
    %v77 = vld [vmem:[%s0 + $0x1b0] sm:$0xff]
    %v78 = vld [vmem:[%s0 + $0x1b8] sm:$0xff]
    %v79 = vld [vmem:[%s0 + $0x1c0] sm:$0xff]
    %v80 = vld [vmem:[%s0 + $0x1c8] sm:$0xff]
    %v81 = vld [vmem:[%s0 + $0x1d0] sm:$0xff]
    %v82 = vld [vmem:[%s0 + $0x1d8] sm:$0xff]
    %v83 = vld [vmem:[%s0 + $0x1e0] sm:$0xff]
    %v84 = vld [vmem:[%s0 + $0x1e8] sm:$0xff]
    %v85 = vld [vmem:[%s0 + $0x1f0] sm:$0xff]
    %v86 = vld [vmem:[%s0 + $0x1f8] sm:$0xff]
    %v87 = vld [vmem:[%s0 + $0x200] sm:$0xff]
    %v88 = vld [vmem:[%s0 + $0x208] sm:$0xff]
    %v89 = vld [vmem:[%s0 + $0x210] sm:$0xff]
    %v90 = vld [vmem:[%s0 + $0x218] sm:$0xff]
    %v91 = vld [vmem:[%s0 + $0x220] sm:$0xff]
    %v92 = vld [vmem:[%s0 + $0x228] sm:$0xff]
    %v93 = vld [vmem:[%s0 + $0x230] sm:$0xff]
    %v94 = vld [vmem:[%s0 + $0x238] sm:$0xff]
    %v95 = vld [vmem:[%s0 + $0x240] sm:$0xff]
    %v96 = vld [vmem:[%s0 + $0x248] sm:$0xff]
    %v97 = vld [vmem:[%s0 + $0x250] sm:$0xff]
    %v98 = vld [vmem:[%s0 + $0x258] sm:$0xff]
    %v99 = vld [vmem:[%s0 + $0x260] sm:$0xff]
    %v100 = vld [vmem:[%s0 + $0x268] sm:$0xff]
    %v101 = vld [vmem:[%s0 + $0x270] sm:$0xff]
    %v102 = vld [vmem:[%s0 + $0x278] sm:$0xff]
    %v103 = vld [vmem:[%s0 + $0x280] sm:$0xff]
    %v104 = vld [vmem:[%s0 + $0x288] sm:$0xff]
    %v105 = vld [vmem:[%s0 + $0x290] sm:$0xff]
    %v106 = vld [vmem:[%s0 + $0x298] sm:$0xff]
    %v107 = vld [vmem:[%s0 + $0x2a0] sm:$0xff]
    %v108 = vld [vmem:[%s0 + $0x2a8] sm:$0xff]
    %v109 = vld [vmem:[%s0 + $0x2b0] sm:$0xff]
    %v110 = vld [vmem:[%s0 + $0x2b8] sm:$0xff]
    %v111 = vld [vmem:[%s0 + $0x2c0] sm:$0xff]
    %v112 = vld [vmem:[%s0 + $0x2c8] sm:$0xff]
    %v113 = vld [vmem:[%s0 + $0x2d0] sm:$0xff]
    %v114 = vld [vmem:[%s0 + $0x2d8] sm:$0xff]
    %v115 = vld [vmem:[%s0 + $0x2e0] sm:$0xff]
    %v116 = vld [vmem:[%s0 + $0x2e8] sm:$0xff]
    %v117 = vld [vmem:[%s0 + $0x2f0] sm:$0xff]
    %v118 = vld [vmem:[%s0 + $0x2f8] sm:$0xff]
    %v119 = vld [vmem:[%s0 + $0x300] sm:$0xff]
    %v120 = vld [vmem:[%s0 + $0x308] sm:$0xff]
    %v121 = vld [vmem:[%s0 + $0x310] sm:$0xff]
    %v122 = vld [vmem:[%s0 + $0x318] sm:$0xff]
    %v123 = vld [vmem:[%s0 + $0x320] sm:$0xff]
    %v124 = vld [vmem:[%s0 + $0x328] sm:$0xff]
    %v125 = vld [vmem:[%s0 + $0x330] sm:$0xff]
    %v126 = vld [vmem:[%s0 + $0x338] sm:$0xff]
    %v127 = vld [vmem:[%s0 + $0x340] sm:$0xff]
    %v128 = vld [vmem:[%s0 + $0x348] sm:$0xff]
    %v129 = vld [vmem:[%s0 + $0x350] sm:$0xff]
    %v130 = vld [vmem:[%s0 + $0x358] sm:$0xff]
    %v131 = vld [vmem:[%s0 + $0x360] sm:$0xff]
    %v132 = vld [vmem:[%s0 + $0x368] sm:$0xff]
    %v133 = vld [vmem:[%s0 + $0x370] sm:$0xff]
    %v134 = vld [vmem:[%s0 + $0x378] sm:$0xff]
    %v135 = vld [vmem:[%s0 + $0x380] sm:$0xff]
    %v136 = vld [vmem:[%s0 + $0x388] sm:$0xff]
    %v137 = vld [vmem:[%s0 + $0x390] sm:$0xff]
    %v138 = vld [vmem:[%s0 + $0x398] sm:$0xff]
    %v139 = vld [vmem:[%s0 + $0x3a0] sm:$0xff]
    %v140 = vld [vmem:[%s0 + $0x3a8] sm:$0xff]
    %v141 = vld [vmem:[%s0 + $0x3b0] sm:$0xff]
    %v142 = vld [vmem:[%s0 + $0x3b8] sm:$0xff]
    %v143 = vld [vmem:[%s0 + $0x3c0] sm:$0xff]
    %v144 = vld [vmem:[%s0 + $0x3c8] sm:$0xff]
    %v145 = vld [vmem:[%s0 + $0x3d0] sm:$0xff]
    %v146 = vld [vmem:[%s0 + $0x3d8] sm:$0xff]
    %v147 = vld [vmem:[%s0 + $0x3e0] sm:$0xff]
    %v148 = vld [vmem:[%s0 + $0x3e8] sm:$0xff]
    %v149 = vld [vmem:[%s0 + $0x3f0] sm:$0xff]
    %v150 = vld [vmem:[%s0 + $0x3f8] sm:$0xff]
    %v151 = vld [vmem:[%s0 + $0x400] sm:$0xff]
    %v152 = vld [vmem:[%s0 + $0x408] sm:$0xff]
    %v153 = vld [vmem:[%s0 + $0x410] sm:$0xff]
    %v154 = vld [vmem:[%s0 + $0x418] sm:$0xff]
    %v155 = vld [vmem:[%s0 + $0x420] sm:$0xff]
    %v156 = vld [vmem:[%s0 + $0x428] sm:$0xff]
    %v157 = vld [vmem:[%s0 + $0x430] sm:$0xff]
    %v158 = vld [vmem:[%s0 + $0x438] sm:$0xff]
    %v159 = vld [vmem:[%s0 + $0x440] sm:$0xff]
    %v160 = vld [vmem:[%s0 + $0x448] sm:$0xff]
    %v161 = vld [vmem:[%s0 + $0x450] sm:$0xff]
    %v162 = vld [vmem:[%s0 + $0x458] sm:$0xff]
    %v163 = vld [vmem:[%s0 + $0x460] sm:$0xff]
    %v164 = vld [vmem:[%s0 + $0x468] sm:$0xff]
    %v165 = vld [vmem:[%s0 + $0x470] sm:$0xff]
    %v166 = vld [vmem:[%s0 + $0x478] sm:$0xff]
    %v167 = vld [vmem:[%s0 + $0x480] sm:$0xff]
    %v168 = vld [vmem:[%s0 + $0x488] sm:$0xff]
    %v169 = vld [vmem:[%s0 + $0x490] sm:$0xff]
    %v170 = vld [vmem:[%s0 + $0x498] sm:$0xff]
    %v171 = vld [vmem:[%s0 + $0x4a0] sm:$0xff]
    %v172 = vld [vmem:[%s0 + $0x4a8] sm:$0xff]
    %v173 = vld [vmem:[%s0 + $0x4b0] sm:$0xff]
    %v174 = vld [vmem:[%s0 + $0x4b8] sm:$0xff]
    %v175 = vld [vmem:[%s0 + $0x4c0] sm:$0xff]
    %v176 = vld [vmem:[%s0 + $0x4c8] sm:$0xff]
    %v177 = vld [vmem:[%s0 + $0x4d0] sm:$0xff]
    %v178 = vld [vmem:[%s0 + $0x4d8] sm:$0xff]
    %v179 = vld [vmem:[%s0 + $0x4e0] sm:$0xff]
    %v180 = vld [vmem:[%s0 + $0x4e8] sm:$0xff]
    %v181 = vld [vmem:[%s0 + $0x4f0] sm:$0xff]
    %v182 = vld [vmem:[%s0 + $0x4f8] sm:$0xff]
    %v183 = vld [vmem:[%s0 + $0x500] sm:$0xff]
    %v184 = vld [vmem:[%s0 + $0x508] sm:$0xff]
    %v185 = vld [vmem:[%s0 + $0x510] sm:$0xff]
    %v186 = vld [vmem:[%s0 + $0x518] sm:$0xff]
    %v187 = vld [vmem:[%s0 + $0x520] sm:$0xff]
    %v188 = vld [vmem:[%s0 + $0x528] sm:$0xff]
    %v189 = vld [vmem:[%s0 + $0x530] sm:$0xff]
    %v190 = vld [vmem:[%s0 + $0x538] sm:$0xff]
    %v191 = vld [vmem:[%s0 + $0x540] sm:$0xff]
    %v192 = vld [vmem:[%s0 + $0x548] sm:$0xff]
    %v193 = vld [vmem:[%s0 + $0x550] sm:$0xff]
    %v194 = vld [vmem:[%s0 + $0x558] sm:$0xff]
    %v195 = vld [vmem:[%s0 + $0x560] sm:$0xff]
    %v196 = vld [vmem:[%s0 + $0x568] sm:$0xff]
    %v197 = vld [vmem:[%s0 + $0x570] sm:$0xff]
    %v198 = vld [vmem:[%s0 + $0x578] sm:$0xff]
    %v199 = vld [vmem:[%s0 + $0x580] sm:$0xff]
    %v200 = vld [vmem:[%s0 + $0x588] sm:$0xff]
    %v201 = vld [vmem:[%s0 + $0x590] sm:$0xff]
    %v202 = vld [vmem:[%s0 + $0x598] sm:$0xff]
    %v203 = vld [vmem:[%s0 + $0x5a0] sm:$0xff]
    %v204 = vld [vmem:[%s0 + $0x5a8] sm:$0xff]
    %v205 = vld [vmem:[%s0 + $0x5b0] sm:$0xff]
    %v206 = vld [vmem:[%s0 + $0x5b8] sm:$0xff]
    %v207 = vld [vmem:[%s0 + $0x5c0] sm:$0xff]
    %v208 = vld [vmem:[%s0 + $0x5c8] sm:$0xff]
    %v209 = vld [vmem:[%s0 + $0x5d0] sm:$0xff]
    %v210 = vld [vmem:[%s0 + $0x5d8] sm:$0xff]
    %v211 = vld [vmem:[%s0 + $0x5e0] sm:$0xff]
    %v212 = vld [vmem:[%s0 + $0x5e8] sm:$0xff]
    %v213 = vld [vmem:[%s0 + $0x5f0] sm:$0xff]
    %v214 = vld [vmem:[%s0 + $0x5f8] sm:$0xff]
    %v215 = vld [vmem:[%s0 + $0x600] sm:$0xff]
    %v216 = vld [vmem:[%s0 + $0x608] sm:$0xff]
    %v217 = vld [vmem:[%s0 + $0x610] sm:$0xff]
    %v218 = vld [vmem:[%s0 + $0x618] sm:$0xff]
    %v219 = vld [vmem:[%s0 + $0x620] sm:$0xff]
    %v220 = vld [vmem:[%s0 + $0x628] sm:$0xff]
    %v221 = vld [vmem:[%s0 + $0x630] sm:$0xff]
    %v222 = vld [vmem:[%s0 + $0x638] sm:$0xff]
    %v223 = vld [vmem:[%s0 + $0x640] sm:$0xff]
    %v224 = vld [vmem:[%s0 + $0x648] sm:$0xff]
    %v225 = vld [vmem:[%s0 + $0x650] sm:$0xff]
    %v226 = vld [vmem:[%s0 + $0x658] sm:$0xff]
    %v227 = vld [vmem:[%s0 + $0x660] sm:$0xff]
    %v228 = vld [vmem:[%s0 + $0x668] sm:$0xff]
    %v229 = vld [vmem:[%s0 + $0x670] sm:$0xff]
    %v230 = vld [vmem:[%s0 + $0x678] sm:$0xff]
    %v231 = vld [vmem:[%s0 + $0x680] sm:$0xff]
    %v232 = vld [vmem:[%s0 + $0x688] sm:$0xff]
    %v233 = vld [vmem:[%s0 + $0x690] sm:$0xff]
    %v234 = vld [vmem:[%s0 + $0x698] sm:$0xff]
    %v235 = vld [vmem:[%s0 + $0x6a0] sm:$0xff]
    %v236 = vld [vmem:[%s0 + $0x6a8] sm:$0xff]
    %v237 = vld [vmem:[%s0 + $0x6b0] sm:$0xff]
    %v238 = vld [vmem:[%s0 + $0x6b8] sm:$0xff]
    %v239 = vld [vmem:[%s0 + $0x6c0] sm:$0xff]
    %v240 = vld [vmem:[%s0 + $0x6c8] sm:$0xff]
    %v241 = vld [vmem:[%s0 + $0x6d0] sm:$0xff]
    %v242 = vld [vmem:[%s0 + $0x6d8] sm:$0xff]
    %v243 = vld [vmem:[%s0 + $0x6e0] sm:$0xff]
    %v244 = vld [vmem:[%s0 + $0x6e8] sm:$0xff]
    %v245 = vld [vmem:[%s0 + $0x6f0] sm:$0xff]
    %v246 = vld [vmem:[%s0 + $0x6f8] sm:$0xff]
    %v247 = vld [vmem:[%s0 + $0x700] sm:$0xff]
    %v248 = vld [vmem:[%s0 + $0x708] sm:$0xff]
    %v249 = vld [vmem:[%s0 + $0x710] sm:$0xff]
    %v250 = vld [vmem:[%s0 + $0x718] sm:$0xff]
    %v251 = vld [vmem:[%s0 + $0x720] sm:$0xff]
    %v252 = vld [vmem:[%s0 + $0x728] sm:$0xff]
    %v253 = vld [vmem:[%s0 + $0x730] sm:$0xff]
    %v254 = vld [vmem:[%s0 + $0x738] sm:$0xff]
    %v255 = vld [vmem:[%s0 + $0x740] sm:$0xff]
    %v256 = vld [vmem:[%s0 + $0x748] sm:$0xff]
    %v257 = vld [vmem:[%s0 + $0x750] sm:$0xff]
    %v258 = vld [vmem:[%s0 + $0x758] sm:$0xff]
    %v259 = vld [vmem:[%s0 + $0x760] sm:$0xff]
    %v260 = vld [vmem:[%s0 + $0x768] sm:$0xff]
    %v261 = vld [vmem:[%s0 + $0x770] sm:$0xff]
    %v262 = vld [vmem:[%s0 + $0x778] sm:$0xff]
    %v263 = vld [vmem:[%s0 + $0x780] sm:$0xff]
    %v264 = vld [vmem:[%s0 + $0x788] sm:$0xff]
    %v265 = vld [vmem:[%s0 + $0x790] sm:$0xff]
    %v266 = vld [vmem:[%s0 + $0x798] sm:$0xff]
    %v267 = vld [vmem:[%s0 + $0x7a0] sm:$0xff]
    %v268 = vld [vmem:[%s0 + $0x7a8] sm:$0xff]
    %v269 = vld [vmem:[%s0 + $0x7b0] sm:$0xff]
    %v270 = vld [vmem:[%s0 + $0x7b8] sm:$0xff]
    %v271 = vld [vmem:[%s0 + $0x7c0] sm:$0xff]
    %v272 = vld [vmem:[%s0 + $0x7c8] sm:$0xff]
    %v273 = vld [vmem:[%s0 + $0x7d0] sm:$0xff]
    %v274 = vld [vmem:[%s0 + $0x7d8] sm:$0xff]
    %v275 = vld [vmem:[%s0 + $0x7e0] sm:$0xff]
    %v276 = vld [vmem:[%s0 + $0x7e8] sm:$0xff]
    %v277 = vld [vmem:[%s0 + $0x7f0] sm:$0xff]
    %v278 = vld [vmem:[%s0 + $0x7f8] sm:$0xff]
    %v279 = vld [vmem:[%s0 + $0x800] sm:$0xff]
    %v280 = vld [vmem:[%s0 + $0x808] sm:$0xff]
    %v281 = vld [vmem:[%s0 + $0x810] sm:$0xff]
    %v282 = vld [vmem:[%s0 + $0x818] sm:$0xff]
    %v283 = vld [vmem:[%s0 + $0x820] sm:$0xff]
    %v284 = vld [vmem:[%s0 + $0x828] sm:$0xff]
    %v285 = vld [vmem:[%s0 + $0x830] sm:$0xff]
    %v286 = vld [vmem:[%s0 + $0x838] sm:$0xff]
    %v287 = vld [vmem:[%s0 + $0x840] sm:$0xff]
    %v288 = vld [vmem:[%s0 + $0x848] sm:$0xff]
    %v289 = vld [vmem:[%s0 + $0x850] sm:$0xff]
    %v290 = vld [vmem:[%s0 + $0x858] sm:$0xff]
    %v291 = vld [vmem:[%s0 + $0x860] sm:$0xff]
    %v292 = vld [vmem:[%s0 + $0x868] sm:$0xff]
    %v293 = vld [vmem:[%s0 + $0x870] sm:$0xff]
    %v294 = vld [vmem:[%s0 + $0x878] sm:$0xff]
    %v295 = vld [vmem:[%s0 + $0x880] sm:$0xff]
    %v296 = vld [vmem:[%s0 + $0x888] sm:$0xff]
    %v297 = vld [vmem:[%s0 + $0x890] sm:$0xff]
    %v298 = vld [vmem:[%s0 + $0x898] sm:$0xff]
    %v299 = vld [vmem:[%s0 + $0x8a0] sm:$0xff]
    %v300 = vld [vmem:[%s0 + $0x8a8] sm:$0xff]
    %v301 = vld [vmem:[%s0 + $0x8b0] sm:$0xff]
    %v302 = vld [vmem:[%s0 + $0x8b8] sm:$0xff]
    %v303 = vld [vmem:[%s0 + $0x8c0] sm:$0xff]
    %v304 = vld [vmem:[%s0 + $0x8c8] sm:$0xff]
    %v305 = vld [vmem:[%s0 + $0x8d0] sm:$0xff]
    %v306 = vld [vmem:[%s0 + $0x8d8] sm:$0xff]
    %v307 = vld [vmem:[%s0 + $0x8e0] sm:$0xff]
    %v308 = vld [vmem:[%s0 + $0x8e8] sm:$0xff]
    %v309 = vld [vmem:[%s0 + $0x8f0] sm:$0xff]
    %v310 = vld [vmem:[%s0 + $0x8f8] sm:$0xff]
    %v311 = vld [vmem:[%s0 + $0x900] sm:$0xff]
    %v312 = vld [vmem:[%s0 + $0x908] sm:$0xff]
    %v313 = vld [vmem:[%s0 + $0x910] sm:$0xff]
    %v314 = vld [vmem:[%s0 + $0x918] sm:$0xff]
    %v315 = vld [vmem:[%s0 + $0x920] sm:$0xff]
    %v316 = vld [vmem:[%s0 + $0x928] sm:$0xff]
    %v317 = vld [vmem:[%s0 + $0x930] sm:$0xff]
    %v318 = vld [vmem:[%s0 + $0x938] sm:$0xff]
    %v319 = vld [vmem:[%s0 + $0x940] sm:$0xff]
    %v320 = vld [vmem:[%s0 + $0x948] sm:$0xff]
    %v321 = vld [vmem:[%s0 + $0x950] sm:$0xff]
    %v322 = vld [vmem:[%s0 + $0x958] sm:$0xff]
    %v323 = vld [vmem:[%s0 + $0x960] sm:$0xff]
    %v324 = vld [vmem:[%s0 + $0x968] sm:$0xff]
    %v325 = vld [vmem:[%s0 + $0x970] sm:$0xff]
    %v326 = vld [vmem:[%s0 + $0x978] sm:$0xff]
    %v327 = vld [vmem:[%s0 + $0x980] sm:$0xff]
    %v328 = vld [vmem:[%s0 + $0x988] sm:$0xff]
    %v329 = vld [vmem:[%s0 + $0x990] sm:$0xff]
    %v330 = vld [vmem:[%s0 + $0x998] sm:$0xff]
    %v331 = vld [vmem:[%s0 + $0x9a0] sm:$0xff]
    %v332 = vld [vmem:[%s0 + $0x9a8] sm:$0xff]
    %v333 = vld [vmem:[%s0 + $0x9b0] sm:$0xff]
    %v334 = vld [vmem:[%s0 + $0x9b8] sm:$0xff]
    %v335 = vld [vmem:[%s0 + $0x9c0] sm:$0xff]
    %v336 = vld [vmem:[%s0 + $0x9c8] sm:$0xff]
    %v337 = vld [vmem:[%s0 + $0x9d0] sm:$0xff]
    %v338 = vld [vmem:[%s0 + $0x9d8] sm:$0xff]
    %v339 = vld [vmem:[%s0 + $0x9e0] sm:$0xff]
    %v340 = vld [vmem:[%s0 + $0x9e8] sm:$0xff]
    %v341 = vld [vmem:[%s0 + $0x9f0] sm:$0xff]
    %v342 = vld [vmem:[%s0 + $0x9f8] sm:$0xff]
    %v343 = vld [vmem:[%s0 + $0xa00] sm:$0xff]
    %v344 = vld [vmem:[%s0 + $0xa08] sm:$0xff]
    %v345 = vld [vmem:[%s0 + $0xa10] sm:$0xff]
    %v346 = vld [vmem:[%s0 + $0xa18] sm:$0xff]
    %v347 = vld [vmem:[%s0 + $0xa20] sm:$0xff]
    %v348 = vld [vmem:[%s0 + $0xa28] sm:$0xff]
    %v349 = vld [vmem:[%s0 + $0xa30] sm:$0xff]
    %v350 = vld [vmem:[%s0 + $0xa38] sm:$0xff]
    %v351 = vld [vmem:[%s0 + $0xa40] sm:$0xff]
    %v352 = vld [vmem:[%s0 + $0xa48] sm:$0xff]
    %v353 = vld [vmem:[%s0 + $0xa50] sm:$0xff]
    %v354 = vld [vmem:[%s0 + $0xa58] sm:$0xff]
    %v355 = vld [vmem:[%s0 + $0xa60] sm:$0xff]
    %v356 = vld [vmem:[%s0 + $0xa68] sm:$0xff]
    %v357 = vld [vmem:[%s0 + $0xa70] sm:$0xff]
    %v358 = vld [vmem:[%s0 + $0xa78] sm:$0xff]
    %v359 = vld [vmem:[%s0 + $0xa80] sm:$0xff]
    %v360 = vld [vmem:[%s0 + $0xa88] sm:$0xff]
    %v361 = vld [vmem:[%s0 + $0xa90] sm:$0xff]
    %v362 = vld [vmem:[%s0 + $0xa98] sm:$0xff]
    %v363 = vld [vmem:[%s0 + $0xaa0] sm:$0xff]
    %v364 = vld [vmem:[%s0 + $0xaa8] sm:$0xff]
    %v365 = vld [vmem:[%s0 + $0xab0] sm:$0xff]
    %v366 = vld [vmem:[%s0 + $0xab8] sm:$0xff]
    %v367 = vld [vmem:[%s0 + $0xac0] sm:$0xff]
    %v368 = vld [vmem:[%s0 + $0xac8] sm:$0xff]
    %v369 = vld [vmem:[%s0 + $0xad0] sm:$0xff]
    %v370 = vld [vmem:[%s0 + $0xad8] sm:$0xff]
    %v371 = vld [vmem:[%s0 + $0xae0] sm:$0xff]
    %v372 = vld [vmem:[%s0 + $0xae8] sm:$0xff]
    %v373 = vld [vmem:[%s0 + $0xaf0] sm:$0xff]
    %v374 = vld [vmem:[%s0 + $0xaf8] sm:$0xff]
    %v375 = vld [vmem:[%s0 + $0xb00] sm:$0xff]
    %v376 = vld [vmem:[%s0 + $0xb08] sm:$0xff]
    %v377 = vld [vmem:[%s0 + $0xb10] sm:$0xff]
    %v378 = vld [vmem:[%s0 + $0xb18] sm:$0xff]
    %v379 = vld [vmem:[%s0 + $0xb20] sm:$0xff]
    %v380 = vld [vmem:[%s0 + $0xb28] sm:$0xff]
    %v381 = vld [vmem:[%s0 + $0xb30] sm:$0xff]
    %v382 = vld [vmem:[%s0 + $0xb38] sm:$0xff]
    %v383 = vld [vmem:[%s0 + $0xb40] sm:$0xff]
    %v384 = vld [vmem:[%s0 + $0xb48] sm:$0xff]
    %v385 = vld [vmem:[%s0 + $0xb50] sm:$0xff]
    %v386 = vld [vmem:[%s0 + $0xb58] sm:$0xff]
    %v387 = vld [vmem:[%s0 + $0xb60] sm:$0xff]
    %v388 = vld [vmem:[%s0 + $0xb68] sm:$0xff]
    %v389 = vld [vmem:[%s0 + $0xb70] sm:$0xff]
    %v390 = vld [vmem:[%s0 + $0xb78] sm:$0xff]
    %v391 = vld [vmem:[%s0 + $0xb80] sm:$0xff]
    %v392 = vld [vmem:[%s0 + $0xb88] sm:$0xff]
    %v393 = vld [vmem:[%s0 + $0xb90] sm:$0xff]
    %v394 = vld [vmem:[%s0 + $0xb98] sm:$0xff]
    %v395 = vld [vmem:[%s0 + $0xba0] sm:$0xff]
    %v396 = vld [vmem:[%s0 + $0xba8] sm:$0xff]
    %v397 = vld [vmem:[%s0 + $0xbb0] sm:$0xff]
    %v398 = vld [vmem:[%s0 + $0xbb8] sm:$0xff]
    %v399 = vld [vmem:[%s0 + $0xbc0] sm:$0xff]
    %v400 = vld [vmem:[%s0 + $0xbc8] sm:$0xff]
    %v401 = vld [vmem:[%s0 + $0xbd0] sm:$0xff]
    %v402 = vld [vmem:[%s0 + $0xbd8] sm:$0xff]
    %v403 = vld [vmem:[%s0 + $0xbe0] sm:$0xff]
    %v404 = vld [vmem:[%s0 + $0xbe8] sm:$0xff]
    %v405 = vld [vmem:[%s0 + $0xbf0] sm:$0xff]
    %v406 = vld [vmem:[%s0 + $0xbf8] sm:$0xff]
    %v407 = vpack.c.bf16 %v24, %v23
    %v408 = vpack.c.bf16 %v26, %v25
    %v409 = vpack.c.bf16 %v28, %v27
    %v410 = vpack.c.bf16 %v30, %v29
    %v411 = vpack.c.bf16 %v32, %v31
    %v412 = vpack.c.bf16 %v34, %v33
    %v413 = vpack.c.bf16 %v36, %v35
    %v414 = vpack.c.bf16 %v38, %v37
    %v415 = vpack.c.bf16 %v40, %v39
    %v416 = vpack.c.bf16 %v42, %v41
    %v417 = vpack.c.bf16 %v44, %v43
    %v418 = vpack.c.bf16 %v46, %v45
    %v419 = vpack.c.bf16 %v48, %v47
    %v420 = vpack.c.bf16 %v50, %v49
    %v421 = vpack.c.bf16 %v52, %v51
    %v422 = vpack.c.bf16 %v54, %v53
    %v423 = vpack.c.bf16 %v56, %v55
    %v424 = vpack.c.bf16 %v58, %v57
    %v425 = vpack.c.bf16 %v60, %v59
    %v426 = vpack.c.bf16 %v62, %v61
    %v427 = vpack.c.bf16 %v64, %v63
    %v428 = vpack.c.bf16 %v66, %v65
    %v429 = vpack.c.bf16 %v68, %v67
    %v430 = vpack.c.bf16 %v70, %v69
    %v431 = vpack.c.bf16 %v72, %v71
    %v432 = vpack.c.bf16 %v74, %v73
    %v433 = vpack.c.bf16 %v76, %v75
    %v434 = vpack.c.bf16 %v78, %v77
    %v435 = vpack.c.bf16 %v80, %v79
    %v436 = vpack.c.bf16 %v82, %v81
    %v437 = vpack.c.bf16 %v84, %v83
    %v438 = vpack.c.bf16 %v86, %v85
    %v439 = vpack.c.bf16 %v88, %v87
    %v440 = vpack.c.bf16 %v90, %v89
    %v441 = vpack.c.bf16 %v92, %v91
    %v442 = vpack.c.bf16 %v94, %v93
    %v443 = vpack.c.bf16 %v96, %v95
    %v444 = vpack.c.bf16 %v98, %v97
    %v445 = vpack.c.bf16 %v100, %v99
    %v446 = vpack.c.bf16 %v102, %v101
    %v447 = vpack.c.bf16 %v104, %v103
    %v448 = vpack.c.bf16 %v106, %v105
    %v449 = vpack.c.bf16 %v108, %v107
    %v450 = vpack.c.bf16 %v110, %v109
    %v451 = vpack.c.bf16 %v112, %v111
    %v452 = vpack.c.bf16 %v114, %v113
    %v453 = vpack.c.bf16 %v116, %v115
    %v454 = vpack.c.bf16 %v118, %v117
    %v455 = vpack.c.bf16 %v120, %v119
    %v456 = vpack.c.bf16 %v122, %v121
    %v457 = vpack.c.bf16 %v124, %v123
    %v458 = vpack.c.bf16 %v126, %v125
    %v459 = vpack.c.bf16 %v128, %v127
    %v460 = vpack.c.bf16 %v130, %v129
    %v461 = vpack.c.bf16 %v132, %v131
    %v462 = vpack.c.bf16 %v134, %v133
    %v463 = vpack.c.bf16 %v136, %v135
    %v464 = vpack.c.bf16 %v138, %v137
    %v465 = vpack.c.bf16 %v140, %v139
    %v466 = vpack.c.bf16 %v142, %v141
    %v467 = vpack.c.bf16 %v144, %v143
    %v468 = vpack.c.bf16 %v146, %v145
    %v469 = vpack.c.bf16 %v148, %v147
    %v470 = vpack.c.bf16 %v150, %v149
    %v471 = vpack.c.bf16 %v152, %v151
    %v472 = vpack.c.bf16 %v154, %v153
    %v473 = vpack.c.bf16 %v156, %v155
    %v474 = vpack.c.bf16 %v158, %v157
    %v475 = vpack.c.bf16 %v160, %v159
    %v476 = vpack.c.bf16 %v162, %v161
    %v477 = vpack.c.bf16 %v164, %v163
    %v478 = vpack.c.bf16 %v166, %v165
    %v479 = vpack.c.bf16 %v168, %v167
    %v480 = vpack.c.bf16 %v170, %v169
    %v481 = vpack.c.bf16 %v172, %v171
    %v482 = vpack.c.bf16 %v174, %v173
    %v483 = vpack.c.bf16 %v176, %v175
    %v484 = vpack.c.bf16 %v178, %v177
    %v485 = vpack.c.bf16 %v180, %v179
    %v486 = vpack.c.bf16 %v182, %v181
    %v487 = vpack.c.bf16 %v184, %v183
    %v488 = vpack.c.bf16 %v186, %v185
    %v489 = vpack.c.bf16 %v188, %v187
    %v490 = vpack.c.bf16 %v190, %v189
    %v491 = vpack.c.bf16 %v192, %v191
    %v492 = vpack.c.bf16 %v194, %v193
    %v493 = vpack.c.bf16 %v196, %v195
    %v494 = vpack.c.bf16 %v198, %v197
    %v495 = vpack.c.bf16 %v200, %v199
    %v496 = vpack.c.bf16 %v202, %v201
    %v497 = vpack.c.bf16 %v204, %v203
    %v498 = vpack.c.bf16 %v206, %v205
    %v499 = vpack.c.bf16 %v208, %v207
    %v500 = vpack.c.bf16 %v210, %v209
    %v501 = vpack.c.bf16 %v212, %v211
    %v502 = vpack.c.bf16 %v214, %v213
    %v503 = vpack.c.bf16 %v216, %v215
    %v504 = vpack.c.bf16 %v218, %v217
    %v505 = vpack.c.bf16 %v220, %v219
    %v506 = vpack.c.bf16 %v222, %v221
    %v507 = vpack.c.bf16 %v224, %v223
    %v508 = vpack.c.bf16 %v226, %v225
    %v509 = vpack.c.bf16 %v228, %v227
    %v510 = vpack.c.bf16 %v230, %v229
    %v511 = vpack.c.bf16 %v232, %v231
    %v512 = vpack.c.bf16 %v234, %v233
    %v513 = vpack.c.bf16 %v236, %v235
    %v514 = vpack.c.bf16 %v238, %v237
    %v515 = vpack.c.bf16 %v240, %v239
    %v516 = vpack.c.bf16 %v242, %v241
    %v517 = vpack.c.bf16 %v244, %v243
    %v518 = vpack.c.bf16 %v246, %v245
    %v519 = vpack.c.bf16 %v248, %v247
    %v520 = vpack.c.bf16 %v250, %v249
    %v521 = vpack.c.bf16 %v252, %v251
    %v522 = vpack.c.bf16 %v254, %v253
    %v523 = vpack.c.bf16 %v256, %v255
    %v524 = vpack.c.bf16 %v258, %v257
    %v525 = vpack.c.bf16 %v260, %v259
    %v526 = vpack.c.bf16 %v262, %v261
    %v527 = vpack.c.bf16 %v264, %v263
    %v528 = vpack.c.bf16 %v266, %v265
    %v529 = vpack.c.bf16 %v268, %v267
    %v530 = vpack.c.bf16 %v270, %v269
    %v531 = vpack.c.bf16 %v272, %v271
    %v532 = vpack.c.bf16 %v274, %v273
    %v533 = vpack.c.bf16 %v276, %v275
    %v534 = vpack.c.bf16 %v278, %v277
    %v535 = vpack.c.bf16 %v280, %v279
    %v536 = vpack.c.bf16 %v282, %v281
    %v537 = vpack.c.bf16 %v284, %v283
    %v538 = vpack.c.bf16 %v286, %v285
    %v539 = vpack.c.bf16 %v288, %v287
    %v540 = vpack.c.bf16 %v290, %v289
    %v541 = vpack.c.bf16 %v292, %v291
    %v542 = vpack.c.bf16 %v294, %v293
    %v543 = vpack.c.bf16 %v296, %v295
    %v544 = vpack.c.bf16 %v298, %v297
    %v545 = vpack.c.bf16 %v300, %v299
    %v546 = vpack.c.bf16 %v302, %v301
    %v547 = vpack.c.bf16 %v304, %v303
    %v548 = vpack.c.bf16 %v306, %v305
    %v549 = vpack.c.bf16 %v308, %v307
    %v550 = vpack.c.bf16 %v310, %v309
    %v551 = vpack.c.bf16 %v312, %v311
    %v552 = vpack.c.bf16 %v314, %v313
    %v553 = vpack.c.bf16 %v316, %v315
    %v554 = vpack.c.bf16 %v318, %v317
    %v555 = vpack.c.bf16 %v320, %v319
    %v556 = vpack.c.bf16 %v322, %v321
    %v557 = vpack.c.bf16 %v324, %v323
    %v558 = vpack.c.bf16 %v326, %v325
    %v559 = vpack.c.bf16 %v328, %v327
    %v560 = vpack.c.bf16 %v330, %v329
    %v561 = vpack.c.bf16 %v332, %v331
    %v562 = vpack.c.bf16 %v334, %v333
    %v563 = vpack.c.bf16 %v336, %v335
    %v564 = vpack.c.bf16 %v338, %v337
    %v565 = vpack.c.bf16 %v340, %v339
    %v566 = vpack.c.bf16 %v342, %v341
    %v567 = vpack.c.bf16 %v344, %v343
    %v568 = vpack.c.bf16 %v346, %v345
    %v569 = vpack.c.bf16 %v348, %v347
    %v570 = vpack.c.bf16 %v350, %v349
    %v571 = vpack.c.bf16 %v352, %v351
    %v572 = vpack.c.bf16 %v354, %v353
    %v573 = vpack.c.bf16 %v356, %v355
    %v574 = vpack.c.bf16 %v358, %v357
    %v575 = vpack.c.bf16 %v360, %v359
    %v576 = vpack.c.bf16 %v362, %v361
    %v577 = vpack.c.bf16 %v364, %v363
    %v578 = vpack.c.bf16 %v366, %v365
    %v579 = vpack.c.bf16 %v368, %v367
    %v580 = vpack.c.bf16 %v370, %v369
    %v581 = vpack.c.bf16 %v372, %v371
    %v582 = vpack.c.bf16 %v374, %v373
    %v583 = vpack.c.bf16 %v376, %v375
    %v584 = vpack.c.bf16 %v378, %v377
    %v585 = vpack.c.bf16 %v380, %v379
    %v586 = vpack.c.bf16 %v382, %v381
    %v587 = vpack.c.bf16 %v384, %v383
    %v588 = vpack.c.bf16 %v386, %v385
    %v589 = vpack.c.bf16 %v388, %v387
    %v590 = vpack.c.bf16 %v390, %v389
    %v591 = vpack.c.bf16 %v392, %v391
    %v592 = vpack.c.bf16 %v394, %v393
    %v593 = vpack.c.bf16 %v396, %v395
    %v594 = vpack.c.bf16 %v398, %v397
    %v595 = vpack.c.bf16 %v400, %v399
    %v596 = vpack.c.bf16 %v402, %v401
    %v597 = vpack.c.bf16 %v404, %v403
    %v598 = vpack.c.bf16 %v406, %v405
    %v599 = vld [vmem:[%s1] sm:$0xf]
    %v600 = vld [vmem:[%s1 + $0x4] sm:$0xf]
    %v601 = vld [vmem:[%s1 + $0x8] sm:$0xf]
    %v602 = vld [vmem:[%s1 + $0xc] sm:$0xf]
    %v603 = vld [vmem:[%s2] sm:$0x1]
    %v605 = vperm.slane %v603, 0
    %v611 = vunpack.c.l.b16 %v599
    %v612 = vunpack.c.l.b16 %v600
    %v613 = vunpack.c.l.b16 %v601
    %v614 = vunpack.c.l.b16 %v602
    %v615 = vpack.c.b16 %v612, %v611
    %v616 = vpack.c.b16 %v614, %v613
    %vm619 = vcmask 261120
    %v621 = vsel %vm619, %v407, 0
    %v624 = vsel %vm619, %v408, 0
    %v627 = vsel %vm619, %v409, 0
    %v630 = vsel %vm619, %v410, 0
    %v633 = vsel %vm619, %v411, 0
    %v636 = vsel %vm619, %v412, 0
    %v639 = vsel %vm619, %v413, 0
    %v642 = vsel %vm619, %v414, 0
    %v645 = vsel %vm619, %v415, 0
    %v648 = vsel %vm619, %v416, 0
    %v651 = vsel %vm619, %v417, 0
    %v654 = vsel %vm619, %v418, 0
    %v657 = vsel %vm619, %v419, 0
    %v660 = vsel %vm619, %v420, 0
    %v663 = vsel %vm619, %v421, 0
    %v666 = vsel %vm619, %v422, 0
    %v669 = vsel %vm619, %v423, 0
    %v672 = vsel %vm619, %v424, 0
    %v675 = vsel %vm619, %v425, 0
    %v678 = vsel %vm619, %v426, 0
    %v681 = vsel %vm619, %v427, 0
    %v684 = vsel %vm619, %v428, 0
    %v687 = vsel %vm619, %v429, 0
    %v690 = vsel %vm619, %v430, 0
    %v693 = vsel %vm619, %v431, 0
    %v696 = vsel %vm619, %v432, 0
    %v699 = vsel %vm619, %v433, 0
    %v702 = vsel %vm619, %v434, 0
    %v705 = vsel %vm619, %v435, 0
    %v708 = vsel %vm619, %v436, 0
    %v711 = vsel %vm619, %v437, 0
    %v714 = vsel %vm619, %v438, 0
    %v717 = vsel %vm619, %v439, 0
    %v720 = vsel %vm619, %v440, 0
    %v723 = vsel %vm619, %v441, 0
    %v726 = vsel %vm619, %v442, 0
    %v729 = vsel %vm619, %v443, 0
    %v732 = vsel %vm619, %v444, 0
    %v735 = vsel %vm619, %v445, 0
    %v738 = vsel %vm619, %v446, 0
    %v741 = vsel %vm619, %v447, 0
    %v744 = vsel %vm619, %v448, 0
    %v747 = vsel %vm619, %v449, 0
    %v750 = vsel %vm619, %v450, 0
    %v753 = vsel %vm619, %v451, 0
    %v756 = vsel %vm619, %v452, 0
    %v759 = vsel %vm619, %v453, 0
    %v762 = vsel %vm619, %v454, 0
    %v765 = vsel %vm619, %v455, 0
    %v768 = vsel %vm619, %v456, 0
    %v771 = vsel %vm619, %v457, 0
    %v774 = vsel %vm619, %v458, 0
    %v777 = vsel %vm619, %v459, 0
    %v780 = vsel %vm619, %v460, 0
    %v783 = vsel %vm619, %v461, 0
    %v786 = vsel %vm619, %v462, 0
    %v789 = vsel %vm619, %v463, 0
    %v792 = vsel %vm619, %v464, 0
    %v795 = vsel %vm619, %v465, 0
    %v798 = vsel %vm619, %v466, 0
    %v801 = vsel %vm619, %v467, 0
    %v804 = vsel %vm619, %v468, 0
    %v807 = vsel %vm619, %v469, 0
    %v810 = vsel %vm619, %v470, 0
    %v813 = vsel %vm619, %v471, 0
    %v816 = vsel %vm619, %v472, 0
    %v819 = vsel %vm619, %v473, 0
    %v822 = vsel %vm619, %v474, 0
    %v825 = vsel %vm619, %v475, 0
    %v828 = vsel %vm619, %v476, 0
    %v831 = vsel %vm619, %v477, 0
    %v834 = vsel %vm619, %v478, 0
    %v837 = vsel %vm619, %v479, 0
    %v840 = vsel %vm619, %v480, 0
    %v843 = vsel %vm619, %v481, 0
    %v846 = vsel %vm619, %v482, 0
    %v849 = vsel %vm619, %v483, 0
    %v852 = vsel %vm619, %v484, 0
    %v855 = vsel %vm619, %v485, 0
    %v858 = vsel %vm619, %v486, 0
    %v861 = vsel %vm619, %v487, 0
    %v864 = vsel %vm619, %v488, 0
    %v867 = vsel %vm619, %v489, 0
    %v870 = vsel %vm619, %v490, 0
    %v873 = vsel %vm619, %v491, 0
    %v876 = vsel %vm619, %v492, 0
    %v879 = vsel %vm619, %v493, 0
    %v882 = vsel %vm619, %v494, 0
    %v885 = vsel %vm619, %v495, 0
    %v888 = vsel %vm619, %v496, 0
    %v891 = vsel %vm619, %v497, 0
    %v894 = vsel %vm619, %v498, 0
    %v897 = vsel %vm619, %v499, 0
    %v900 = vsel %vm619, %v500, 0
    %v903 = vsel %vm619, %v501, 0
    %v906 = vsel %vm619, %v502, 0
    %v909 = vsel %vm619, %v503, 0
    %v912 = vsel %vm619, %v504, 0
    %v915 = vsel %vm619, %v505, 0
    %v918 = vsel %vm619, %v506, 0
    %v921 = vsel %vm619, %v507, 0
    %v924 = vsel %vm619, %v508, 0
    %v927 = vsel %vm619, %v509, 0
    %v930 = vsel %vm619, %v510, 0
    %v933 = vsel %vm619, %v511, 0
    %v936 = vsel %vm619, %v512, 0
    %v939 = vsel %vm619, %v513, 0
    %v942 = vsel %vm619, %v514, 0
    %v945 = vsel %vm619, %v515, 0
    %v948 = vsel %vm619, %v516, 0
    %v951 = vsel %vm619, %v517, 0
    %v954 = vsel %vm619, %v518, 0
    %v957 = vsel %vm619, %v519, 0
    %v960 = vsel %vm619, %v520, 0
    %v963 = vsel %vm619, %v521, 0
    %v966 = vsel %vm619, %v522, 0
    %v969 = vsel %vm619, %v523, 0
    %v972 = vsel %vm619, %v524, 0
    %v975 = vsel %vm619, %v525, 0
    %v978 = vsel %vm619, %v526, 0
    %v981 = vsel %vm619, %v527, 0
    %v984 = vsel %vm619, %v528, 0
    %v987 = vsel %vm619, %v529, 0
    %v990 = vsel %vm619, %v530, 0
    %v993 = vsel %vm619, %v531, 0
    %v996 = vsel %vm619, %v532, 0
    %v999 = vsel %vm619, %v533, 0
    %v1002 = vsel %vm619, %v534, 0
    %v1005 = vsel %vm619, %v535, 0
    %v1008 = vsel %vm619, %v536, 0
    %v1011 = vsel %vm619, %v537, 0
    %v1014 = vsel %vm619, %v538, 0
    %v1017 = vsel %vm619, %v539, 0
    %v1020 = vsel %vm619, %v540, 0
    %v1023 = vsel %vm619, %v541, 0
    %v1026 = vsel %vm619, %v542, 0
    %v1029 = vsel %vm619, %v543, 0
    %v1032 = vsel %vm619, %v544, 0
    %v1035 = vsel %vm619, %v545, 0
    %v1038 = vsel %vm619, %v546, 0
    %v1041 = vsel %vm619, %v547, 0
    %v1044 = vsel %vm619, %v548, 0
    %v1047 = vsel %vm619, %v549, 0
    %v1050 = vsel %vm619, %v550, 0
    %v1053 = vsel %vm619, %v551, 0
    %v1056 = vsel %vm619, %v552, 0
    %v1059 = vsel %vm619, %v553, 0
    %v1062 = vsel %vm619, %v554, 0
    %v1065 = vsel %vm619, %v555, 0
    %v1068 = vsel %vm619, %v556, 0
    %v1071 = vsel %vm619, %v557, 0
    %v1074 = vsel %vm619, %v558, 0
    %v1077 = vsel %vm619, %v559, 0
    %v1080 = vsel %vm619, %v560, 0
    %v1083 = vsel %vm619, %v561, 0
    %v1086 = vsel %vm619, %v562, 0
    %v1089 = vsel %vm619, %v563, 0
    %v1092 = vsel %vm619, %v564, 0
    %v1095 = vsel %vm619, %v565, 0
    %v1098 = vsel %vm619, %v566, 0
    %v1101 = vsel %vm619, %v567, 0
    %v1104 = vsel %vm619, %v568, 0
    %v1107 = vsel %vm619, %v569, 0
    %v1110 = vsel %vm619, %v570, 0
    %v1113 = vsel %vm619, %v571, 0
    %v1116 = vsel %vm619, %v572, 0
    %v1119 = vsel %vm619, %v573, 0
    %v1122 = vsel %vm619, %v574, 0
    %v1125 = vsel %vm619, %v575, 0
    %v1128 = vsel %vm619, %v576, 0
    %v1131 = vsel %vm619, %v577, 0
    %v1134 = vsel %vm619, %v578, 0
    %v1137 = vsel %vm619, %v579, 0
    %v1140 = vsel %vm619, %v580, 0
    %v1143 = vsel %vm619, %v581, 0
    %v1146 = vsel %vm619, %v582, 0
    %v1149 = vsel %vm619, %v583, 0
    %v1152 = vsel %vm619, %v584, 0
    %v1155 = vsel %vm619, %v585, 0
    %v1158 = vsel %vm619, %v586, 0
    %v1161 = vsel %vm619, %v587, 0
    %v1164 = vsel %vm619, %v588, 0
    %v1167 = vsel %vm619, %v589, 0
    %v1170 = vsel %vm619, %v590, 0
    %v1173 = vsel %vm619, %v591, 0
    %v1176 = vsel %vm619, %v592, 0
    %v1179 = vsel %vm619, %v593, 0
    %v1182 = vsel %vm619, %v594, 0
    %v1185 = vsel %vm619, %v595, 0
    %v1188 = vsel %vm619, %v596, 0
    %v1191 = vsel %vm619, %v597, 0
    %v1194 = vsel %vm619, %v598, 0
    %1196 = vmatpush.bf16.msra.mxu0 0
    %1197 = vmatpush.bf16.msra.mxu0 0
    %1198 = vmatpush.bf16.msra.mxu0 0
    %1199 = vmatpush.bf16.msra.mxu0 0
    %1200 = vmatpush.bf16.msra.mxu0 0
    %1201 = vmatpush.bf16.msra.mxu0 0
    %1202 = vmatpush.bf16.msra.mxu0 %v616
    %1203 = vmatpush.bf16.msra.mxu0 %v615
    %1204 = vmatmul.bf16.gmra.mxu0 %v621
    %v1205 = vpop.f32.mrf.mxu0
    %v1206 = vadd.f32 %v605, %v1205
    %v1207 = vpop.f32.mrf.mxu0
    %v1208 = vadd.f32 %v605, %v1207
    %1209 = vmatmul.bf16.gmra.mxu0 %v624
    %v1210 = vpop.f32.mrf.mxu0
    %v1211 = vadd.f32 %v605, %v1210
    %v1212 = vpop.f32.mrf.mxu0
    %v1213 = vadd.f32 %v605, %v1212
    %1214 = vmatmul.bf16.gmra.mxu0 %v627
    %v1215 = vpop.f32.mrf.mxu0
    %v1216 = vadd.f32 %v605, %v1215
    %v1217 = vpop.f32.mrf.mxu0
    %v1218 = vadd.f32 %v605, %v1217
    %1219 = vmatmul.bf16.gmra.mxu0 %v630
    %v1220 = vpop.f32.mrf.mxu0
    %v1221 = vadd.f32 %v605, %v1220
    %v1222 = vpop.f32.mrf.mxu0
    %v1223 = vadd.f32 %v605, %v1222
    %1224 = vmatmul.bf16.gmra.mxu0 %v633
    %v1225 = vpop.f32.mrf.mxu0
    %v1226 = vadd.f32 %v605, %v1225
    %v1227 = vpop.f32.mrf.mxu0
    %v1228 = vadd.f32 %v605, %v1227
    %1229 = vmatmul.bf16.gmra.mxu0 %v636
    %v1230 = vpop.f32.mrf.mxu0
    %v1231 = vadd.f32 %v605, %v1230
    %v1232 = vpop.f32.mrf.mxu0
    %v1233 = vadd.f32 %v605, %v1232
    %1234 = vmatmul.bf16.gmra.mxu0 %v639
    %v1235 = vpop.f32.mrf.mxu0
    %v1236 = vadd.f32 %v605, %v1235
    %v1237 = vpop.f32.mrf.mxu0
    %v1238 = vadd.f32 %v605, %v1237
    %1239 = vmatmul.bf16.gmra.mxu0 %v642
    %v1240 = vpop.f32.mrf.mxu0
    %v1241 = vadd.f32 %v605, %v1240
    %v1242 = vpop.f32.mrf.mxu0
    %v1243 = vadd.f32 %v605, %v1242
    %1244 = vmatmul.bf16.gmra.mxu0 %v645
    %v1245 = vpop.f32.mrf.mxu0
    %v1246 = vadd.f32 %v605, %v1245
    %v1247 = vpop.f32.mrf.mxu0
    %v1248 = vadd.f32 %v605, %v1247
    %1249 = vmatmul.bf16.gmra.mxu0 %v648
    %v1250 = vpop.f32.mrf.mxu0
    %v1251 = vadd.f32 %v605, %v1250
    %v1252 = vpop.f32.mrf.mxu0
    %v1253 = vadd.f32 %v605, %v1252
    %1254 = vmatmul.bf16.gmra.mxu0 %v651
    %v1255 = vpop.f32.mrf.mxu0
    %v1256 = vadd.f32 %v605, %v1255
    %v1257 = vpop.f32.mrf.mxu0
    %v1258 = vadd.f32 %v605, %v1257
    %1259 = vmatmul.bf16.gmra.mxu0 %v654
    %v1260 = vpop.f32.mrf.mxu0
    %v1261 = vadd.f32 %v605, %v1260
    %v1262 = vpop.f32.mrf.mxu0
    %v1263 = vadd.f32 %v605, %v1262
    %1264 = vmatmul.bf16.gmra.mxu0 %v657
    %v1265 = vpop.f32.mrf.mxu0
    %v1266 = vadd.f32 %v605, %v1265
    %v1267 = vpop.f32.mrf.mxu0
    %v1268 = vadd.f32 %v605, %v1267
    %1269 = vmatmul.bf16.gmra.mxu0 %v660
    %v1270 = vpop.f32.mrf.mxu0
    %v1271 = vadd.f32 %v605, %v1270
    %v1272 = vpop.f32.mrf.mxu0
    %v1273 = vadd.f32 %v605, %v1272
    %1274 = vmatmul.bf16.gmra.mxu0 %v663
    %v1275 = vpop.f32.mrf.mxu0
    %v1276 = vadd.f32 %v605, %v1275
    %v1277 = vpop.f32.mrf.mxu0
    %v1278 = vadd.f32 %v605, %v1277
    %1279 = vmatmul.bf16.gmra.mxu0 %v666
    %v1280 = vpop.f32.mrf.mxu0
    %v1281 = vadd.f32 %v605, %v1280
    %v1282 = vpop.f32.mrf.mxu0
    %v1283 = vadd.f32 %v605, %v1282
    %1284 = vmatmul.bf16.gmra.mxu0 %v669
    %v1285 = vpop.f32.mrf.mxu0
    %v1286 = vadd.f32 %v605, %v1285
    %v1287 = vpop.f32.mrf.mxu0
    %v1288 = vadd.f32 %v605, %v1287
    %1289 = vmatmul.bf16.gmra.mxu0 %v672
    %v1290 = vpop.f32.mrf.mxu0
    %v1291 = vadd.f32 %v605, %v1290
    %v1292 = vpop.f32.mrf.mxu0
    %v1293 = vadd.f32 %v605, %v1292
    %1294 = vmatmul.bf16.gmra.mxu0 %v675
    %v1295 = vpop.f32.mrf.mxu0
    %v1296 = vadd.f32 %v605, %v1295
    %v1297 = vpop.f32.mrf.mxu0
    %v1298 = vadd.f32 %v605, %v1297
    %1299 = vmatmul.bf16.gmra.mxu0 %v678
    %v1300 = vpop.f32.mrf.mxu0
    %v1301 = vadd.f32 %v605, %v1300
    %v1302 = vpop.f32.mrf.mxu0
    %v1303 = vadd.f32 %v605, %v1302
    %1304 = vmatmul.bf16.gmra.mxu0 %v681
    %v1305 = vpop.f32.mrf.mxu0
    %v1306 = vadd.f32 %v605, %v1305
    %v1307 = vpop.f32.mrf.mxu0
    %v1308 = vadd.f32 %v605, %v1307
    %1309 = vmatmul.bf16.gmra.mxu0 %v684
    %v1310 = vpop.f32.mrf.mxu0
    %v1311 = vadd.f32 %v605, %v1310
    %v1312 = vpop.f32.mrf.mxu0
    %v1313 = vadd.f32 %v605, %v1312
    %1314 = vmatmul.bf16.gmra.mxu0 %v687
    %v1315 = vpop.f32.mrf.mxu0
    %v1316 = vadd.f32 %v605, %v1315
    %v1317 = vpop.f32.mrf.mxu0
    %v1318 = vadd.f32 %v605, %v1317
    %1319 = vmatmul.bf16.gmra.mxu0 %v690
    %v1320 = vpop.f32.mrf.mxu0
    %v1321 = vadd.f32 %v605, %v1320
    %v1322 = vpop.f32.mrf.mxu0
    %v1323 = vadd.f32 %v605, %v1322
    %1324 = vmatmul.bf16.gmra.mxu0 %v693
    %v1325 = vpop.f32.mrf.mxu0
    %v1326 = vadd.f32 %v605, %v1325
    %v1327 = vpop.f32.mrf.mxu0
    %v1328 = vadd.f32 %v605, %v1327
    %1329 = vmatmul.bf16.gmra.mxu0 %v696
    %v1330 = vpop.f32.mrf.mxu0
    %v1331 = vadd.f32 %v605, %v1330
    %v1332 = vpop.f32.mrf.mxu0
    %v1333 = vadd.f32 %v605, %v1332
    %1334 = vmatmul.bf16.gmra.mxu0 %v699
    %v1335 = vpop.f32.mrf.mxu0
    %v1336 = vadd.f32 %v605, %v1335
    %v1337 = vpop.f32.mrf.mxu0
    %v1338 = vadd.f32 %v605, %v1337
    %1339 = vmatmul.bf16.gmra.mxu0 %v702
    %v1340 = vpop.f32.mrf.mxu0
    %v1341 = vadd.f32 %v605, %v1340
    %v1342 = vpop.f32.mrf.mxu0
    %v1343 = vadd.f32 %v605, %v1342
    %1344 = vmatmul.bf16.gmra.mxu0 %v705
    %v1345 = vpop.f32.mrf.mxu0
    %v1346 = vadd.f32 %v605, %v1345
    %v1347 = vpop.f32.mrf.mxu0
    %v1348 = vadd.f32 %v605, %v1347
    %1349 = vmatmul.bf16.gmra.mxu0 %v708
    %v1350 = vpop.f32.mrf.mxu0
    %v1351 = vadd.f32 %v605, %v1350
    %v1352 = vpop.f32.mrf.mxu0
    %v1353 = vadd.f32 %v605, %v1352
    %1354 = vmatmul.bf16.gmra.mxu0 %v711
    %v1355 = vpop.f32.mrf.mxu0
    %v1356 = vadd.f32 %v605, %v1355
    %v1357 = vpop.f32.mrf.mxu0
    %v1358 = vadd.f32 %v605, %v1357
    %1359 = vmatmul.bf16.gmra.mxu0 %v714
    %v1360 = vpop.f32.mrf.mxu0
    %v1361 = vadd.f32 %v605, %v1360
    %v1362 = vpop.f32.mrf.mxu0
    %v1363 = vadd.f32 %v605, %v1362
    %1364 = vmatmul.bf16.gmra.mxu0 %v717
    %v1365 = vpop.f32.mrf.mxu0
    %v1366 = vadd.f32 %v605, %v1365
    %v1367 = vpop.f32.mrf.mxu0
    %v1368 = vadd.f32 %v605, %v1367
    %1369 = vmatmul.bf16.gmra.mxu0 %v720
    %v1370 = vpop.f32.mrf.mxu0
    %v1371 = vadd.f32 %v605, %v1370
    %v1372 = vpop.f32.mrf.mxu0
    %v1373 = vadd.f32 %v605, %v1372
    %1374 = vmatmul.bf16.gmra.mxu0 %v723
    %v1375 = vpop.f32.mrf.mxu0
    %v1376 = vadd.f32 %v605, %v1375
    %v1377 = vpop.f32.mrf.mxu0
    %v1378 = vadd.f32 %v605, %v1377
    %1379 = vmatmul.bf16.gmra.mxu0 %v726
    %v1380 = vpop.f32.mrf.mxu0
    %v1381 = vadd.f32 %v605, %v1380
    %v1382 = vpop.f32.mrf.mxu0
    %v1383 = vadd.f32 %v605, %v1382
    %1384 = vmatmul.bf16.gmra.mxu0 %v729
    %v1385 = vpop.f32.mrf.mxu0
    %v1386 = vadd.f32 %v605, %v1385
    %v1387 = vpop.f32.mrf.mxu0
    %v1388 = vadd.f32 %v605, %v1387
    %1389 = vmatmul.bf16.gmra.mxu0 %v732
    %v1390 = vpop.f32.mrf.mxu0
    %v1391 = vadd.f32 %v605, %v1390
    %v1392 = vpop.f32.mrf.mxu0
    %v1393 = vadd.f32 %v605, %v1392
    %1394 = vmatmul.bf16.gmra.mxu0 %v735
    %v1395 = vpop.f32.mrf.mxu0
    %v1396 = vadd.f32 %v605, %v1395
    %v1397 = vpop.f32.mrf.mxu0
    %v1398 = vadd.f32 %v605, %v1397
    %1399 = vmatmul.bf16.gmra.mxu0 %v738
    %v1400 = vpop.f32.mrf.mxu0
    %v1401 = vadd.f32 %v605, %v1400
    %v1402 = vpop.f32.mrf.mxu0
    %v1403 = vadd.f32 %v605, %v1402
    %1404 = vmatmul.bf16.gmra.mxu0 %v741
    %v1405 = vpop.f32.mrf.mxu0
    %v1406 = vadd.f32 %v605, %v1405
    %v1407 = vpop.f32.mrf.mxu0
    %v1408 = vadd.f32 %v605, %v1407
    %1409 = vmatmul.bf16.gmra.mxu0 %v744
    %v1410 = vpop.f32.mrf.mxu0
    %v1411 = vadd.f32 %v605, %v1410
    %v1412 = vpop.f32.mrf.mxu0
    %v1413 = vadd.f32 %v605, %v1412
    %1414 = vmatmul.bf16.gmra.mxu0 %v747
    %v1415 = vpop.f32.mrf.mxu0
    %v1416 = vadd.f32 %v605, %v1415
    %v1417 = vpop.f32.mrf.mxu0
    %v1418 = vadd.f32 %v605, %v1417
    %1419 = vmatmul.bf16.gmra.mxu0 %v750
    %v1420 = vpop.f32.mrf.mxu0
    %v1421 = vadd.f32 %v605, %v1420
    %v1422 = vpop.f32.mrf.mxu0
    %v1423 = vadd.f32 %v605, %v1422
    %1424 = vmatmul.bf16.gmra.mxu0 %v753
    %v1425 = vpop.f32.mrf.mxu0
    %v1426 = vadd.f32 %v605, %v1425
    %v1427 = vpop.f32.mrf.mxu0
    %v1428 = vadd.f32 %v605, %v1427
    %1429 = vmatmul.bf16.gmra.mxu0 %v756
    %v1430 = vpop.f32.mrf.mxu0
    %v1431 = vadd.f32 %v605, %v1430
    %v1432 = vpop.f32.mrf.mxu0
    %v1433 = vadd.f32 %v605, %v1432
    %1434 = vmatmul.bf16.gmra.mxu0 %v759
    %v1435 = vpop.f32.mrf.mxu0
    %v1436 = vadd.f32 %v605, %v1435
    %v1437 = vpop.f32.mrf.mxu0
    %v1438 = vadd.f32 %v605, %v1437
    %1439 = vmatmul.bf16.gmra.mxu0 %v762
    %v1440 = vpop.f32.mrf.mxu0
    %v1441 = vadd.f32 %v605, %v1440
    %v1442 = vpop.f32.mrf.mxu0
    %v1443 = vadd.f32 %v605, %v1442
    %1444 = vmatmul.bf16.gmra.mxu0 %v765
    %v1445 = vpop.f32.mrf.mxu0
    %v1446 = vadd.f32 %v605, %v1445
    %v1447 = vpop.f32.mrf.mxu0
    %v1448 = vadd.f32 %v605, %v1447
    %1449 = vmatmul.bf16.gmra.mxu0 %v768
    %v1450 = vpop.f32.mrf.mxu0
    %v1451 = vadd.f32 %v605, %v1450
    %v1452 = vpop.f32.mrf.mxu0
    %v1453 = vadd.f32 %v605, %v1452
    %1454 = vmatmul.bf16.gmra.mxu0 %v771
    %v1455 = vpop.f32.mrf.mxu0
    %v1456 = vadd.f32 %v605, %v1455
    %v1457 = vpop.f32.mrf.mxu0
    %v1458 = vadd.f32 %v605, %v1457
    %1459 = vmatmul.bf16.gmra.mxu0 %v774
    %v1460 = vpop.f32.mrf.mxu0
    %v1461 = vadd.f32 %v605, %v1460
    %v1462 = vpop.f32.mrf.mxu0
    %v1463 = vadd.f32 %v605, %v1462
    %1464 = vmatmul.bf16.gmra.mxu0 %v777
    %v1465 = vpop.f32.mrf.mxu0
    %v1466 = vadd.f32 %v605, %v1465
    %v1467 = vpop.f32.mrf.mxu0
    %v1468 = vadd.f32 %v605, %v1467
    %1469 = vmatmul.bf16.gmra.mxu0 %v780
    %v1470 = vpop.f32.mrf.mxu0
    %v1471 = vadd.f32 %v605, %v1470
    %v1472 = vpop.f32.mrf.mxu0
    %v1473 = vadd.f32 %v605, %v1472
    %1474 = vmatmul.bf16.gmra.mxu0 %v783
    %v1475 = vpop.f32.mrf.mxu0
    %v1476 = vadd.f32 %v605, %v1475
    %v1477 = vpop.f32.mrf.mxu0
    %v1478 = vadd.f32 %v605, %v1477
    %1479 = vmatmul.bf16.gmra.mxu0 %v786
    %v1480 = vpop.f32.mrf.mxu0
    %v1481 = vadd.f32 %v605, %v1480
    %v1482 = vpop.f32.mrf.mxu0
    %v1483 = vadd.f32 %v605, %v1482
    %1484 = vmatmul.bf16.gmra.mxu0 %v789
    %v1485 = vpop.f32.mrf.mxu0
    %v1486 = vadd.f32 %v605, %v1485
    %v1487 = vpop.f32.mrf.mxu0
    %v1488 = vadd.f32 %v605, %v1487
    %1489 = vmatmul.bf16.gmra.mxu0 %v792
    %v1490 = vpop.f32.mrf.mxu0
    %v1491 = vadd.f32 %v605, %v1490
    %v1492 = vpop.f32.mrf.mxu0
    %v1493 = vadd.f32 %v605, %v1492
    %1494 = vmatmul.bf16.gmra.mxu0 %v795
    %v1495 = vpop.f32.mrf.mxu0
    %v1496 = vadd.f32 %v605, %v1495
    %v1497 = vpop.f32.mrf.mxu0
    %v1498 = vadd.f32 %v605, %v1497
    %1499 = vmatmul.bf16.gmra.mxu0 %v798
    %v1500 = vpop.f32.mrf.mxu0
    %v1501 = vadd.f32 %v605, %v1500
    %v1502 = vpop.f32.mrf.mxu0
    %v1503 = vadd.f32 %v605, %v1502
    %1504 = vmatmul.bf16.gmra.mxu0 %v801
    %v1505 = vpop.f32.mrf.mxu0
    %v1506 = vadd.f32 %v605, %v1505
    %v1507 = vpop.f32.mrf.mxu0
    %v1508 = vadd.f32 %v605, %v1507
    %1509 = vmatmul.bf16.gmra.mxu0 %v804
    %v1510 = vpop.f32.mrf.mxu0
    %v1511 = vadd.f32 %v605, %v1510
    %v1512 = vpop.f32.mrf.mxu0
    %v1513 = vadd.f32 %v605, %v1512
    %1514 = vmatmul.bf16.gmra.mxu0 %v807
    %v1515 = vpop.f32.mrf.mxu0
    %v1516 = vadd.f32 %v605, %v1515
    %v1517 = vpop.f32.mrf.mxu0
    %v1518 = vadd.f32 %v605, %v1517
    %1519 = vmatmul.bf16.gmra.mxu0 %v810
    %v1520 = vpop.f32.mrf.mxu0
    %v1521 = vadd.f32 %v605, %v1520
    %v1522 = vpop.f32.mrf.mxu0
    %v1523 = vadd.f32 %v605, %v1522
    %1524 = vmatmul.bf16.gmra.mxu0 %v813
    %v1525 = vpop.f32.mrf.mxu0
    %v1526 = vadd.f32 %v605, %v1525
    %v1527 = vpop.f32.mrf.mxu0
    %v1528 = vadd.f32 %v605, %v1527
    %1529 = vmatmul.bf16.gmra.mxu0 %v816
    %v1530 = vpop.f32.mrf.mxu0
    %v1531 = vadd.f32 %v605, %v1530
    %v1532 = vpop.f32.mrf.mxu0
    %v1533 = vadd.f32 %v605, %v1532
    %1534 = vmatmul.bf16.gmra.mxu0 %v819
    %v1535 = vpop.f32.mrf.mxu0
    %v1536 = vadd.f32 %v605, %v1535
    %v1537 = vpop.f32.mrf.mxu0
    %v1538 = vadd.f32 %v605, %v1537
    %1539 = vmatmul.bf16.gmra.mxu0 %v822
    %v1540 = vpop.f32.mrf.mxu0
    %v1541 = vadd.f32 %v605, %v1540
    %v1542 = vpop.f32.mrf.mxu0
    %v1543 = vadd.f32 %v605, %v1542
    %1544 = vmatmul.bf16.gmra.mxu0 %v825
    %v1545 = vpop.f32.mrf.mxu0
    %v1546 = vadd.f32 %v605, %v1545
    %v1547 = vpop.f32.mrf.mxu0
    %v1548 = vadd.f32 %v605, %v1547
    %1549 = vmatmul.bf16.gmra.mxu0 %v828
    %v1550 = vpop.f32.mrf.mxu0
    %v1551 = vadd.f32 %v605, %v1550
    %v1552 = vpop.f32.mrf.mxu0
    %v1553 = vadd.f32 %v605, %v1552
    %1554 = vmatmul.bf16.gmra.mxu0 %v831
    %v1555 = vpop.f32.mrf.mxu0
    %v1556 = vadd.f32 %v605, %v1555
    %v1557 = vpop.f32.mrf.mxu0
    %v1558 = vadd.f32 %v605, %v1557
    %1559 = vmatmul.bf16.gmra.mxu0 %v834
    %v1560 = vpop.f32.mrf.mxu0
    %v1561 = vadd.f32 %v605, %v1560
    %v1562 = vpop.f32.mrf.mxu0
    %v1563 = vadd.f32 %v605, %v1562
    %1564 = vmatmul.bf16.gmra.mxu0 %v837
    %v1565 = vpop.f32.mrf.mxu0
    %v1566 = vadd.f32 %v605, %v1565
    %v1567 = vpop.f32.mrf.mxu0
    %v1568 = vadd.f32 %v605, %v1567
    %1569 = vmatmul.bf16.gmra.mxu0 %v840
    %v1570 = vpop.f32.mrf.mxu0
    %v1571 = vadd.f32 %v605, %v1570
    %v1572 = vpop.f32.mrf.mxu0
    %v1573 = vadd.f32 %v605, %v1572
    %1574 = vmatmul.bf16.gmra.mxu0 %v843
    %v1575 = vpop.f32.mrf.mxu0
    %v1576 = vadd.f32 %v605, %v1575
    %v1577 = vpop.f32.mrf.mxu0
    %v1578 = vadd.f32 %v605, %v1577
    %1579 = vmatmul.bf16.gmra.mxu0 %v846
    %v1580 = vpop.f32.mrf.mxu0
    %v1581 = vadd.f32 %v605, %v1580
    %v1582 = vpop.f32.mrf.mxu0
    %v1583 = vadd.f32 %v605, %v1582
    %1584 = vmatmul.bf16.gmra.mxu0 %v849
    %v1585 = vpop.f32.mrf.mxu0
    %v1586 = vadd.f32 %v605, %v1585
    %v1587 = vpop.f32.mrf.mxu0
    %v1588 = vadd.f32 %v605, %v1587
    %1589 = vmatmul.bf16.gmra.mxu0 %v852
    %v1590 = vpop.f32.mrf.mxu0
    %v1591 = vadd.f32 %v605, %v1590
    %v1592 = vpop.f32.mrf.mxu0
    %v1593 = vadd.f32 %v605, %v1592
    %1594 = vmatmul.bf16.gmra.mxu0 %v855
    %v1595 = vpop.f32.mrf.mxu0
    %v1596 = vadd.f32 %v605, %v1595
    %v1597 = vpop.f32.mrf.mxu0
    %v1598 = vadd.f32 %v605, %v1597
    %1599 = vmatmul.bf16.gmra.mxu0 %v858
    %v1600 = vpop.f32.mrf.mxu0
    %v1601 = vadd.f32 %v605, %v1600
    %v1602 = vpop.f32.mrf.mxu0
    %v1603 = vadd.f32 %v605, %v1602
    %1604 = vmatmul.bf16.gmra.mxu0 %v861
    %v1605 = vpop.f32.mrf.mxu0
    %v1606 = vadd.f32 %v605, %v1605
    %v1607 = vpop.f32.mrf.mxu0
    %v1608 = vadd.f32 %v605, %v1607
    %1609 = vmatmul.bf16.gmra.mxu0 %v864
    %v1610 = vpop.f32.mrf.mxu0
    %v1611 = vadd.f32 %v605, %v1610
    %v1612 = vpop.f32.mrf.mxu0
    %v1613 = vadd.f32 %v605, %v1612
    %1614 = vmatmul.bf16.gmra.mxu0 %v867
    %v1615 = vpop.f32.mrf.mxu0
    %v1616 = vadd.f32 %v605, %v1615
    %v1617 = vpop.f32.mrf.mxu0
    %v1618 = vadd.f32 %v605, %v1617
    %1619 = vmatmul.bf16.gmra.mxu0 %v870
    %v1620 = vpop.f32.mrf.mxu0
    %v1621 = vadd.f32 %v605, %v1620
    %v1622 = vpop.f32.mrf.mxu0
    %v1623 = vadd.f32 %v605, %v1622
    %1624 = vmatmul.bf16.gmra.mxu0 %v873
    %v1625 = vpop.f32.mrf.mxu0
    %v1626 = vadd.f32 %v605, %v1625
    %v1627 = vpop.f32.mrf.mxu0
    %v1628 = vadd.f32 %v605, %v1627
    %1629 = vmatmul.bf16.gmra.mxu0 %v876
    %v1630 = vpop.f32.mrf.mxu0
    %v1631 = vadd.f32 %v605, %v1630
    %v1632 = vpop.f32.mrf.mxu0
    %v1633 = vadd.f32 %v605, %v1632
    %1634 = vmatmul.bf16.gmra.mxu0 %v879
    %v1635 = vpop.f32.mrf.mxu0
    %v1636 = vadd.f32 %v605, %v1635
    %v1637 = vpop.f32.mrf.mxu0
    %v1638 = vadd.f32 %v605, %v1637
    %1639 = vmatmul.bf16.gmra.mxu0 %v882
    %v1640 = vpop.f32.mrf.mxu0
    %v1641 = vadd.f32 %v605, %v1640
    %v1642 = vpop.f32.mrf.mxu0
    %v1643 = vadd.f32 %v605, %v1642
    %1644 = vmatmul.bf16.gmra.mxu0 %v885
    %v1645 = vpop.f32.mrf.mxu0
    %v1646 = vadd.f32 %v605, %v1645
    %v1647 = vpop.f32.mrf.mxu0
    %v1648 = vadd.f32 %v605, %v1647
    %1649 = vmatmul.bf16.gmra.mxu0 %v888
    %v1650 = vpop.f32.mrf.mxu0
    %v1651 = vadd.f32 %v605, %v1650
    %v1652 = vpop.f32.mrf.mxu0
    %v1653 = vadd.f32 %v605, %v1652
    %1654 = vmatmul.bf16.gmra.mxu0 %v891
    %v1655 = vpop.f32.mrf.mxu0
    %v1656 = vadd.f32 %v605, %v1655
    %v1657 = vpop.f32.mrf.mxu0
    %v1658 = vadd.f32 %v605, %v1657
    %1659 = vmatmul.bf16.gmra.mxu0 %v894
    %v1660 = vpop.f32.mrf.mxu0
    %v1661 = vadd.f32 %v605, %v1660
    %v1662 = vpop.f32.mrf.mxu0
    %v1663 = vadd.f32 %v605, %v1662
    %1664 = vmatmul.bf16.gmra.mxu0 %v897
    %v1665 = vpop.f32.mrf.mxu0
    %v1666 = vadd.f32 %v605, %v1665
    %v1667 = vpop.f32.mrf.mxu0
    %v1668 = vadd.f32 %v605, %v1667
    %1669 = vmatmul.bf16.gmra.mxu0 %v900
    %v1670 = vpop.f32.mrf.mxu0
    %v1671 = vadd.f32 %v605, %v1670
    %v1672 = vpop.f32.mrf.mxu0
    %v1673 = vadd.f32 %v605, %v1672
    %1674 = vmatmul.bf16.gmra.mxu0 %v903
    %v1675 = vpop.f32.mrf.mxu0
    %v1676 = vadd.f32 %v605, %v1675
    %v1677 = vpop.f32.mrf.mxu0
    %v1678 = vadd.f32 %v605, %v1677
    %1679 = vmatmul.bf16.gmra.mxu0 %v906
    %v1680 = vpop.f32.mrf.mxu0
    %v1681 = vadd.f32 %v605, %v1680
    %v1682 = vpop.f32.mrf.mxu0
    %v1683 = vadd.f32 %v605, %v1682
    %1684 = vmatmul.bf16.gmra.mxu0 %v909
    %v1685 = vpop.f32.mrf.mxu0
    %v1686 = vadd.f32 %v605, %v1685
    %v1687 = vpop.f32.mrf.mxu0
    %v1688 = vadd.f32 %v605, %v1687
    %1689 = vmatmul.bf16.gmra.mxu0 %v912
    %v1690 = vpop.f32.mrf.mxu0
    %v1691 = vadd.f32 %v605, %v1690
    %v1692 = vpop.f32.mrf.mxu0
    %v1693 = vadd.f32 %v605, %v1692
    %1694 = vmatmul.bf16.gmra.mxu0 %v915
    %v1695 = vpop.f32.mrf.mxu0
    %v1696 = vadd.f32 %v605, %v1695
    %v1697 = vpop.f32.mrf.mxu0
    %v1698 = vadd.f32 %v605, %v1697
    %1699 = vmatmul.bf16.gmra.mxu0 %v918
    %v1700 = vpop.f32.mrf.mxu0
    %v1701 = vadd.f32 %v605, %v1700
    %v1702 = vpop.f32.mrf.mxu0
    %v1703 = vadd.f32 %v605, %v1702
    %1704 = vmatmul.bf16.gmra.mxu0 %v921
    %v1705 = vpop.f32.mrf.mxu0
    %v1706 = vadd.f32 %v605, %v1705
    %v1707 = vpop.f32.mrf.mxu0
    %v1708 = vadd.f32 %v605, %v1707
    %1709 = vmatmul.bf16.gmra.mxu0 %v924
    %v1710 = vpop.f32.mrf.mxu0
    %v1711 = vadd.f32 %v605, %v1710
    %v1712 = vpop.f32.mrf.mxu0
    %v1713 = vadd.f32 %v605, %v1712
    %1714 = vmatmul.bf16.gmra.mxu0 %v927
    %v1715 = vpop.f32.mrf.mxu0
    %v1716 = vadd.f32 %v605, %v1715
    %v1717 = vpop.f32.mrf.mxu0
    %v1718 = vadd.f32 %v605, %v1717
    %1719 = vmatmul.bf16.gmra.mxu0 %v930
    %v1720 = vpop.f32.mrf.mxu0
    %v1721 = vadd.f32 %v605, %v1720
    %v1722 = vpop.f32.mrf.mxu0
    %v1723 = vadd.f32 %v605, %v1722
    %1724 = vmatmul.bf16.gmra.mxu0 %v933
    %v1725 = vpop.f32.mrf.mxu0
    %v1726 = vadd.f32 %v605, %v1725
    %v1727 = vpop.f32.mrf.mxu0
    %v1728 = vadd.f32 %v605, %v1727
    %1729 = vmatmul.bf16.gmra.mxu0 %v936
    %v1730 = vpop.f32.mrf.mxu0
    %v1731 = vadd.f32 %v605, %v1730
    %v1732 = vpop.f32.mrf.mxu0
    %v1733 = vadd.f32 %v605, %v1732
    %1734 = vmatmul.bf16.gmra.mxu0 %v939
    %v1735 = vpop.f32.mrf.mxu0
    %v1736 = vadd.f32 %v605, %v1735
    %v1737 = vpop.f32.mrf.mxu0
    %v1738 = vadd.f32 %v605, %v1737
    %1739 = vmatmul.bf16.gmra.mxu0 %v942
    %v1740 = vpop.f32.mrf.mxu0
    %v1741 = vadd.f32 %v605, %v1740
    %v1742 = vpop.f32.mrf.mxu0
    %v1743 = vadd.f32 %v605, %v1742
    %1744 = vmatmul.bf16.gmra.mxu0 %v945
    %v1745 = vpop.f32.mrf.mxu0
    %v1746 = vadd.f32 %v605, %v1745
    %v1747 = vpop.f32.mrf.mxu0
    %v1748 = vadd.f32 %v605, %v1747
    %1749 = vmatmul.bf16.gmra.mxu0 %v948
    %v1750 = vpop.f32.mrf.mxu0
    %v1751 = vadd.f32 %v605, %v1750
    %v1752 = vpop.f32.mrf.mxu0
    %v1753 = vadd.f32 %v605, %v1752
    %1754 = vmatmul.bf16.gmra.mxu0 %v951
    %v1755 = vpop.f32.mrf.mxu0
    %v1756 = vadd.f32 %v605, %v1755
    %v1757 = vpop.f32.mrf.mxu0
    %v1758 = vadd.f32 %v605, %v1757
    %1759 = vmatmul.bf16.gmra.mxu0 %v954
    %v1760 = vpop.f32.mrf.mxu0
    %v1761 = vadd.f32 %v605, %v1760
    %v1762 = vpop.f32.mrf.mxu0
    %v1763 = vadd.f32 %v605, %v1762
    %1764 = vmatmul.bf16.gmra.mxu0 %v957
    %v1765 = vpop.f32.mrf.mxu0
    %v1766 = vadd.f32 %v605, %v1765
    %v1767 = vpop.f32.mrf.mxu0
    %v1768 = vadd.f32 %v605, %v1767
    %1769 = vmatmul.bf16.gmra.mxu0 %v960
    %v1770 = vpop.f32.mrf.mxu0
    %v1771 = vadd.f32 %v605, %v1770
    %v1772 = vpop.f32.mrf.mxu0
    %v1773 = vadd.f32 %v605, %v1772
    %1774 = vmatmul.bf16.gmra.mxu0 %v963
    %v1775 = vpop.f32.mrf.mxu0
    %v1776 = vadd.f32 %v605, %v1775
    %v1777 = vpop.f32.mrf.mxu0
    %v1778 = vadd.f32 %v605, %v1777
    %1779 = vmatmul.bf16.gmra.mxu0 %v966
    %v1780 = vpop.f32.mrf.mxu0
    %v1781 = vadd.f32 %v605, %v1780
    %v1782 = vpop.f32.mrf.mxu0
    %v1783 = vadd.f32 %v605, %v1782
    %1784 = vmatmul.bf16.gmra.mxu0 %v969
    %v1785 = vpop.f32.mrf.mxu0
    %v1786 = vadd.f32 %v605, %v1785
    %v1787 = vpop.f32.mrf.mxu0
    %v1788 = vadd.f32 %v605, %v1787
    %1789 = vmatmul.bf16.gmra.mxu0 %v972
    %v1790 = vpop.f32.mrf.mxu0
    %v1791 = vadd.f32 %v605, %v1790
    %v1792 = vpop.f32.mrf.mxu0
    %v1793 = vadd.f32 %v605, %v1792
    %1794 = vmatmul.bf16.gmra.mxu0 %v975
    %v1795 = vpop.f32.mrf.mxu0
    %v1796 = vadd.f32 %v605, %v1795
    %v1797 = vpop.f32.mrf.mxu0
    %v1798 = vadd.f32 %v605, %v1797
    %1799 = vmatmul.bf16.gmra.mxu0 %v978
    %v1800 = vpop.f32.mrf.mxu0
    %v1801 = vadd.f32 %v605, %v1800
    %v1802 = vpop.f32.mrf.mxu0
    %v1803 = vadd.f32 %v605, %v1802
    %1804 = vmatmul.bf16.gmra.mxu0 %v981
    %v1805 = vpop.f32.mrf.mxu0
    %v1806 = vadd.f32 %v605, %v1805
    %v1807 = vpop.f32.mrf.mxu0
    %v1808 = vadd.f32 %v605, %v1807
    %1809 = vmatmul.bf16.gmra.mxu0 %v984
    %v1810 = vpop.f32.mrf.mxu0
    %v1811 = vadd.f32 %v605, %v1810
    %v1812 = vpop.f32.mrf.mxu0
    %v1813 = vadd.f32 %v605, %v1812
    %1814 = vmatmul.bf16.gmra.mxu0 %v987
    %v1815 = vpop.f32.mrf.mxu0
    %v1816 = vadd.f32 %v605, %v1815
    %v1817 = vpop.f32.mrf.mxu0
    %v1818 = vadd.f32 %v605, %v1817
    %1819 = vmatmul.bf16.gmra.mxu0 %v990
    %v1820 = vpop.f32.mrf.mxu0
    %v1821 = vadd.f32 %v605, %v1820
    %v1822 = vpop.f32.mrf.mxu0
    %v1823 = vadd.f32 %v605, %v1822
    %1824 = vmatmul.bf16.gmra.mxu0 %v993
    %v1825 = vpop.f32.mrf.mxu0
    %v1826 = vadd.f32 %v605, %v1825
    %v1827 = vpop.f32.mrf.mxu0
    %v1828 = vadd.f32 %v605, %v1827
    %1829 = vmatmul.bf16.gmra.mxu0 %v996
    %v1830 = vpop.f32.mrf.mxu0
    %v1831 = vadd.f32 %v605, %v1830
    %v1832 = vpop.f32.mrf.mxu0
    %v1833 = vadd.f32 %v605, %v1832
    %1834 = vmatmul.bf16.gmra.mxu0 %v999
    %v1835 = vpop.f32.mrf.mxu0
    %v1836 = vadd.f32 %v605, %v1835
    %v1837 = vpop.f32.mrf.mxu0
    %v1838 = vadd.f32 %v605, %v1837
    %1839 = vmatmul.bf16.gmra.mxu0 %v1002
    %v1840 = vpop.f32.mrf.mxu0
    %v1841 = vadd.f32 %v605, %v1840
    %v1842 = vpop.f32.mrf.mxu0
    %v1843 = vadd.f32 %v605, %v1842
    %1844 = vmatmul.bf16.gmra.mxu0 %v1005
    %v1845 = vpop.f32.mrf.mxu0
    %v1846 = vadd.f32 %v605, %v1845
    %v1847 = vpop.f32.mrf.mxu0
    %v1848 = vadd.f32 %v605, %v1847
    %1849 = vmatmul.bf16.gmra.mxu0 %v1008
    %v1850 = vpop.f32.mrf.mxu0
    %v1851 = vadd.f32 %v605, %v1850
    %v1852 = vpop.f32.mrf.mxu0
    %v1853 = vadd.f32 %v605, %v1852
    %1854 = vmatmul.bf16.gmra.mxu0 %v1011
    %v1855 = vpop.f32.mrf.mxu0
    %v1856 = vadd.f32 %v605, %v1855
    %v1857 = vpop.f32.mrf.mxu0
    %v1858 = vadd.f32 %v605, %v1857
    %1859 = vmatmul.bf16.gmra.mxu0 %v1014
    %v1860 = vpop.f32.mrf.mxu0
    %v1861 = vadd.f32 %v605, %v1860
    %v1862 = vpop.f32.mrf.mxu0
    %v1863 = vadd.f32 %v605, %v1862
    %1864 = vmatmul.bf16.gmra.mxu0 %v1017
    %v1865 = vpop.f32.mrf.mxu0
    %v1866 = vadd.f32 %v605, %v1865
    %v1867 = vpop.f32.mrf.mxu0
    %v1868 = vadd.f32 %v605, %v1867
    %1869 = vmatmul.bf16.gmra.mxu0 %v1020
    %v1870 = vpop.f32.mrf.mxu0
    %v1871 = vadd.f32 %v605, %v1870
    %v1872 = vpop.f32.mrf.mxu0
    %v1873 = vadd.f32 %v605, %v1872
    %1874 = vmatmul.bf16.gmra.mxu0 %v1023
    %v1875 = vpop.f32.mrf.mxu0
    %v1876 = vadd.f32 %v605, %v1875
    %v1877 = vpop.f32.mrf.mxu0
    %v1878 = vadd.f32 %v605, %v1877
    %1879 = vmatmul.bf16.gmra.mxu0 %v1026
    %v1880 = vpop.f32.mrf.mxu0
    %v1881 = vadd.f32 %v605, %v1880
    %v1882 = vpop.f32.mrf.mxu0
    %v1883 = vadd.f32 %v605, %v1882
    %1884 = vmatmul.bf16.gmra.mxu0 %v1029
    %v1885 = vpop.f32.mrf.mxu0
    %v1886 = vadd.f32 %v605, %v1885
    %v1887 = vpop.f32.mrf.mxu0
    %v1888 = vadd.f32 %v605, %v1887
    %1889 = vmatmul.bf16.gmra.mxu0 %v1032
    %v1890 = vpop.f32.mrf.mxu0
    %v1891 = vadd.f32 %v605, %v1890
    %v1892 = vpop.f32.mrf.mxu0
    %v1893 = vadd.f32 %v605, %v1892
    %1894 = vmatmul.bf16.gmra.mxu0 %v1035
    %v1895 = vpop.f32.mrf.mxu0
    %v1896 = vadd.f32 %v605, %v1895
    %v1897 = vpop.f32.mrf.mxu0
    %v1898 = vadd.f32 %v605, %v1897
    %1899 = vmatmul.bf16.gmra.mxu0 %v1038
    %v1900 = vpop.f32.mrf.mxu0
    %v1901 = vadd.f32 %v605, %v1900
    %v1902 = vpop.f32.mrf.mxu0
    %v1903 = vadd.f32 %v605, %v1902
    %1904 = vmatmul.bf16.gmra.mxu0 %v1041
    %v1905 = vpop.f32.mrf.mxu0
    %v1906 = vadd.f32 %v605, %v1905
    %v1907 = vpop.f32.mrf.mxu0
    %v1908 = vadd.f32 %v605, %v1907
    %1909 = vmatmul.bf16.gmra.mxu0 %v1044
    %v1910 = vpop.f32.mrf.mxu0
    %v1911 = vadd.f32 %v605, %v1910
    %v1912 = vpop.f32.mrf.mxu0
    %v1913 = vadd.f32 %v605, %v1912
    %1914 = vmatmul.bf16.gmra.mxu0 %v1047
    %v1915 = vpop.f32.mrf.mxu0
    %v1916 = vadd.f32 %v605, %v1915
    %v1917 = vpop.f32.mrf.mxu0
    %v1918 = vadd.f32 %v605, %v1917
    %1919 = vmatmul.bf16.gmra.mxu0 %v1050
    %v1920 = vpop.f32.mrf.mxu0
    %v1921 = vadd.f32 %v605, %v1920
    %v1922 = vpop.f32.mrf.mxu0
    %v1923 = vadd.f32 %v605, %v1922
    %1924 = vmatmul.bf16.gmra.mxu0 %v1053
    %v1925 = vpop.f32.mrf.mxu0
    %v1926 = vadd.f32 %v605, %v1925
    %v1927 = vpop.f32.mrf.mxu0
    %v1928 = vadd.f32 %v605, %v1927
    %1929 = vmatmul.bf16.gmra.mxu0 %v1056
    %v1930 = vpop.f32.mrf.mxu0
    %v1931 = vadd.f32 %v605, %v1930
    %v1932 = vpop.f32.mrf.mxu0
    %v1933 = vadd.f32 %v605, %v1932
    %1934 = vmatmul.bf16.gmra.mxu0 %v1059
    %v1935 = vpop.f32.mrf.mxu0
    %v1936 = vadd.f32 %v605, %v1935
    %v1937 = vpop.f32.mrf.mxu0
    %v1938 = vadd.f32 %v605, %v1937
    %1939 = vmatmul.bf16.gmra.mxu0 %v1062
    %v1940 = vpop.f32.mrf.mxu0
    %v1941 = vadd.f32 %v605, %v1940
    %v1942 = vpop.f32.mrf.mxu0
    %v1943 = vadd.f32 %v605, %v1942
    %1944 = vmatmul.bf16.gmra.mxu0 %v1065
    %v1945 = vpop.f32.mrf.mxu0
    %v1946 = vadd.f32 %v605, %v1945
    %v1947 = vpop.f32.mrf.mxu0
    %v1948 = vadd.f32 %v605, %v1947
    %1949 = vmatmul.bf16.gmra.mxu0 %v1068
    %v1950 = vpop.f32.mrf.mxu0
    %v1951 = vadd.f32 %v605, %v1950
    %v1952 = vpop.f32.mrf.mxu0
    %v1953 = vadd.f32 %v605, %v1952
    %1954 = vmatmul.bf16.gmra.mxu0 %v1071
    %v1955 = vpop.f32.mrf.mxu0
    %v1956 = vadd.f32 %v605, %v1955
    %v1957 = vpop.f32.mrf.mxu0
    %v1958 = vadd.f32 %v605, %v1957
    %1959 = vmatmul.bf16.gmra.mxu0 %v1074
    %v1960 = vpop.f32.mrf.mxu0
    %v1961 = vadd.f32 %v605, %v1960
    %v1962 = vpop.f32.mrf.mxu0
    %v1963 = vadd.f32 %v605, %v1962
    %1964 = vmatmul.bf16.gmra.mxu0 %v1077
    %v1965 = vpop.f32.mrf.mxu0
    %v1966 = vadd.f32 %v605, %v1965
    %v1967 = vpop.f32.mrf.mxu0
    %v1968 = vadd.f32 %v605, %v1967
    %1969 = vmatmul.bf16.gmra.mxu0 %v1080
    %v1970 = vpop.f32.mrf.mxu0
    %v1971 = vadd.f32 %v605, %v1970
    %v1972 = vpop.f32.mrf.mxu0
    %v1973 = vadd.f32 %v605, %v1972
    %1974 = vmatmul.bf16.gmra.mxu0 %v1083
    %v1975 = vpop.f32.mrf.mxu0
    %v1976 = vadd.f32 %v605, %v1975
    %v1977 = vpop.f32.mrf.mxu0
    %v1978 = vadd.f32 %v605, %v1977
    %1979 = vmatmul.bf16.gmra.mxu0 %v1086
    %v1980 = vpop.f32.mrf.mxu0
    %v1981 = vadd.f32 %v605, %v1980
    %v1982 = vpop.f32.mrf.mxu0
    %v1983 = vadd.f32 %v605, %v1982
    %1984 = vmatmul.bf16.gmra.mxu0 %v1089
    %v1985 = vpop.f32.mrf.mxu0
    %v1986 = vadd.f32 %v605, %v1985
    %v1987 = vpop.f32.mrf.mxu0
    %v1988 = vadd.f32 %v605, %v1987
    %1989 = vmatmul.bf16.gmra.mxu0 %v1092
    %v1990 = vpop.f32.mrf.mxu0
    %v1991 = vadd.f32 %v605, %v1990
    %v1992 = vpop.f32.mrf.mxu0
    %v1993 = vadd.f32 %v605, %v1992
    %1994 = vmatmul.bf16.gmra.mxu0 %v1095
    %v1995 = vpop.f32.mrf.mxu0
    %v1996 = vadd.f32 %v605, %v1995
    %v1997 = vpop.f32.mrf.mxu0
    %v1998 = vadd.f32 %v605, %v1997
    %1999 = vmatmul.bf16.gmra.mxu0 %v1098
    %v2000 = vpop.f32.mrf.mxu0
    %v2001 = vadd.f32 %v605, %v2000
    %v2002 = vpop.f32.mrf.mxu0
    %v2003 = vadd.f32 %v605, %v2002
    %2004 = vmatmul.bf16.gmra.mxu0 %v1101
    %v2005 = vpop.f32.mrf.mxu0
    %v2006 = vadd.f32 %v605, %v2005
    %v2007 = vpop.f32.mrf.mxu0
    %v2008 = vadd.f32 %v605, %v2007
    %2009 = vmatmul.bf16.gmra.mxu0 %v1104
    %v2010 = vpop.f32.mrf.mxu0
    %v2011 = vadd.f32 %v605, %v2010
    %v2012 = vpop.f32.mrf.mxu0
    %v2013 = vadd.f32 %v605, %v2012
    %2014 = vmatmul.bf16.gmra.mxu0 %v1107
    %v2015 = vpop.f32.mrf.mxu0
    %v2016 = vadd.f32 %v605, %v2015
    %v2017 = vpop.f32.mrf.mxu0
    %v2018 = vadd.f32 %v605, %v2017
    %2019 = vmatmul.bf16.gmra.mxu0 %v1110
    %v2020 = vpop.f32.mrf.mxu0
    %v2021 = vadd.f32 %v605, %v2020
    %v2022 = vpop.f32.mrf.mxu0
    %v2023 = vadd.f32 %v605, %v2022
    %2024 = vmatmul.bf16.gmra.mxu0 %v1113
    %v2025 = vpop.f32.mrf.mxu0
    %v2026 = vadd.f32 %v605, %v2025
    %v2027 = vpop.f32.mrf.mxu0
    %v2028 = vadd.f32 %v605, %v2027
    %2029 = vmatmul.bf16.gmra.mxu0 %v1116
    %v2030 = vpop.f32.mrf.mxu0
    %v2031 = vadd.f32 %v605, %v2030
    %v2032 = vpop.f32.mrf.mxu0
    %v2033 = vadd.f32 %v605, %v2032
    %2034 = vmatmul.bf16.gmra.mxu0 %v1119
    %v2035 = vpop.f32.mrf.mxu0
    %v2036 = vadd.f32 %v605, %v2035
    %v2037 = vpop.f32.mrf.mxu0
    %v2038 = vadd.f32 %v605, %v2037
    %2039 = vmatmul.bf16.gmra.mxu0 %v1122
    %v2040 = vpop.f32.mrf.mxu0
    %v2041 = vadd.f32 %v605, %v2040
    %v2042 = vpop.f32.mrf.mxu0
    %v2043 = vadd.f32 %v605, %v2042
    %2044 = vmatmul.bf16.gmra.mxu0 %v1125
    %v2045 = vpop.f32.mrf.mxu0
    %v2046 = vadd.f32 %v605, %v2045
    %v2047 = vpop.f32.mrf.mxu0
    %v2048 = vadd.f32 %v605, %v2047
    %2049 = vmatmul.bf16.gmra.mxu0 %v1128
    %v2050 = vpop.f32.mrf.mxu0
    %v2051 = vadd.f32 %v605, %v2050
    %v2052 = vpop.f32.mrf.mxu0
    %v2053 = vadd.f32 %v605, %v2052
    %2054 = vmatmul.bf16.gmra.mxu0 %v1131
    %v2055 = vpop.f32.mrf.mxu0
    %v2056 = vadd.f32 %v605, %v2055
    %v2057 = vpop.f32.mrf.mxu0
    %v2058 = vadd.f32 %v605, %v2057
    %2059 = vmatmul.bf16.gmra.mxu0 %v1134
    %v2060 = vpop.f32.mrf.mxu0
    %v2061 = vadd.f32 %v605, %v2060
    %v2062 = vpop.f32.mrf.mxu0
    %v2063 = vadd.f32 %v605, %v2062
    %2064 = vmatmul.bf16.gmra.mxu0 %v1137
    %v2065 = vpop.f32.mrf.mxu0
    %v2066 = vadd.f32 %v605, %v2065
    %v2067 = vpop.f32.mrf.mxu0
    %v2068 = vadd.f32 %v605, %v2067
    %2069 = vmatmul.bf16.gmra.mxu0 %v1140
    %v2070 = vpop.f32.mrf.mxu0
    %v2071 = vadd.f32 %v605, %v2070
    %v2072 = vpop.f32.mrf.mxu0
    %v2073 = vadd.f32 %v605, %v2072
    %2074 = vmatmul.bf16.gmra.mxu0 %v1143
    %v2075 = vpop.f32.mrf.mxu0
    %v2076 = vadd.f32 %v605, %v2075
    %v2077 = vpop.f32.mrf.mxu0
    %v2078 = vadd.f32 %v605, %v2077
    %2079 = vmatmul.bf16.gmra.mxu0 %v1146
    %v2080 = vpop.f32.mrf.mxu0
    %v2081 = vadd.f32 %v605, %v2080
    %v2082 = vpop.f32.mrf.mxu0
    %v2083 = vadd.f32 %v605, %v2082
    %2084 = vmatmul.bf16.gmra.mxu0 %v1149
    %v2085 = vpop.f32.mrf.mxu0
    %v2086 = vadd.f32 %v605, %v2085
    %v2087 = vpop.f32.mrf.mxu0
    %v2088 = vadd.f32 %v605, %v2087
    %2089 = vmatmul.bf16.gmra.mxu0 %v1152
    %v2090 = vpop.f32.mrf.mxu0
    %v2091 = vadd.f32 %v605, %v2090
    %v2092 = vpop.f32.mrf.mxu0
    %v2093 = vadd.f32 %v605, %v2092
    %2094 = vmatmul.bf16.gmra.mxu0 %v1155
    %v2095 = vpop.f32.mrf.mxu0
    %v2096 = vadd.f32 %v605, %v2095
    %v2097 = vpop.f32.mrf.mxu0
    %v2098 = vadd.f32 %v605, %v2097
    %2099 = vmatmul.bf16.gmra.mxu0 %v1158
    %v2100 = vpop.f32.mrf.mxu0
    %v2101 = vadd.f32 %v605, %v2100
    %v2102 = vpop.f32.mrf.mxu0
    %v2103 = vadd.f32 %v605, %v2102
    %2104 = vmatmul.bf16.gmra.mxu0 %v1161
    %v2105 = vpop.f32.mrf.mxu0
    %v2106 = vadd.f32 %v605, %v2105
    %v2107 = vpop.f32.mrf.mxu0
    %v2108 = vadd.f32 %v605, %v2107
    %2109 = vmatmul.bf16.gmra.mxu0 %v1164
    %v2110 = vpop.f32.mrf.mxu0
    %v2111 = vadd.f32 %v605, %v2110
    %v2112 = vpop.f32.mrf.mxu0
    %v2113 = vadd.f32 %v605, %v2112
    %2114 = vmatmul.bf16.gmra.mxu0 %v1167
    %v2115 = vpop.f32.mrf.mxu0
    %v2116 = vadd.f32 %v605, %v2115
    %v2117 = vpop.f32.mrf.mxu0
    %v2118 = vadd.f32 %v605, %v2117
    %2119 = vmatmul.bf16.gmra.mxu0 %v1170
    %v2120 = vpop.f32.mrf.mxu0
    %v2121 = vadd.f32 %v605, %v2120
    %v2122 = vpop.f32.mrf.mxu0
    %v2123 = vadd.f32 %v605, %v2122
    %2124 = vmatmul.bf16.gmra.mxu0 %v1173
    %v2125 = vpop.f32.mrf.mxu0
    %v2126 = vadd.f32 %v605, %v2125
    %v2127 = vpop.f32.mrf.mxu0
    %v2128 = vadd.f32 %v605, %v2127
    %2129 = vmatmul.bf16.gmra.mxu0 %v1176
    %v2130 = vpop.f32.mrf.mxu0
    %v2131 = vadd.f32 %v605, %v2130
    %v2132 = vpop.f32.mrf.mxu0
    %v2133 = vadd.f32 %v605, %v2132
    %2134 = vmatmul.bf16.gmra.mxu0 %v1179
    %v2135 = vpop.f32.mrf.mxu0
    %v2136 = vadd.f32 %v605, %v2135
    %v2137 = vpop.f32.mrf.mxu0
    %v2138 = vadd.f32 %v605, %v2137
    %2139 = vmatmul.bf16.gmra.mxu0 %v1182
    %v2140 = vpop.f32.mrf.mxu0
    %v2141 = vadd.f32 %v605, %v2140
    %v2142 = vpop.f32.mrf.mxu0
    %v2143 = vadd.f32 %v605, %v2142
    %2144 = vmatmul.bf16.gmra.mxu0 %v1185
    %v2145 = vpop.f32.mrf.mxu0
    %v2146 = vadd.f32 %v605, %v2145
    %v2147 = vpop.f32.mrf.mxu0
    %v2148 = vadd.f32 %v605, %v2147
    %2149 = vmatmul.bf16.gmra.mxu0 %v1188
    %v2150 = vpop.f32.mrf.mxu0
    %v2151 = vadd.f32 %v605, %v2150
    %v2152 = vpop.f32.mrf.mxu0
    %v2153 = vadd.f32 %v605, %v2152
    %2154 = vmatmul.bf16.gmra.mxu0 %v1191
    %v2155 = vpop.f32.mrf.mxu0
    %v2156 = vadd.f32 %v605, %v2155
    %v2157 = vpop.f32.mrf.mxu0
    %v2158 = vadd.f32 %v605, %v2157
    %2159 = vmatmul.bf16.gmra.mxu0 %v1194
    %v2160 = vpop.f32.mrf.mxu0
    %v2161 = vadd.f32 %v605, %v2160
    %v2162 = vpop.f32.mrf.mxu0
    %v2163 = vadd.f32 %v605, %v2162
    %2164 = vdwg.mxu0
    %v2165 = vtanh.pop %v1206
    %v2166 = vtanh.pop %v1208
    %v2167 = vtanh.pop %v1211
    %v2168 = vtanh.pop %v1213
    %v2169 = vtanh.pop %v1216
    %v2170 = vtanh.pop %v1218
    %v2171 = vtanh.pop %v1221
    %v2172 = vtanh.pop %v1223
    %v2173 = vtanh.pop %v1226
    %v2174 = vtanh.pop %v1228
    %v2175 = vtanh.pop %v1231
    %v2176 = vtanh.pop %v1233
    %v2177 = vtanh.pop %v1236
    %v2178 = vtanh.pop %v1238
    %v2179 = vtanh.pop %v1241
    %v2180 = vtanh.pop %v1243
    %v2181 = vtanh.pop %v1246
    %v2182 = vtanh.pop %v1248
    %v2183 = vtanh.pop %v1251
    %v2184 = vtanh.pop %v1253
    %v2185 = vtanh.pop %v1256
    %v2186 = vtanh.pop %v1258
    %v2187 = vtanh.pop %v1261
    %v2188 = vtanh.pop %v1263
    %v2189 = vtanh.pop %v1266
    %v2190 = vtanh.pop %v1268
    %v2191 = vtanh.pop %v1271
    %v2192 = vtanh.pop %v1273
    %v2193 = vtanh.pop %v1276
    %v2194 = vtanh.pop %v1278
    %v2195 = vtanh.pop %v1281
    %v2196 = vtanh.pop %v1283
    %v2197 = vtanh.pop %v1286
    %v2198 = vtanh.pop %v1288
    %v2199 = vtanh.pop %v1291
    %v2200 = vtanh.pop %v1293
    %v2201 = vtanh.pop %v1296
    %v2202 = vtanh.pop %v1298
    %v2203 = vtanh.pop %v1301
    %v2204 = vtanh.pop %v1303
    %v2205 = vtanh.pop %v1306
    %v2206 = vtanh.pop %v1308
    %v2207 = vtanh.pop %v1311
    %v2208 = vtanh.pop %v1313
    %v2209 = vtanh.pop %v1316
    %v2210 = vtanh.pop %v1318
    %v2211 = vtanh.pop %v1321
    %v2212 = vtanh.pop %v1323
    %v2213 = vtanh.pop %v1326
    %v2214 = vtanh.pop %v1328
    %v2215 = vtanh.pop %v1331
    %v2216 = vtanh.pop %v1333
    %v2217 = vtanh.pop %v1336
    %v2218 = vtanh.pop %v1338
    %v2219 = vtanh.pop %v1341
    %v2220 = vtanh.pop %v1343
    %v2221 = vtanh.pop %v1346
    %v2222 = vtanh.pop %v1348
    %v2223 = vtanh.pop %v1351
    %v2224 = vtanh.pop %v1353
    %v2225 = vtanh.pop %v1356
    %v2226 = vtanh.pop %v1358
    %v2227 = vtanh.pop %v1361
    %v2228 = vtanh.pop %v1363
    %v2229 = vtanh.pop %v1366
    %v2230 = vtanh.pop %v1368
    %v2231 = vtanh.pop %v1371
    %v2232 = vtanh.pop %v1373
    %v2233 = vtanh.pop %v1376
    %v2234 = vtanh.pop %v1378
    %v2235 = vtanh.pop %v1381
    %v2236 = vtanh.pop %v1383
    %v2237 = vtanh.pop %v1386
    %v2238 = vtanh.pop %v1388
    %v2239 = vtanh.pop %v1391
    %v2240 = vtanh.pop %v1393
    %v2241 = vtanh.pop %v1396
    %v2242 = vtanh.pop %v1398
    %v2243 = vtanh.pop %v1401
    %v2244 = vtanh.pop %v1403
    %v2245 = vtanh.pop %v1406
    %v2246 = vtanh.pop %v1408
    %v2247 = vtanh.pop %v1411
    %v2248 = vtanh.pop %v1413
    %v2249 = vtanh.pop %v1416
    %v2250 = vtanh.pop %v1418
    %v2251 = vtanh.pop %v1421
    %v2252 = vtanh.pop %v1423
    %v2253 = vtanh.pop %v1426
    %v2254 = vtanh.pop %v1428
    %v2255 = vtanh.pop %v1431
    %v2256 = vtanh.pop %v1433
    %v2257 = vtanh.pop %v1436
    %v2258 = vtanh.pop %v1438
    %v2259 = vtanh.pop %v1441
    %v2260 = vtanh.pop %v1443
    %v2261 = vtanh.pop %v1446
    %v2262 = vtanh.pop %v1448
    %v2263 = vtanh.pop %v1451
    %v2264 = vtanh.pop %v1453
    %v2265 = vtanh.pop %v1456
    %v2266 = vtanh.pop %v1458
    %v2267 = vtanh.pop %v1461
    %v2268 = vtanh.pop %v1463
    %v2269 = vtanh.pop %v1466
    %v2270 = vtanh.pop %v1468
    %v2271 = vtanh.pop %v1471
    %v2272 = vtanh.pop %v1473
    %v2273 = vtanh.pop %v1476
    %v2274 = vtanh.pop %v1478
    %v2275 = vtanh.pop %v1481
    %v2276 = vtanh.pop %v1483
    %v2277 = vtanh.pop %v1486
    %v2278 = vtanh.pop %v1488
    %v2279 = vtanh.pop %v1491
    %v2280 = vtanh.pop %v1493
    %v2281 = vtanh.pop %v1496
    %v2282 = vtanh.pop %v1498
    %v2283 = vtanh.pop %v1501
    %v2284 = vtanh.pop %v1503
    %v2285 = vtanh.pop %v1506
    %v2286 = vtanh.pop %v1508
    %v2287 = vtanh.pop %v1511
    %v2288 = vtanh.pop %v1513
    %v2289 = vtanh.pop %v1516
    %v2290 = vtanh.pop %v1518
    %v2291 = vtanh.pop %v1521
    %v2292 = vtanh.pop %v1523
    %v2293 = vtanh.pop %v1526
    %v2294 = vtanh.pop %v1528
    %v2295 = vtanh.pop %v1531
    %v2296 = vtanh.pop %v1533
    %v2297 = vtanh.pop %v1536
    %v2298 = vtanh.pop %v1538
    %v2299 = vtanh.pop %v1541
    %v2300 = vtanh.pop %v1543
    %v2301 = vtanh.pop %v1546
    %v2302 = vtanh.pop %v1548
    %v2303 = vtanh.pop %v1551
    %v2304 = vtanh.pop %v1553
    %v2305 = vtanh.pop %v1556
    %v2306 = vtanh.pop %v1558
    %v2307 = vtanh.pop %v1561
    %v2308 = vtanh.pop %v1563
    %v2309 = vtanh.pop %v1566
    %v2310 = vtanh.pop %v1568
    %v2311 = vtanh.pop %v1571
    %v2312 = vtanh.pop %v1573
    %v2313 = vtanh.pop %v1576
    %v2314 = vtanh.pop %v1578
    %v2315 = vtanh.pop %v1581
    %v2316 = vtanh.pop %v1583
    %v2317 = vtanh.pop %v1586
    %v2318 = vtanh.pop %v1588
    %v2319 = vtanh.pop %v1591
    %v2320 = vtanh.pop %v1593
    %v2321 = vtanh.pop %v1596
    %v2322 = vtanh.pop %v1598
    %v2323 = vtanh.pop %v1601
    %v2324 = vtanh.pop %v1603
    %v2325 = vtanh.pop %v1606
    %v2326 = vtanh.pop %v1608
    %v2327 = vtanh.pop %v1611
    %v2328 = vtanh.pop %v1613
    %v2329 = vtanh.pop %v1616
    %v2330 = vtanh.pop %v1618
    %v2331 = vtanh.pop %v1621
    %v2332 = vtanh.pop %v1623
    %v2333 = vtanh.pop %v1626
    %v2334 = vtanh.pop %v1628
    %v2335 = vtanh.pop %v1631
    %v2336 = vtanh.pop %v1633
    %v2337 = vtanh.pop %v1636
    %v2338 = vtanh.pop %v1638
    %v2339 = vtanh.pop %v1641
    %v2340 = vtanh.pop %v1643
    %v2341 = vtanh.pop %v1646
    %v2342 = vtanh.pop %v1648
    %v2343 = vtanh.pop %v1651
    %v2344 = vtanh.pop %v1653
    %v2345 = vtanh.pop %v1656
    %v2346 = vtanh.pop %v1658
    %v2347 = vtanh.pop %v1661
    %v2348 = vtanh.pop %v1663
    %v2349 = vtanh.pop %v1666
    %v2350 = vtanh.pop %v1668
    %v2351 = vtanh.pop %v1671
    %v2352 = vtanh.pop %v1673
    %v2353 = vtanh.pop %v1676
    %v2354 = vtanh.pop %v1678
    %v2355 = vtanh.pop %v1681
    %v2356 = vtanh.pop %v1683
    %v2357 = vtanh.pop %v1686
    %v2358 = vtanh.pop %v1688
    %v2359 = vtanh.pop %v1691
    %v2360 = vtanh.pop %v1693
    %v2361 = vtanh.pop %v1696
    %v2362 = vtanh.pop %v1698
    %v2363 = vtanh.pop %v1701
    %v2364 = vtanh.pop %v1703
    %v2365 = vtanh.pop %v1706
    %v2366 = vtanh.pop %v1708
    %v2367 = vtanh.pop %v1711
    %v2368 = vtanh.pop %v1713
    %v2369 = vtanh.pop %v1716
    %v2370 = vtanh.pop %v1718
    %v2371 = vtanh.pop %v1721
    %v2372 = vtanh.pop %v1723
    %v2373 = vtanh.pop %v1726
    %v2374 = vtanh.pop %v1728
    %v2375 = vtanh.pop %v1731
    %v2376 = vtanh.pop %v1733
    %v2377 = vtanh.pop %v1736
    %v2378 = vtanh.pop %v1738
    %v2379 = vtanh.pop %v1741
    %v2380 = vtanh.pop %v1743
    %v2381 = vtanh.pop %v1746
    %v2382 = vtanh.pop %v1748
    %v2383 = vtanh.pop %v1751
    %v2384 = vtanh.pop %v1753
    %v2385 = vtanh.pop %v1756
    %v2386 = vtanh.pop %v1758
    %v2387 = vtanh.pop %v1761
    %v2388 = vtanh.pop %v1763
    %v2389 = vtanh.pop %v1766
    %v2390 = vtanh.pop %v1768
    %v2391 = vtanh.pop %v1771
    %v2392 = vtanh.pop %v1773
    %v2393 = vtanh.pop %v1776
    %v2394 = vtanh.pop %v1778
    %v2395 = vtanh.pop %v1781
    %v2396 = vtanh.pop %v1783
    %v2397 = vtanh.pop %v1786
    %v2398 = vtanh.pop %v1788
    %v2399 = vtanh.pop %v1791
    %v2400 = vtanh.pop %v1793
    %v2401 = vtanh.pop %v1796
    %v2402 = vtanh.pop %v1798
    %v2403 = vtanh.pop %v1801
    %v2404 = vtanh.pop %v1803
    %v2405 = vtanh.pop %v1806
    %v2406 = vtanh.pop %v1808
    %v2407 = vtanh.pop %v1811
    %v2408 = vtanh.pop %v1813
    %v2409 = vtanh.pop %v1816
    %v2410 = vtanh.pop %v1818
    %v2411 = vtanh.pop %v1821
    %v2412 = vtanh.pop %v1823
    %v2413 = vtanh.pop %v1826
    %v2414 = vtanh.pop %v1828
    %v2415 = vtanh.pop %v1831
    %v2416 = vtanh.pop %v1833
    %v2417 = vtanh.pop %v1836
    %v2418 = vtanh.pop %v1838
    %v2419 = vtanh.pop %v1841
    %v2420 = vtanh.pop %v1843
    %v2421 = vtanh.pop %v1846
    %v2422 = vtanh.pop %v1848
    %v2423 = vtanh.pop %v1851
    %v2424 = vtanh.pop %v1853
    %v2425 = vtanh.pop %v1856
    %v2426 = vtanh.pop %v1858
    %v2427 = vtanh.pop %v1861
    %v2428 = vtanh.pop %v1863
    %v2429 = vtanh.pop %v1866
    %v2430 = vtanh.pop %v1868
    %v2431 = vtanh.pop %v1871
    %v2432 = vtanh.pop %v1873
    %v2433 = vtanh.pop %v1876
    %v2434 = vtanh.pop %v1878
    %v2435 = vtanh.pop %v1881
    %v2436 = vtanh.pop %v1883
    %v2437 = vtanh.pop %v1886
    %v2438 = vtanh.pop %v1888
    %v2439 = vtanh.pop %v1891
    %v2440 = vtanh.pop %v1893
    %v2441 = vtanh.pop %v1896
    %v2442 = vtanh.pop %v1898
    %v2443 = vtanh.pop %v1901
    %v2444 = vtanh.pop %v1903
    %v2445 = vtanh.pop %v1906
    %v2446 = vtanh.pop %v1908
    %v2447 = vtanh.pop %v1911
    %v2448 = vtanh.pop %v1913
    %v2449 = vtanh.pop %v1916
    %v2450 = vtanh.pop %v1918
    %v2451 = vtanh.pop %v1921
    %v2452 = vtanh.pop %v1923
    %v2453 = vtanh.pop %v1926
    %v2454 = vtanh.pop %v1928
    %v2455 = vtanh.pop %v1931
    %v2456 = vtanh.pop %v1933
    %v2457 = vtanh.pop %v1936
    %v2458 = vtanh.pop %v1938
    %v2459 = vtanh.pop %v1941
    %v2460 = vtanh.pop %v1943
    %v2461 = vtanh.pop %v1946
    %v2462 = vtanh.pop %v1948
    %v2463 = vtanh.pop %v1951
    %v2464 = vtanh.pop %v1953
    %v2465 = vtanh.pop %v1956
    %v2466 = vtanh.pop %v1958
    %v2467 = vtanh.pop %v1961
    %v2468 = vtanh.pop %v1963
    %v2469 = vtanh.pop %v1966
    %v2470 = vtanh.pop %v1968
    %v2471 = vtanh.pop %v1971
    %v2472 = vtanh.pop %v1973
    %v2473 = vtanh.pop %v1976
    %v2474 = vtanh.pop %v1978
    %v2475 = vtanh.pop %v1981
    %v2476 = vtanh.pop %v1983
    %v2477 = vtanh.pop %v1986
    %v2478 = vtanh.pop %v1988
    %v2479 = vtanh.pop %v1991
    %v2480 = vtanh.pop %v1993
    %v2481 = vtanh.pop %v1996
    %v2482 = vtanh.pop %v1998
    %v2483 = vtanh.pop %v2001
    %v2484 = vtanh.pop %v2003
    %v2485 = vtanh.pop %v2006
    %v2486 = vtanh.pop %v2008
    %v2487 = vtanh.pop %v2011
    %v2488 = vtanh.pop %v2013
    %v2489 = vtanh.pop %v2016
    %v2490 = vtanh.pop %v2018
    %v2491 = vtanh.pop %v2021
    %v2492 = vtanh.pop %v2023
    %v2493 = vtanh.pop %v2026
    %v2494 = vtanh.pop %v2028
    %v2495 = vtanh.pop %v2031
    %v2496 = vtanh.pop %v2033
    %v2497 = vtanh.pop %v2036
    %v2498 = vtanh.pop %v2038
    %v2499 = vtanh.pop %v2041
    %v2500 = vtanh.pop %v2043
    %v2501 = vtanh.pop %v2046
    %v2502 = vtanh.pop %v2048
    %v2503 = vtanh.pop %v2051
    %v2504 = vtanh.pop %v2053
    %v2505 = vtanh.pop %v2056
    %v2506 = vtanh.pop %v2058
    %v2507 = vtanh.pop %v2061
    %v2508 = vtanh.pop %v2063
    %v2509 = vtanh.pop %v2066
    %v2510 = vtanh.pop %v2068
    %v2511 = vtanh.pop %v2071
    %v2512 = vtanh.pop %v2073
    %v2513 = vtanh.pop %v2076
    %v2514 = vtanh.pop %v2078
    %v2515 = vtanh.pop %v2081
    %v2516 = vtanh.pop %v2083
    %v2517 = vtanh.pop %v2086
    %v2518 = vtanh.pop %v2088
    %v2519 = vtanh.pop %v2091
    %v2520 = vtanh.pop %v2093
    %v2521 = vtanh.pop %v2096
    %v2522 = vtanh.pop %v2098
    %v2523 = vtanh.pop %v2101
    %v2524 = vtanh.pop %v2103
    %v2525 = vtanh.pop %v2106
    %v2526 = vtanh.pop %v2108
    %v2527 = vtanh.pop %v2111
    %v2528 = vtanh.pop %v2113
    %v2529 = vtanh.pop %v2116
    %v2530 = vtanh.pop %v2118
    %v2531 = vtanh.pop %v2121
    %v2532 = vtanh.pop %v2123
    %v2533 = vtanh.pop %v2126
    %v2534 = vtanh.pop %v2128
    %v2535 = vtanh.pop %v2131
    %v2536 = vtanh.pop %v2133
    %v2537 = vtanh.pop %v2136
    %v2538 = vtanh.pop %v2138
    %v2539 = vtanh.pop %v2141
    %v2540 = vtanh.pop %v2143
    %v2541 = vtanh.pop %v2146
    %v2542 = vtanh.pop %v2148
    %v2543 = vtanh.pop %v2151
    %v2544 = vtanh.pop %v2153
    %v2545 = vtanh.pop %v2156
    %v2546 = vtanh.pop %v2158
    %v2547 = vtanh.pop %v2161
    %v2548 = vtanh.pop %v2163
    %v2549 = vld [vmem:[%s3] sm:$0x1]
    %v2551 = vperm.slane %v2549, 0
    %v2553 = vmul.f32 %v2165, %v2551
    %v2554 = vmul.f32 %v2166, %v2551
    %v2555 = vmul.f32 %v2167, %v2551
    %v2556 = vmul.f32 %v2168, %v2551
    %v2557 = vmul.f32 %v2169, %v2551
    %v2558 = vmul.f32 %v2170, %v2551
    %v2559 = vmul.f32 %v2171, %v2551
    %v2560 = vmul.f32 %v2172, %v2551
    %v2561 = vmul.f32 %v2173, %v2551
    %v2562 = vmul.f32 %v2174, %v2551
    %v2563 = vmul.f32 %v2175, %v2551
    %v2564 = vmul.f32 %v2176, %v2551
    %v2565 = vmul.f32 %v2177, %v2551
    %v2566 = vmul.f32 %v2178, %v2551
    %v2567 = vmul.f32 %v2179, %v2551
    %v2568 = vmul.f32 %v2180, %v2551
    %v2569 = vmul.f32 %v2181, %v2551
    %v2570 = vmul.f32 %v2182, %v2551
    %v2571 = vmul.f32 %v2183, %v2551
    %v2572 = vmul.f32 %v2184, %v2551
    %v2573 = vmul.f32 %v2185, %v2551
    %v2574 = vmul.f32 %v2186, %v2551
    %v2575 = vmul.f32 %v2187, %v2551
    %v2576 = vmul.f32 %v2188, %v2551
    %v2577 = vmul.f32 %v2189, %v2551
    %v2578 = vmul.f32 %v2190, %v2551
    %v2579 = vmul.f32 %v2191, %v2551
    %v2580 = vmul.f32 %v2192, %v2551
    %v2581 = vmul.f32 %v2193, %v2551
    %v2582 = vmul.f32 %v2194, %v2551
    %v2583 = vmul.f32 %v2195, %v2551
    %v2584 = vmul.f32 %v2196, %v2551
    %v2585 = vmul.f32 %v2197, %v2551
    %v2586 = vmul.f32 %v2198, %v2551
    %v2587 = vmul.f32 %v2199, %v2551
    %v2588 = vmul.f32 %v2200, %v2551
    %v2589 = vmul.f32 %v2201, %v2551
    %v2590 = vmul.f32 %v2202, %v2551
    %v2591 = vmul.f32 %v2203, %v2551
    %v2592 = vmul.f32 %v2204, %v2551
    %v2593 = vmul.f32 %v2205, %v2551
    %v2594 = vmul.f32 %v2206, %v2551
    %v2595 = vmul.f32 %v2207, %v2551
    %v2596 = vmul.f32 %v2208, %v2551
    %v2597 = vmul.f32 %v2209, %v2551
    %v2598 = vmul.f32 %v2210, %v2551
    %v2599 = vmul.f32 %v2211, %v2551
    %v2600 = vmul.f32 %v2212, %v2551
    %v2601 = vmul.f32 %v2213, %v2551
    %v2602 = vmul.f32 %v2214, %v2551
    %v2603 = vmul.f32 %v2215, %v2551
    %v2604 = vmul.f32 %v2216, %v2551
    %v2605 = vmul.f32 %v2217, %v2551
    %v2606 = vmul.f32 %v2218, %v2551
    %v2607 = vmul.f32 %v2219, %v2551
    %v2608 = vmul.f32 %v2220, %v2551
    %v2609 = vmul.f32 %v2221, %v2551
    %v2610 = vmul.f32 %v2222, %v2551
    %v2611 = vmul.f32 %v2223, %v2551
    %v2612 = vmul.f32 %v2224, %v2551
    %v2613 = vmul.f32 %v2225, %v2551
    %v2614 = vmul.f32 %v2226, %v2551
    %v2615 = vmul.f32 %v2227, %v2551
    %v2616 = vmul.f32 %v2228, %v2551
    %v2617 = vmul.f32 %v2229, %v2551
    %v2618 = vmul.f32 %v2230, %v2551
    %v2619 = vmul.f32 %v2231, %v2551
    %v2620 = vmul.f32 %v2232, %v2551
    %v2621 = vmul.f32 %v2233, %v2551
    %v2622 = vmul.f32 %v2234, %v2551
    %v2623 = vmul.f32 %v2235, %v2551
    %v2624 = vmul.f32 %v2236, %v2551
    %v2625 = vmul.f32 %v2237, %v2551
    %v2626 = vmul.f32 %v2238, %v2551
    %v2627 = vmul.f32 %v2239, %v2551
    %v2628 = vmul.f32 %v2240, %v2551
    %v2629 = vmul.f32 %v2241, %v2551
    %v2630 = vmul.f32 %v2242, %v2551
    %v2631 = vmul.f32 %v2243, %v2551
    %v2632 = vmul.f32 %v2244, %v2551
    %v2633 = vmul.f32 %v2245, %v2551
    %v2634 = vmul.f32 %v2246, %v2551
    %v2635 = vmul.f32 %v2247, %v2551
    %v2636 = vmul.f32 %v2248, %v2551
    %v2637 = vmul.f32 %v2249, %v2551
    %v2638 = vmul.f32 %v2250, %v2551
    %v2639 = vmul.f32 %v2251, %v2551
    %v2640 = vmul.f32 %v2252, %v2551
    %v2641 = vmul.f32 %v2253, %v2551
    %v2642 = vmul.f32 %v2254, %v2551
    %v2643 = vmul.f32 %v2255, %v2551
    %v2644 = vmul.f32 %v2256, %v2551
    %v2645 = vmul.f32 %v2257, %v2551
    %v2646 = vmul.f32 %v2258, %v2551
    %v2647 = vmul.f32 %v2259, %v2551
    %v2648 = vmul.f32 %v2260, %v2551
    %v2649 = vmul.f32 %v2261, %v2551
    %v2650 = vmul.f32 %v2262, %v2551
    %v2651 = vmul.f32 %v2263, %v2551
    %v2652 = vmul.f32 %v2264, %v2551
    %v2653 = vmul.f32 %v2265, %v2551
    %v2654 = vmul.f32 %v2266, %v2551
    %v2655 = vmul.f32 %v2267, %v2551
    %v2656 = vmul.f32 %v2268, %v2551
    %v2657 = vmul.f32 %v2269, %v2551
    %v2658 = vmul.f32 %v2270, %v2551
    %v2659 = vmul.f32 %v2271, %v2551
    %v2660 = vmul.f32 %v2272, %v2551
    %v2661 = vmul.f32 %v2273, %v2551
    %v2662 = vmul.f32 %v2274, %v2551
    %v2663 = vmul.f32 %v2275, %v2551
    %v2664 = vmul.f32 %v2276, %v2551
    %v2665 = vmul.f32 %v2277, %v2551
    %v2666 = vmul.f32 %v2278, %v2551
    %v2667 = vmul.f32 %v2279, %v2551
    %v2668 = vmul.f32 %v2280, %v2551
    %v2669 = vmul.f32 %v2281, %v2551
    %v2670 = vmul.f32 %v2282, %v2551
    %v2671 = vmul.f32 %v2283, %v2551
    %v2672 = vmul.f32 %v2284, %v2551
    %v2673 = vmul.f32 %v2285, %v2551
    %v2674 = vmul.f32 %v2286, %v2551
    %v2675 = vmul.f32 %v2287, %v2551
    %v2676 = vmul.f32 %v2288, %v2551
    %v2677 = vmul.f32 %v2289, %v2551
    %v2678 = vmul.f32 %v2290, %v2551
    %v2679 = vmul.f32 %v2291, %v2551
    %v2680 = vmul.f32 %v2292, %v2551
    %v2681 = vmul.f32 %v2293, %v2551
    %v2682 = vmul.f32 %v2294, %v2551
    %v2683 = vmul.f32 %v2295, %v2551
    %v2684 = vmul.f32 %v2296, %v2551
    %v2685 = vmul.f32 %v2297, %v2551
    %v2686 = vmul.f32 %v2298, %v2551
    %v2687 = vmul.f32 %v2299, %v2551
    %v2688 = vmul.f32 %v2300, %v2551
    %v2689 = vmul.f32 %v2301, %v2551
    %v2690 = vmul.f32 %v2302, %v2551
    %v2691 = vmul.f32 %v2303, %v2551
    %v2692 = vmul.f32 %v2304, %v2551
    %v2693 = vmul.f32 %v2305, %v2551
    %v2694 = vmul.f32 %v2306, %v2551
    %v2695 = vmul.f32 %v2307, %v2551
    %v2696 = vmul.f32 %v2308, %v2551
    %v2697 = vmul.f32 %v2309, %v2551
    %v2698 = vmul.f32 %v2310, %v2551
    %v2699 = vmul.f32 %v2311, %v2551
    %v2700 = vmul.f32 %v2312, %v2551
    %v2701 = vmul.f32 %v2313, %v2551
    %v2702 = vmul.f32 %v2314, %v2551
    %v2703 = vmul.f32 %v2315, %v2551
    %v2704 = vmul.f32 %v2316, %v2551
    %v2705 = vmul.f32 %v2317, %v2551
    %v2706 = vmul.f32 %v2318, %v2551
    %v2707 = vmul.f32 %v2319, %v2551
    %v2708 = vmul.f32 %v2320, %v2551
    %v2709 = vmul.f32 %v2321, %v2551
    %v2710 = vmul.f32 %v2322, %v2551
    %v2711 = vmul.f32 %v2323, %v2551
    %v2712 = vmul.f32 %v2324, %v2551
    %v2713 = vmul.f32 %v2325, %v2551
    %v2714 = vmul.f32 %v2326, %v2551
    %v2715 = vmul.f32 %v2327, %v2551
    %v2716 = vmul.f32 %v2328, %v2551
    %v2717 = vmul.f32 %v2329, %v2551
    %v2718 = vmul.f32 %v2330, %v2551
    %v2719 = vmul.f32 %v2331, %v2551
    %v2720 = vmul.f32 %v2332, %v2551
    %v2721 = vmul.f32 %v2333, %v2551
    %v2722 = vmul.f32 %v2334, %v2551
    %v2723 = vmul.f32 %v2335, %v2551
    %v2724 = vmul.f32 %v2336, %v2551
    %v2725 = vmul.f32 %v2337, %v2551
    %v2726 = vmul.f32 %v2338, %v2551
    %v2727 = vmul.f32 %v2339, %v2551
    %v2728 = vmul.f32 %v2340, %v2551
    %v2729 = vmul.f32 %v2341, %v2551
    %v2730 = vmul.f32 %v2342, %v2551
    %v2731 = vmul.f32 %v2343, %v2551
    %v2732 = vmul.f32 %v2344, %v2551
    %v2733 = vmul.f32 %v2345, %v2551
    %v2734 = vmul.f32 %v2346, %v2551
    %v2735 = vmul.f32 %v2347, %v2551
    %v2736 = vmul.f32 %v2348, %v2551
    %v2737 = vmul.f32 %v2349, %v2551
    %v2738 = vmul.f32 %v2350, %v2551
    %v2739 = vmul.f32 %v2351, %v2551
    %v2740 = vmul.f32 %v2352, %v2551
    %v2741 = vmul.f32 %v2353, %v2551
    %v2742 = vmul.f32 %v2354, %v2551
    %v2743 = vmul.f32 %v2355, %v2551
    %v2744 = vmul.f32 %v2356, %v2551
    %v2745 = vmul.f32 %v2357, %v2551
    %v2746 = vmul.f32 %v2358, %v2551
    %v2747 = vmul.f32 %v2359, %v2551
    %v2748 = vmul.f32 %v2360, %v2551
    %v2749 = vmul.f32 %v2361, %v2551
    %v2750 = vmul.f32 %v2362, %v2551
    %v2751 = vmul.f32 %v2363, %v2551
    %v2752 = vmul.f32 %v2364, %v2551
    %v2753 = vmul.f32 %v2365, %v2551
    %v2754 = vmul.f32 %v2366, %v2551
    %v2755 = vmul.f32 %v2367, %v2551
    %v2756 = vmul.f32 %v2368, %v2551
    %v2757 = vmul.f32 %v2369, %v2551
    %v2758 = vmul.f32 %v2370, %v2551
    %v2759 = vmul.f32 %v2371, %v2551
    %v2760 = vmul.f32 %v2372, %v2551
    %v2761 = vmul.f32 %v2373, %v2551
    %v2762 = vmul.f32 %v2374, %v2551
    %v2763 = vmul.f32 %v2375, %v2551
    %v2764 = vmul.f32 %v2376, %v2551
    %v2765 = vmul.f32 %v2377, %v2551
    %v2766 = vmul.f32 %v2378, %v2551
    %v2767 = vmul.f32 %v2379, %v2551
    %v2768 = vmul.f32 %v2380, %v2551
    %v2769 = vmul.f32 %v2381, %v2551
    %v2770 = vmul.f32 %v2382, %v2551
    %v2771 = vmul.f32 %v2383, %v2551
    %v2772 = vmul.f32 %v2384, %v2551
    %v2773 = vmul.f32 %v2385, %v2551
    %v2774 = vmul.f32 %v2386, %v2551
    %v2775 = vmul.f32 %v2387, %v2551
    %v2776 = vmul.f32 %v2388, %v2551
    %v2777 = vmul.f32 %v2389, %v2551
    %v2778 = vmul.f32 %v2390, %v2551
    %v2779 = vmul.f32 %v2391, %v2551
    %v2780 = vmul.f32 %v2392, %v2551
    %v2781 = vmul.f32 %v2393, %v2551
    %v2782 = vmul.f32 %v2394, %v2551
    %v2783 = vmul.f32 %v2395, %v2551
    %v2784 = vmul.f32 %v2396, %v2551
    %v2785 = vmul.f32 %v2397, %v2551
    %v2786 = vmul.f32 %v2398, %v2551
    %v2787 = vmul.f32 %v2399, %v2551
    %v2788 = vmul.f32 %v2400, %v2551
    %v2789 = vmul.f32 %v2401, %v2551
    %v2790 = vmul.f32 %v2402, %v2551
    %v2791 = vmul.f32 %v2403, %v2551
    %v2792 = vmul.f32 %v2404, %v2551
    %v2793 = vmul.f32 %v2405, %v2551
    %v2794 = vmul.f32 %v2406, %v2551
    %v2795 = vmul.f32 %v2407, %v2551
    %v2796 = vmul.f32 %v2408, %v2551
    %v2797 = vmul.f32 %v2409, %v2551
    %v2798 = vmul.f32 %v2410, %v2551
    %v2799 = vmul.f32 %v2411, %v2551
    %v2800 = vmul.f32 %v2412, %v2551
    %v2801 = vmul.f32 %v2413, %v2551
    %v2802 = vmul.f32 %v2414, %v2551
    %v2803 = vmul.f32 %v2415, %v2551
    %v2804 = vmul.f32 %v2416, %v2551
    %v2805 = vmul.f32 %v2417, %v2551
    %v2806 = vmul.f32 %v2418, %v2551
    %v2807 = vmul.f32 %v2419, %v2551
    %v2808 = vmul.f32 %v2420, %v2551
    %v2809 = vmul.f32 %v2421, %v2551
    %v2810 = vmul.f32 %v2422, %v2551
    %v2811 = vmul.f32 %v2423, %v2551
    %v2812 = vmul.f32 %v2424, %v2551
    %v2813 = vmul.f32 %v2425, %v2551
    %v2814 = vmul.f32 %v2426, %v2551
    %v2815 = vmul.f32 %v2427, %v2551
    %v2816 = vmul.f32 %v2428, %v2551
    %v2817 = vmul.f32 %v2429, %v2551
    %v2818 = vmul.f32 %v2430, %v2551
    %v2819 = vmul.f32 %v2431, %v2551
    %v2820 = vmul.f32 %v2432, %v2551
    %v2821 = vmul.f32 %v2433, %v2551
    %v2822 = vmul.f32 %v2434, %v2551
    %v2823 = vmul.f32 %v2435, %v2551
    %v2824 = vmul.f32 %v2436, %v2551
    %v2825 = vmul.f32 %v2437, %v2551
    %v2826 = vmul.f32 %v2438, %v2551
    %v2827 = vmul.f32 %v2439, %v2551
    %v2828 = vmul.f32 %v2440, %v2551
    %v2829 = vmul.f32 %v2441, %v2551
    %v2830 = vmul.f32 %v2442, %v2551
    %v2831 = vmul.f32 %v2443, %v2551
    %v2832 = vmul.f32 %v2444, %v2551
    %v2833 = vmul.f32 %v2445, %v2551
    %v2834 = vmul.f32 %v2446, %v2551
    %v2835 = vmul.f32 %v2447, %v2551
    %v2836 = vmul.f32 %v2448, %v2551
    %v2837 = vmul.f32 %v2449, %v2551
    %v2838 = vmul.f32 %v2450, %v2551
    %v2839 = vmul.f32 %v2451, %v2551
    %v2840 = vmul.f32 %v2452, %v2551
    %v2841 = vmul.f32 %v2453, %v2551
    %v2842 = vmul.f32 %v2454, %v2551
    %v2843 = vmul.f32 %v2455, %v2551
    %v2844 = vmul.f32 %v2456, %v2551
    %v2845 = vmul.f32 %v2457, %v2551
    %v2846 = vmul.f32 %v2458, %v2551
    %v2847 = vmul.f32 %v2459, %v2551
    %v2848 = vmul.f32 %v2460, %v2551
    %v2849 = vmul.f32 %v2461, %v2551
    %v2850 = vmul.f32 %v2462, %v2551
    %v2851 = vmul.f32 %v2463, %v2551
    %v2852 = vmul.f32 %v2464, %v2551
    %v2853 = vmul.f32 %v2465, %v2551
    %v2854 = vmul.f32 %v2466, %v2551
    %v2855 = vmul.f32 %v2467, %v2551
    %v2856 = vmul.f32 %v2468, %v2551
    %v2857 = vmul.f32 %v2469, %v2551
    %v2858 = vmul.f32 %v2470, %v2551
    %v2859 = vmul.f32 %v2471, %v2551
    %v2860 = vmul.f32 %v2472, %v2551
    %v2861 = vmul.f32 %v2473, %v2551
    %v2862 = vmul.f32 %v2474, %v2551
    %v2863 = vmul.f32 %v2475, %v2551
    %v2864 = vmul.f32 %v2476, %v2551
    %v2865 = vmul.f32 %v2477, %v2551
    %v2866 = vmul.f32 %v2478, %v2551
    %v2867 = vmul.f32 %v2479, %v2551
    %v2868 = vmul.f32 %v2480, %v2551
    %v2869 = vmul.f32 %v2481, %v2551
    %v2870 = vmul.f32 %v2482, %v2551
    %v2871 = vmul.f32 %v2483, %v2551
    %v2872 = vmul.f32 %v2484, %v2551
    %v2873 = vmul.f32 %v2485, %v2551
    %v2874 = vmul.f32 %v2486, %v2551
    %v2875 = vmul.f32 %v2487, %v2551
    %v2876 = vmul.f32 %v2488, %v2551
    %v2877 = vmul.f32 %v2489, %v2551
    %v2878 = vmul.f32 %v2490, %v2551
    %v2879 = vmul.f32 %v2491, %v2551
    %v2880 = vmul.f32 %v2492, %v2551
    %v2881 = vmul.f32 %v2493, %v2551
    %v2882 = vmul.f32 %v2494, %v2551
    %v2883 = vmul.f32 %v2495, %v2551
    %v2884 = vmul.f32 %v2496, %v2551
    %v2885 = vmul.f32 %v2497, %v2551
    %v2886 = vmul.f32 %v2498, %v2551
    %v2887 = vmul.f32 %v2499, %v2551
    %v2888 = vmul.f32 %v2500, %v2551
    %v2889 = vmul.f32 %v2501, %v2551
    %v2890 = vmul.f32 %v2502, %v2551
    %v2891 = vmul.f32 %v2503, %v2551
    %v2892 = vmul.f32 %v2504, %v2551
    %v2893 = vmul.f32 %v2505, %v2551
    %v2894 = vmul.f32 %v2506, %v2551
    %v2895 = vmul.f32 %v2507, %v2551
    %v2896 = vmul.f32 %v2508, %v2551
    %v2897 = vmul.f32 %v2509, %v2551
    %v2898 = vmul.f32 %v2510, %v2551
    %v2899 = vmul.f32 %v2511, %v2551
    %v2900 = vmul.f32 %v2512, %v2551
    %v2901 = vmul.f32 %v2513, %v2551
    %v2902 = vmul.f32 %v2514, %v2551
    %v2903 = vmul.f32 %v2515, %v2551
    %v2904 = vmul.f32 %v2516, %v2551
    %v2905 = vmul.f32 %v2517, %v2551
    %v2906 = vmul.f32 %v2518, %v2551
    %v2907 = vmul.f32 %v2519, %v2551
    %v2908 = vmul.f32 %v2520, %v2551
    %v2909 = vmul.f32 %v2521, %v2551
    %v2910 = vmul.f32 %v2522, %v2551
    %v2911 = vmul.f32 %v2523, %v2551
    %v2912 = vmul.f32 %v2524, %v2551
    %v2913 = vmul.f32 %v2525, %v2551
    %v2914 = vmul.f32 %v2526, %v2551
    %v2915 = vmul.f32 %v2527, %v2551
    %v2916 = vmul.f32 %v2528, %v2551
    %v2917 = vmul.f32 %v2529, %v2551
    %v2918 = vmul.f32 %v2530, %v2551
    %v2919 = vmul.f32 %v2531, %v2551
    %v2920 = vmul.f32 %v2532, %v2551
    %v2921 = vmul.f32 %v2533, %v2551
    %v2922 = vmul.f32 %v2534, %v2551
    %v2923 = vmul.f32 %v2535, %v2551
    %v2924 = vmul.f32 %v2536, %v2551
    %v2925 = vmul.f32 %v2537, %v2551
    %v2926 = vmul.f32 %v2538, %v2551
    %v2927 = vmul.f32 %v2539, %v2551
    %v2928 = vmul.f32 %v2540, %v2551
    %v2929 = vmul.f32 %v2541, %v2551
    %v2930 = vmul.f32 %v2542, %v2551
    %v2931 = vmul.f32 %v2543, %v2551
    %v2932 = vmul.f32 %v2544, %v2551
    %v2933 = vmul.f32 %v2545, %v2551
    %v2934 = vmul.f32 %v2546, %v2551
    %v2935 = vmul.f32 %v2547, %v2551
    %v2936 = vmul.f32 %v2548, %v2551
    %vm2937 = vcmask 523264
    %v2938 = vsel %vm2937, %v2553, 0.0
    %2939 = vadd.xlane.f32.xlu0 %v2938
    %v2940 = vpop.xlane.xlu0 %2939
    %v2941 = vsel %vm2937, %v2554, 0.0
    %2942 = vadd.xlane.f32.xlu0 %v2941
    %v2943 = vpop.xlane.xlu0 %2942
    %v2944 = vsel %vm2937, %v2555, 0.0
    %2945 = vadd.xlane.f32.xlu0 %v2944
    %v2946 = vpop.xlane.xlu0 %2945
    %v2947 = vsel %vm2937, %v2556, 0.0
    %2948 = vadd.xlane.f32.xlu0 %v2947
    %v2949 = vpop.xlane.xlu0 %2948
    %v2950 = vsel %vm2937, %v2557, 0.0
    %2951 = vadd.xlane.f32.xlu0 %v2950
    %v2952 = vpop.xlane.xlu0 %2951
    %v2953 = vsel %vm2937, %v2558, 0.0
    %2954 = vadd.xlane.f32.xlu0 %v2953
    %v2955 = vpop.xlane.xlu0 %2954
    %v2956 = vsel %vm2937, %v2559, 0.0
    %2957 = vadd.xlane.f32.xlu0 %v2956
    %v2958 = vpop.xlane.xlu0 %2957
    %v2959 = vsel %vm2937, %v2560, 0.0
    %2960 = vadd.xlane.f32.xlu0 %v2959
    %v2961 = vpop.xlane.xlu0 %2960
    %v2962 = vsel %vm2937, %v2561, 0.0
    %2963 = vadd.xlane.f32.xlu0 %v2962
    %v2964 = vpop.xlane.xlu0 %2963
    %v2965 = vsel %vm2937, %v2562, 0.0
    %2966 = vadd.xlane.f32.xlu0 %v2965
    %v2967 = vpop.xlane.xlu0 %2966
    %v2968 = vsel %vm2937, %v2563, 0.0
    %2969 = vadd.xlane.f32.xlu0 %v2968
    %v2970 = vpop.xlane.xlu0 %2969
    %v2971 = vsel %vm2937, %v2564, 0.0
    %2972 = vadd.xlane.f32.xlu0 %v2971
    %v2973 = vpop.xlane.xlu0 %2972
    %v2974 = vsel %vm2937, %v2565, 0.0
    %2975 = vadd.xlane.f32.xlu0 %v2974
    %v2976 = vpop.xlane.xlu0 %2975
    %v2977 = vsel %vm2937, %v2566, 0.0
    %2978 = vadd.xlane.f32.xlu0 %v2977
    %v2979 = vpop.xlane.xlu0 %2978
    %v2980 = vsel %vm2937, %v2567, 0.0
    %2981 = vadd.xlane.f32.xlu0 %v2980
    %v2982 = vpop.xlane.xlu0 %2981
    %v2983 = vsel %vm2937, %v2568, 0.0
    %2984 = vadd.xlane.f32.xlu0 %v2983
    %v2985 = vpop.xlane.xlu0 %2984
    %v2986 = vsel %vm2937, %v2569, 0.0
    %2987 = vadd.xlane.f32.xlu0 %v2986
    %v2988 = vpop.xlane.xlu0 %2987
    %v2989 = vsel %vm2937, %v2570, 0.0
    %2990 = vadd.xlane.f32.xlu0 %v2989
    %v2991 = vpop.xlane.xlu0 %2990
    %v2992 = vsel %vm2937, %v2571, 0.0
    %2993 = vadd.xlane.f32.xlu0 %v2992
    %v2994 = vpop.xlane.xlu0 %2993
    %v2995 = vsel %vm2937, %v2572, 0.0
    %2996 = vadd.xlane.f32.xlu0 %v2995
    %v2997 = vpop.xlane.xlu0 %2996
    %v2998 = vsel %vm2937, %v2573, 0.0
    %2999 = vadd.xlane.f32.xlu0 %v2998
    %v3000 = vpop.xlane.xlu0 %2999
    %v3001 = vsel %vm2937, %v2574, 0.0
    %3002 = vadd.xlane.f32.xlu0 %v3001
    %v3003 = vpop.xlane.xlu0 %3002
    %v3004 = vsel %vm2937, %v2575, 0.0
    %3005 = vadd.xlane.f32.xlu0 %v3004
    %v3006 = vpop.xlane.xlu0 %3005
    %v3007 = vsel %vm2937, %v2576, 0.0
    %3008 = vadd.xlane.f32.xlu0 %v3007
    %v3009 = vpop.xlane.xlu0 %3008
    %v3010 = vsel %vm2937, %v2577, 0.0
    %3011 = vadd.xlane.f32.xlu0 %v3010
    %v3012 = vpop.xlane.xlu0 %3011
    %v3013 = vsel %vm2937, %v2578, 0.0
    %3014 = vadd.xlane.f32.xlu0 %v3013
    %v3015 = vpop.xlane.xlu0 %3014
    %v3016 = vsel %vm2937, %v2579, 0.0
    %3017 = vadd.xlane.f32.xlu0 %v3016
    %v3018 = vpop.xlane.xlu0 %3017
    %v3019 = vsel %vm2937, %v2580, 0.0
    %3020 = vadd.xlane.f32.xlu0 %v3019
    %v3021 = vpop.xlane.xlu0 %3020
    %v3022 = vsel %vm2937, %v2581, 0.0
    %3023 = vadd.xlane.f32.xlu0 %v3022
    %v3024 = vpop.xlane.xlu0 %3023
    %v3025 = vsel %vm2937, %v2582, 0.0
    %3026 = vadd.xlane.f32.xlu0 %v3025
    %v3027 = vpop.xlane.xlu0 %3026
    %v3028 = vsel %vm2937, %v2583, 0.0
    %3029 = vadd.xlane.f32.xlu0 %v3028
    %v3030 = vpop.xlane.xlu0 %3029
    %v3031 = vsel %vm2937, %v2584, 0.0
    %3032 = vadd.xlane.f32.xlu0 %v3031
    %v3033 = vpop.xlane.xlu0 %3032
    %v3034 = vsel %vm2937, %v2585, 0.0
    %3035 = vadd.xlane.f32.xlu0 %v3034
    %v3036 = vpop.xlane.xlu0 %3035
    %v3037 = vsel %vm2937, %v2586, 0.0
    %3038 = vadd.xlane.f32.xlu0 %v3037
    %v3039 = vpop.xlane.xlu0 %3038
    %v3040 = vsel %vm2937, %v2587, 0.0
    %3041 = vadd.xlane.f32.xlu0 %v3040
    %v3042 = vpop.xlane.xlu0 %3041
    %v3043 = vsel %vm2937, %v2588, 0.0
    %3044 = vadd.xlane.f32.xlu0 %v3043
    %v3045 = vpop.xlane.xlu0 %3044
    %v3046 = vsel %vm2937, %v2589, 0.0
    %3047 = vadd.xlane.f32.xlu0 %v3046
    %v3048 = vpop.xlane.xlu0 %3047
    %v3049 = vsel %vm2937, %v2590, 0.0
    %3050 = vadd.xlane.f32.xlu0 %v3049
    %v3051 = vpop.xlane.xlu0 %3050
    %v3052 = vsel %vm2937, %v2591, 0.0
    %3053 = vadd.xlane.f32.xlu0 %v3052
    %v3054 = vpop.xlane.xlu0 %3053
    %v3055 = vsel %vm2937, %v2592, 0.0
    %3056 = vadd.xlane.f32.xlu0 %v3055
    %v3057 = vpop.xlane.xlu0 %3056
    %v3058 = vsel %vm2937, %v2593, 0.0
    %3059 = vadd.xlane.f32.xlu0 %v3058
    %v3060 = vpop.xlane.xlu0 %3059
    %v3061 = vsel %vm2937, %v2594, 0.0
    %3062 = vadd.xlane.f32.xlu0 %v3061
    %v3063 = vpop.xlane.xlu0 %3062
    %v3064 = vsel %vm2937, %v2595, 0.0
    %3065 = vadd.xlane.f32.xlu0 %v3064
    %v3066 = vpop.xlane.xlu0 %3065
    %v3067 = vsel %vm2937, %v2596, 0.0
    %3068 = vadd.xlane.f32.xlu0 %v3067
    %v3069 = vpop.xlane.xlu0 %3068
    %v3070 = vsel %vm2937, %v2597, 0.0
    %3071 = vadd.xlane.f32.xlu0 %v3070
    %v3072 = vpop.xlane.xlu0 %3071
    %v3073 = vsel %vm2937, %v2598, 0.0
    %3074 = vadd.xlane.f32.xlu0 %v3073
    %v3075 = vpop.xlane.xlu0 %3074
    %v3076 = vsel %vm2937, %v2599, 0.0
    %3077 = vadd.xlane.f32.xlu0 %v3076
    %v3078 = vpop.xlane.xlu0 %3077
    %v3079 = vsel %vm2937, %v2600, 0.0
    %3080 = vadd.xlane.f32.xlu0 %v3079
    %v3081 = vpop.xlane.xlu0 %3080
    %v3082 = vsel %vm2937, %v2601, 0.0
    %3083 = vadd.xlane.f32.xlu0 %v3082
    %v3084 = vpop.xlane.xlu0 %3083
    %v3085 = vsel %vm2937, %v2602, 0.0
    %3086 = vadd.xlane.f32.xlu0 %v3085
    %v3087 = vpop.xlane.xlu0 %3086
    %v3088 = vsel %vm2937, %v2603, 0.0
    %3089 = vadd.xlane.f32.xlu0 %v3088
    %v3090 = vpop.xlane.xlu0 %3089
    %v3091 = vsel %vm2937, %v2604, 0.0
    %3092 = vadd.xlane.f32.xlu0 %v3091
    %v3093 = vpop.xlane.xlu0 %3092
    %v3094 = vsel %vm2937, %v2605, 0.0
    %3095 = vadd.xlane.f32.xlu0 %v3094
    %v3096 = vpop.xlane.xlu0 %3095
    %v3097 = vsel %vm2937, %v2606, 0.0
    %3098 = vadd.xlane.f32.xlu0 %v3097
    %v3099 = vpop.xlane.xlu0 %3098
    %v3100 = vsel %vm2937, %v2607, 0.0
    %3101 = vadd.xlane.f32.xlu0 %v3100
    %v3102 = vpop.xlane.xlu0 %3101
    %v3103 = vsel %vm2937, %v2608, 0.0
    %3104 = vadd.xlane.f32.xlu0 %v3103
    %v3105 = vpop.xlane.xlu0 %3104
    %v3106 = vsel %vm2937, %v2609, 0.0
    %3107 = vadd.xlane.f32.xlu0 %v3106
    %v3108 = vpop.xlane.xlu0 %3107
    %v3109 = vsel %vm2937, %v2610, 0.0
    %3110 = vadd.xlane.f32.xlu0 %v3109
    %v3111 = vpop.xlane.xlu0 %3110
    %v3112 = vsel %vm2937, %v2611, 0.0
    %3113 = vadd.xlane.f32.xlu0 %v3112
    %v3114 = vpop.xlane.xlu0 %3113
    %v3115 = vsel %vm2937, %v2612, 0.0
    %3116 = vadd.xlane.f32.xlu0 %v3115
    %v3117 = vpop.xlane.xlu0 %3116
    %v3118 = vsel %vm2937, %v2613, 0.0
    %3119 = vadd.xlane.f32.xlu0 %v3118
    %v3120 = vpop.xlane.xlu0 %3119
    %v3121 = vsel %vm2937, %v2614, 0.0
    %3122 = vadd.xlane.f32.xlu0 %v3121
    %v3123 = vpop.xlane.xlu0 %3122
    %v3124 = vsel %vm2937, %v2615, 0.0
    %3125 = vadd.xlane.f32.xlu0 %v3124
    %v3126 = vpop.xlane.xlu0 %3125
    %v3127 = vsel %vm2937, %v2616, 0.0
    %3128 = vadd.xlane.f32.xlu0 %v3127
    %v3129 = vpop.xlane.xlu0 %3128
    %v3130 = vsel %vm2937, %v2617, 0.0
    %3131 = vadd.xlane.f32.xlu0 %v3130
    %v3132 = vpop.xlane.xlu0 %3131
    %v3133 = vsel %vm2937, %v2618, 0.0
    %3134 = vadd.xlane.f32.xlu0 %v3133
    %v3135 = vpop.xlane.xlu0 %3134
    %v3136 = vsel %vm2937, %v2619, 0.0
    %3137 = vadd.xlane.f32.xlu0 %v3136
    %v3138 = vpop.xlane.xlu0 %3137
    %v3139 = vsel %vm2937, %v2620, 0.0
    %3140 = vadd.xlane.f32.xlu0 %v3139
    %v3141 = vpop.xlane.xlu0 %3140
    %v3142 = vsel %vm2937, %v2621, 0.0
    %3143 = vadd.xlane.f32.xlu0 %v3142
    %v3144 = vpop.xlane.xlu0 %3143
    %v3145 = vsel %vm2937, %v2622, 0.0
    %3146 = vadd.xlane.f32.xlu0 %v3145
    %v3147 = vpop.xlane.xlu0 %3146
    %v3148 = vsel %vm2937, %v2623, 0.0
    %3149 = vadd.xlane.f32.xlu0 %v3148
    %v3150 = vpop.xlane.xlu0 %3149
    %v3151 = vsel %vm2937, %v2624, 0.0
    %3152 = vadd.xlane.f32.xlu0 %v3151
    %v3153 = vpop.xlane.xlu0 %3152
    %v3154 = vsel %vm2937, %v2625, 0.0
    %3155 = vadd.xlane.f32.xlu0 %v3154
    %v3156 = vpop.xlane.xlu0 %3155
    %v3157 = vsel %vm2937, %v2626, 0.0
    %3158 = vadd.xlane.f32.xlu0 %v3157
    %v3159 = vpop.xlane.xlu0 %3158
    %v3160 = vsel %vm2937, %v2627, 0.0
    %3161 = vadd.xlane.f32.xlu0 %v3160
    %v3162 = vpop.xlane.xlu0 %3161
    %v3163 = vsel %vm2937, %v2628, 0.0
    %3164 = vadd.xlane.f32.xlu0 %v3163
    %v3165 = vpop.xlane.xlu0 %3164
    %v3166 = vsel %vm2937, %v2629, 0.0
    %3167 = vadd.xlane.f32.xlu0 %v3166
    %v3168 = vpop.xlane.xlu0 %3167
    %v3169 = vsel %vm2937, %v2630, 0.0
    %3170 = vadd.xlane.f32.xlu0 %v3169
    %v3171 = vpop.xlane.xlu0 %3170
    %v3172 = vsel %vm2937, %v2631, 0.0
    %3173 = vadd.xlane.f32.xlu0 %v3172
    %v3174 = vpop.xlane.xlu0 %3173
    %v3175 = vsel %vm2937, %v2632, 0.0
    %3176 = vadd.xlane.f32.xlu0 %v3175
    %v3177 = vpop.xlane.xlu0 %3176
    %v3178 = vsel %vm2937, %v2633, 0.0
    %3179 = vadd.xlane.f32.xlu0 %v3178
    %v3180 = vpop.xlane.xlu0 %3179
    %v3181 = vsel %vm2937, %v2634, 0.0
    %3182 = vadd.xlane.f32.xlu0 %v3181
    %v3183 = vpop.xlane.xlu0 %3182
    %v3184 = vsel %vm2937, %v2635, 0.0
    %3185 = vadd.xlane.f32.xlu0 %v3184
    %v3186 = vpop.xlane.xlu0 %3185
    %v3187 = vsel %vm2937, %v2636, 0.0
    %3188 = vadd.xlane.f32.xlu0 %v3187
    %v3189 = vpop.xlane.xlu0 %3188
    %v3190 = vsel %vm2937, %v2637, 0.0
    %3191 = vadd.xlane.f32.xlu0 %v3190
    %v3192 = vpop.xlane.xlu0 %3191
    %v3193 = vsel %vm2937, %v2638, 0.0
    %3194 = vadd.xlane.f32.xlu0 %v3193
    %v3195 = vpop.xlane.xlu0 %3194
    %v3196 = vsel %vm2937, %v2639, 0.0
    %3197 = vadd.xlane.f32.xlu0 %v3196
    %v3198 = vpop.xlane.xlu0 %3197
    %v3199 = vsel %vm2937, %v2640, 0.0
    %3200 = vadd.xlane.f32.xlu0 %v3199
    %v3201 = vpop.xlane.xlu0 %3200
    %v3202 = vsel %vm2937, %v2641, 0.0
    %3203 = vadd.xlane.f32.xlu0 %v3202
    %v3204 = vpop.xlane.xlu0 %3203
    %v3205 = vsel %vm2937, %v2642, 0.0
    %3206 = vadd.xlane.f32.xlu0 %v3205
    %v3207 = vpop.xlane.xlu0 %3206
    %v3208 = vsel %vm2937, %v2643, 0.0
    %3209 = vadd.xlane.f32.xlu0 %v3208
    %v3210 = vpop.xlane.xlu0 %3209
    %v3211 = vsel %vm2937, %v2644, 0.0
    %3212 = vadd.xlane.f32.xlu0 %v3211
    %v3213 = vpop.xlane.xlu0 %3212
    %v3214 = vsel %vm2937, %v2645, 0.0
    %3215 = vadd.xlane.f32.xlu0 %v3214
    %v3216 = vpop.xlane.xlu0 %3215
    %v3217 = vsel %vm2937, %v2646, 0.0
    %3218 = vadd.xlane.f32.xlu0 %v3217
    %v3219 = vpop.xlane.xlu0 %3218
    %v3220 = vsel %vm2937, %v2647, 0.0
    %3221 = vadd.xlane.f32.xlu0 %v3220
    %v3222 = vpop.xlane.xlu0 %3221
    %v3223 = vsel %vm2937, %v2648, 0.0
    %3224 = vadd.xlane.f32.xlu0 %v3223
    %v3225 = vpop.xlane.xlu0 %3224
    %v3226 = vsel %vm2937, %v2649, 0.0
    %3227 = vadd.xlane.f32.xlu0 %v3226
    %v3228 = vpop.xlane.xlu0 %3227
    %v3229 = vsel %vm2937, %v2650, 0.0
    %3230 = vadd.xlane.f32.xlu0 %v3229
    %v3231 = vpop.xlane.xlu0 %3230
    %v3232 = vsel %vm2937, %v2651, 0.0
    %3233 = vadd.xlane.f32.xlu0 %v3232
    %v3234 = vpop.xlane.xlu0 %3233
    %v3235 = vsel %vm2937, %v2652, 0.0
    %3236 = vadd.xlane.f32.xlu0 %v3235
    %v3237 = vpop.xlane.xlu0 %3236
    %v3238 = vsel %vm2937, %v2653, 0.0
    %3239 = vadd.xlane.f32.xlu0 %v3238
    %v3240 = vpop.xlane.xlu0 %3239
    %v3241 = vsel %vm2937, %v2654, 0.0
    %3242 = vadd.xlane.f32.xlu0 %v3241
    %v3243 = vpop.xlane.xlu0 %3242
    %v3244 = vsel %vm2937, %v2655, 0.0
    %3245 = vadd.xlane.f32.xlu0 %v3244
    %v3246 = vpop.xlane.xlu0 %3245
    %v3247 = vsel %vm2937, %v2656, 0.0
    %3248 = vadd.xlane.f32.xlu0 %v3247
    %v3249 = vpop.xlane.xlu0 %3248
    %v3250 = vsel %vm2937, %v2657, 0.0
    %3251 = vadd.xlane.f32.xlu0 %v3250
    %v3252 = vpop.xlane.xlu0 %3251
    %v3253 = vsel %vm2937, %v2658, 0.0
    %3254 = vadd.xlane.f32.xlu0 %v3253
    %v3255 = vpop.xlane.xlu0 %3254
    %v3256 = vsel %vm2937, %v2659, 0.0
    %3257 = vadd.xlane.f32.xlu0 %v3256
    %v3258 = vpop.xlane.xlu0 %3257
    %v3259 = vsel %vm2937, %v2660, 0.0
    %3260 = vadd.xlane.f32.xlu0 %v3259
    %v3261 = vpop.xlane.xlu0 %3260
    %v3262 = vsel %vm2937, %v2661, 0.0
    %3263 = vadd.xlane.f32.xlu0 %v3262
    %v3264 = vpop.xlane.xlu0 %3263
    %v3265 = vsel %vm2937, %v2662, 0.0
    %3266 = vadd.xlane.f32.xlu0 %v3265
    %v3267 = vpop.xlane.xlu0 %3266
    %v3268 = vsel %vm2937, %v2663, 0.0
    %3269 = vadd.xlane.f32.xlu0 %v3268
    %v3270 = vpop.xlane.xlu0 %3269
    %v3271 = vsel %vm2937, %v2664, 0.0
    %3272 = vadd.xlane.f32.xlu0 %v3271
    %v3273 = vpop.xlane.xlu0 %3272
    %v3274 = vsel %vm2937, %v2665, 0.0
    %3275 = vadd.xlane.f32.xlu0 %v3274
    %v3276 = vpop.xlane.xlu0 %3275
    %v3277 = vsel %vm2937, %v2666, 0.0
    %3278 = vadd.xlane.f32.xlu0 %v3277
    %v3279 = vpop.xlane.xlu0 %3278
    %v3280 = vsel %vm2937, %v2667, 0.0
    %3281 = vadd.xlane.f32.xlu0 %v3280
    %v3282 = vpop.xlane.xlu0 %3281
    %v3283 = vsel %vm2937, %v2668, 0.0
    %3284 = vadd.xlane.f32.xlu0 %v3283
    %v3285 = vpop.xlane.xlu0 %3284
    %v3286 = vsel %vm2937, %v2669, 0.0
    %3287 = vadd.xlane.f32.xlu0 %v3286
    %v3288 = vpop.xlane.xlu0 %3287
    %v3289 = vsel %vm2937, %v2670, 0.0
    %3290 = vadd.xlane.f32.xlu0 %v3289
    %v3291 = vpop.xlane.xlu0 %3290
    %v3292 = vsel %vm2937, %v2671, 0.0
    %3293 = vadd.xlane.f32.xlu0 %v3292
    %v3294 = vpop.xlane.xlu0 %3293
    %v3295 = vsel %vm2937, %v2672, 0.0
    %3296 = vadd.xlane.f32.xlu0 %v3295
    %v3297 = vpop.xlane.xlu0 %3296
    %v3298 = vsel %vm2937, %v2673, 0.0
    %3299 = vadd.xlane.f32.xlu0 %v3298
    %v3300 = vpop.xlane.xlu0 %3299
    %v3301 = vsel %vm2937, %v2674, 0.0
    %3302 = vadd.xlane.f32.xlu0 %v3301
    %v3303 = vpop.xlane.xlu0 %3302
    %v3304 = vsel %vm2937, %v2675, 0.0
    %3305 = vadd.xlane.f32.xlu0 %v3304
    %v3306 = vpop.xlane.xlu0 %3305
    %v3307 = vsel %vm2937, %v2676, 0.0
    %3308 = vadd.xlane.f32.xlu0 %v3307
    %v3309 = vpop.xlane.xlu0 %3308
    %v3310 = vsel %vm2937, %v2677, 0.0
    %3311 = vadd.xlane.f32.xlu0 %v3310
    %v3312 = vpop.xlane.xlu0 %3311
    %v3313 = vsel %vm2937, %v2678, 0.0
    %3314 = vadd.xlane.f32.xlu0 %v3313
    %v3315 = vpop.xlane.xlu0 %3314
    %v3316 = vsel %vm2937, %v2679, 0.0
    %3317 = vadd.xlane.f32.xlu0 %v3316
    %v3318 = vpop.xlane.xlu0 %3317
    %v3319 = vsel %vm2937, %v2680, 0.0
    %3320 = vadd.xlane.f32.xlu0 %v3319
    %v3321 = vpop.xlane.xlu0 %3320
    %v3322 = vsel %vm2937, %v2681, 0.0
    %3323 = vadd.xlane.f32.xlu0 %v3322
    %v3324 = vpop.xlane.xlu0 %3323
    %v3325 = vsel %vm2937, %v2682, 0.0
    %3326 = vadd.xlane.f32.xlu0 %v3325
    %v3327 = vpop.xlane.xlu0 %3326
    %v3328 = vsel %vm2937, %v2683, 0.0
    %3329 = vadd.xlane.f32.xlu0 %v3328
    %v3330 = vpop.xlane.xlu0 %3329
    %v3331 = vsel %vm2937, %v2684, 0.0
    %3332 = vadd.xlane.f32.xlu0 %v3331
    %v3333 = vpop.xlane.xlu0 %3332
    %v3334 = vsel %vm2937, %v2685, 0.0
    %3335 = vadd.xlane.f32.xlu0 %v3334
    %v3336 = vpop.xlane.xlu0 %3335
    %v3337 = vsel %vm2937, %v2686, 0.0
    %3338 = vadd.xlane.f32.xlu0 %v3337
    %v3339 = vpop.xlane.xlu0 %3338
    %v3340 = vsel %vm2937, %v2687, 0.0
    %3341 = vadd.xlane.f32.xlu0 %v3340
    %v3342 = vpop.xlane.xlu0 %3341
    %v3343 = vsel %vm2937, %v2688, 0.0
    %3344 = vadd.xlane.f32.xlu0 %v3343
    %v3345 = vpop.xlane.xlu0 %3344
    %v3346 = vsel %vm2937, %v2689, 0.0
    %3347 = vadd.xlane.f32.xlu0 %v3346
    %v3348 = vpop.xlane.xlu0 %3347
    %v3349 = vsel %vm2937, %v2690, 0.0
    %3350 = vadd.xlane.f32.xlu0 %v3349
    %v3351 = vpop.xlane.xlu0 %3350
    %v3352 = vsel %vm2937, %v2691, 0.0
    %3353 = vadd.xlane.f32.xlu0 %v3352
    %v3354 = vpop.xlane.xlu0 %3353
    %v3355 = vsel %vm2937, %v2692, 0.0
    %3356 = vadd.xlane.f32.xlu0 %v3355
    %v3357 = vpop.xlane.xlu0 %3356
    %v3358 = vsel %vm2937, %v2693, 0.0
    %3359 = vadd.xlane.f32.xlu0 %v3358
    %v3360 = vpop.xlane.xlu0 %3359
    %v3361 = vsel %vm2937, %v2694, 0.0
    %3362 = vadd.xlane.f32.xlu0 %v3361
    %v3363 = vpop.xlane.xlu0 %3362
    %v3364 = vsel %vm2937, %v2695, 0.0
    %3365 = vadd.xlane.f32.xlu0 %v3364
    %v3366 = vpop.xlane.xlu0 %3365
    %v3367 = vsel %vm2937, %v2696, 0.0
    %3368 = vadd.xlane.f32.xlu0 %v3367
    %v3369 = vpop.xlane.xlu0 %3368
    %v3370 = vsel %vm2937, %v2697, 0.0
    %3371 = vadd.xlane.f32.xlu0 %v3370
    %v3372 = vpop.xlane.xlu0 %3371
    %v3373 = vsel %vm2937, %v2698, 0.0
    %3374 = vadd.xlane.f32.xlu0 %v3373
    %v3375 = vpop.xlane.xlu0 %3374
    %v3376 = vsel %vm2937, %v2699, 0.0
    %3377 = vadd.xlane.f32.xlu0 %v3376
    %v3378 = vpop.xlane.xlu0 %3377
    %v3379 = vsel %vm2937, %v2700, 0.0
    %3380 = vadd.xlane.f32.xlu0 %v3379
    %v3381 = vpop.xlane.xlu0 %3380
    %v3382 = vsel %vm2937, %v2701, 0.0
    %3383 = vadd.xlane.f32.xlu0 %v3382
    %v3384 = vpop.xlane.xlu0 %3383
    %v3385 = vsel %vm2937, %v2702, 0.0
    %3386 = vadd.xlane.f32.xlu0 %v3385
    %v3387 = vpop.xlane.xlu0 %3386
    %v3388 = vsel %vm2937, %v2703, 0.0
    %3389 = vadd.xlane.f32.xlu0 %v3388
    %v3390 = vpop.xlane.xlu0 %3389
    %v3391 = vsel %vm2937, %v2704, 0.0
    %3392 = vadd.xlane.f32.xlu0 %v3391
    %v3393 = vpop.xlane.xlu0 %3392
    %v3394 = vsel %vm2937, %v2705, 0.0
    %3395 = vadd.xlane.f32.xlu0 %v3394
    %v3396 = vpop.xlane.xlu0 %3395
    %v3397 = vsel %vm2937, %v2706, 0.0
    %3398 = vadd.xlane.f32.xlu0 %v3397
    %v3399 = vpop.xlane.xlu0 %3398
    %v3400 = vsel %vm2937, %v2707, 0.0
    %3401 = vadd.xlane.f32.xlu0 %v3400
    %v3402 = vpop.xlane.xlu0 %3401
    %v3403 = vsel %vm2937, %v2708, 0.0
    %3404 = vadd.xlane.f32.xlu0 %v3403
    %v3405 = vpop.xlane.xlu0 %3404
    %v3406 = vsel %vm2937, %v2709, 0.0
    %3407 = vadd.xlane.f32.xlu0 %v3406
    %v3408 = vpop.xlane.xlu0 %3407
    %v3409 = vsel %vm2937, %v2710, 0.0
    %3410 = vadd.xlane.f32.xlu0 %v3409
    %v3411 = vpop.xlane.xlu0 %3410
    %v3412 = vsel %vm2937, %v2711, 0.0
    %3413 = vadd.xlane.f32.xlu0 %v3412
    %v3414 = vpop.xlane.xlu0 %3413
    %v3415 = vsel %vm2937, %v2712, 0.0
    %3416 = vadd.xlane.f32.xlu0 %v3415
    %v3417 = vpop.xlane.xlu0 %3416
    %v3418 = vsel %vm2937, %v2713, 0.0
    %3419 = vadd.xlane.f32.xlu0 %v3418
    %v3420 = vpop.xlane.xlu0 %3419
    %v3421 = vsel %vm2937, %v2714, 0.0
    %3422 = vadd.xlane.f32.xlu0 %v3421
    %v3423 = vpop.xlane.xlu0 %3422
    %v3424 = vsel %vm2937, %v2715, 0.0
    %3425 = vadd.xlane.f32.xlu0 %v3424
    %v3426 = vpop.xlane.xlu0 %3425
    %v3427 = vsel %vm2937, %v2716, 0.0
    %3428 = vadd.xlane.f32.xlu0 %v3427
    %v3429 = vpop.xlane.xlu0 %3428
    %v3430 = vsel %vm2937, %v2717, 0.0
    %3431 = vadd.xlane.f32.xlu0 %v3430
    %v3432 = vpop.xlane.xlu0 %3431
    %v3433 = vsel %vm2937, %v2718, 0.0
    %3434 = vadd.xlane.f32.xlu0 %v3433
    %v3435 = vpop.xlane.xlu0 %3434
    %v3436 = vsel %vm2937, %v2719, 0.0
    %3437 = vadd.xlane.f32.xlu0 %v3436
    %v3438 = vpop.xlane.xlu0 %3437
    %v3439 = vsel %vm2937, %v2720, 0.0
    %3440 = vadd.xlane.f32.xlu0 %v3439
    %v3441 = vpop.xlane.xlu0 %3440
    %v3442 = vsel %vm2937, %v2721, 0.0
    %3443 = vadd.xlane.f32.xlu0 %v3442
    %v3444 = vpop.xlane.xlu0 %3443
    %v3445 = vsel %vm2937, %v2722, 0.0
    %3446 = vadd.xlane.f32.xlu0 %v3445
    %v3447 = vpop.xlane.xlu0 %3446
    %v3448 = vsel %vm2937, %v2723, 0.0
    %3449 = vadd.xlane.f32.xlu0 %v3448
    %v3450 = vpop.xlane.xlu0 %3449
    %v3451 = vsel %vm2937, %v2724, 0.0
    %3452 = vadd.xlane.f32.xlu0 %v3451
    %v3453 = vpop.xlane.xlu0 %3452
    %v3454 = vsel %vm2937, %v2725, 0.0
    %3455 = vadd.xlane.f32.xlu0 %v3454
    %v3456 = vpop.xlane.xlu0 %3455
    %v3457 = vsel %vm2937, %v2726, 0.0
    %3458 = vadd.xlane.f32.xlu0 %v3457
    %v3459 = vpop.xlane.xlu0 %3458
    %v3460 = vsel %vm2937, %v2727, 0.0
    %3461 = vadd.xlane.f32.xlu0 %v3460
    %v3462 = vpop.xlane.xlu0 %3461
    %v3463 = vsel %vm2937, %v2728, 0.0
    %3464 = vadd.xlane.f32.xlu0 %v3463
    %v3465 = vpop.xlane.xlu0 %3464
    %v3466 = vsel %vm2937, %v2729, 0.0
    %3467 = vadd.xlane.f32.xlu0 %v3466
    %v3468 = vpop.xlane.xlu0 %3467
    %v3469 = vsel %vm2937, %v2730, 0.0
    %3470 = vadd.xlane.f32.xlu0 %v3469
    %v3471 = vpop.xlane.xlu0 %3470
    %v3472 = vsel %vm2937, %v2731, 0.0
    %3473 = vadd.xlane.f32.xlu0 %v3472
    %v3474 = vpop.xlane.xlu0 %3473
    %v3475 = vsel %vm2937, %v2732, 0.0
    %3476 = vadd.xlane.f32.xlu0 %v3475
    %v3477 = vpop.xlane.xlu0 %3476
    %v3478 = vsel %vm2937, %v2733, 0.0
    %3479 = vadd.xlane.f32.xlu0 %v3478
    %v3480 = vpop.xlane.xlu0 %3479
    %v3481 = vsel %vm2937, %v2734, 0.0
    %3482 = vadd.xlane.f32.xlu0 %v3481
    %v3483 = vpop.xlane.xlu0 %3482
    %v3484 = vsel %vm2937, %v2735, 0.0
    %3485 = vadd.xlane.f32.xlu0 %v3484
    %v3486 = vpop.xlane.xlu0 %3485
    %v3487 = vsel %vm2937, %v2736, 0.0
    %3488 = vadd.xlane.f32.xlu0 %v3487
    %v3489 = vpop.xlane.xlu0 %3488
    %v3490 = vsel %vm2937, %v2737, 0.0
    %3491 = vadd.xlane.f32.xlu0 %v3490
    %v3492 = vpop.xlane.xlu0 %3491
    %v3493 = vsel %vm2937, %v2738, 0.0
    %3494 = vadd.xlane.f32.xlu0 %v3493
    %v3495 = vpop.xlane.xlu0 %3494
    %v3496 = vsel %vm2937, %v2739, 0.0
    %3497 = vadd.xlane.f32.xlu0 %v3496
    %v3498 = vpop.xlane.xlu0 %3497
    %v3499 = vsel %vm2937, %v2740, 0.0
    %3500 = vadd.xlane.f32.xlu0 %v3499
    %v3501 = vpop.xlane.xlu0 %3500
    %v3502 = vsel %vm2937, %v2741, 0.0
    %3503 = vadd.xlane.f32.xlu0 %v3502
    %v3504 = vpop.xlane.xlu0 %3503
    %v3505 = vsel %vm2937, %v2742, 0.0
    %3506 = vadd.xlane.f32.xlu0 %v3505
    %v3507 = vpop.xlane.xlu0 %3506
    %v3508 = vsel %vm2937, %v2743, 0.0
    %3509 = vadd.xlane.f32.xlu0 %v3508
    %v3510 = vpop.xlane.xlu0 %3509
    %v3511 = vsel %vm2937, %v2744, 0.0
    %3512 = vadd.xlane.f32.xlu0 %v3511
    %v3513 = vpop.xlane.xlu0 %3512
    %v3514 = vsel %vm2937, %v2745, 0.0
    %3515 = vadd.xlane.f32.xlu0 %v3514
    %v3516 = vpop.xlane.xlu0 %3515
    %v3517 = vsel %vm2937, %v2746, 0.0
    %3518 = vadd.xlane.f32.xlu0 %v3517
    %v3519 = vpop.xlane.xlu0 %3518
    %v3520 = vsel %vm2937, %v2747, 0.0
    %3521 = vadd.xlane.f32.xlu0 %v3520
    %v3522 = vpop.xlane.xlu0 %3521
    %v3523 = vsel %vm2937, %v2748, 0.0
    %3524 = vadd.xlane.f32.xlu0 %v3523
    %v3525 = vpop.xlane.xlu0 %3524
    %v3526 = vsel %vm2937, %v2749, 0.0
    %3527 = vadd.xlane.f32.xlu0 %v3526
    %v3528 = vpop.xlane.xlu0 %3527
    %v3529 = vsel %vm2937, %v2750, 0.0
    %3530 = vadd.xlane.f32.xlu0 %v3529
    %v3531 = vpop.xlane.xlu0 %3530
    %v3532 = vsel %vm2937, %v2751, 0.0
    %3533 = vadd.xlane.f32.xlu0 %v3532
    %v3534 = vpop.xlane.xlu0 %3533
    %v3535 = vsel %vm2937, %v2752, 0.0
    %3536 = vadd.xlane.f32.xlu0 %v3535
    %v3537 = vpop.xlane.xlu0 %3536
    %v3538 = vsel %vm2937, %v2753, 0.0
    %3539 = vadd.xlane.f32.xlu0 %v3538
    %v3540 = vpop.xlane.xlu0 %3539
    %v3541 = vsel %vm2937, %v2754, 0.0
    %3542 = vadd.xlane.f32.xlu0 %v3541
    %v3543 = vpop.xlane.xlu0 %3542
    %v3544 = vsel %vm2937, %v2755, 0.0
    %3545 = vadd.xlane.f32.xlu0 %v3544
    %v3546 = vpop.xlane.xlu0 %3545
    %v3547 = vsel %vm2937, %v2756, 0.0
    %3548 = vadd.xlane.f32.xlu0 %v3547
    %v3549 = vpop.xlane.xlu0 %3548
    %v3550 = vsel %vm2937, %v2757, 0.0
    %3551 = vadd.xlane.f32.xlu0 %v3550
    %v3552 = vpop.xlane.xlu0 %3551
    %v3553 = vsel %vm2937, %v2758, 0.0
    %3554 = vadd.xlane.f32.xlu0 %v3553
    %v3555 = vpop.xlane.xlu0 %3554
    %v3556 = vsel %vm2937, %v2759, 0.0
    %3557 = vadd.xlane.f32.xlu0 %v3556
    %v3558 = vpop.xlane.xlu0 %3557
    %v3559 = vsel %vm2937, %v2760, 0.0
    %3560 = vadd.xlane.f32.xlu0 %v3559
    %v3561 = vpop.xlane.xlu0 %3560
    %v3562 = vsel %vm2937, %v2761, 0.0
    %3563 = vadd.xlane.f32.xlu0 %v3562
    %v3564 = vpop.xlane.xlu0 %3563
    %v3565 = vsel %vm2937, %v2762, 0.0
    %3566 = vadd.xlane.f32.xlu0 %v3565
    %v3567 = vpop.xlane.xlu0 %3566
    %v3568 = vsel %vm2937, %v2763, 0.0
    %3569 = vadd.xlane.f32.xlu0 %v3568
    %v3570 = vpop.xlane.xlu0 %3569
    %v3571 = vsel %vm2937, %v2764, 0.0
    %3572 = vadd.xlane.f32.xlu0 %v3571
    %v3573 = vpop.xlane.xlu0 %3572
    %v3574 = vsel %vm2937, %v2765, 0.0
    %3575 = vadd.xlane.f32.xlu0 %v3574
    %v3576 = vpop.xlane.xlu0 %3575
    %v3577 = vsel %vm2937, %v2766, 0.0
    %3578 = vadd.xlane.f32.xlu0 %v3577
    %v3579 = vpop.xlane.xlu0 %3578
    %v3580 = vsel %vm2937, %v2767, 0.0
    %3581 = vadd.xlane.f32.xlu0 %v3580
    %v3582 = vpop.xlane.xlu0 %3581
    %v3583 = vsel %vm2937, %v2768, 0.0
    %3584 = vadd.xlane.f32.xlu0 %v3583
    %v3585 = vpop.xlane.xlu0 %3584
    %v3586 = vsel %vm2937, %v2769, 0.0
    %3587 = vadd.xlane.f32.xlu0 %v3586
    %v3588 = vpop.xlane.xlu0 %3587
    %v3589 = vsel %vm2937, %v2770, 0.0
    %3590 = vadd.xlane.f32.xlu0 %v3589
    %v3591 = vpop.xlane.xlu0 %3590
    %v3592 = vsel %vm2937, %v2771, 0.0
    %3593 = vadd.xlane.f32.xlu0 %v3592
    %v3594 = vpop.xlane.xlu0 %3593
    %v3595 = vsel %vm2937, %v2772, 0.0
    %3596 = vadd.xlane.f32.xlu0 %v3595
    %v3597 = vpop.xlane.xlu0 %3596
    %v3598 = vsel %vm2937, %v2773, 0.0
    %3599 = vadd.xlane.f32.xlu0 %v3598
    %v3600 = vpop.xlane.xlu0 %3599
    %v3601 = vsel %vm2937, %v2774, 0.0
    %3602 = vadd.xlane.f32.xlu0 %v3601
    %v3603 = vpop.xlane.xlu0 %3602
    %v3604 = vsel %vm2937, %v2775, 0.0
    %3605 = vadd.xlane.f32.xlu0 %v3604
    %v3606 = vpop.xlane.xlu0 %3605
    %v3607 = vsel %vm2937, %v2776, 0.0
    %3608 = vadd.xlane.f32.xlu0 %v3607
    %v3609 = vpop.xlane.xlu0 %3608
    %v3610 = vsel %vm2937, %v2777, 0.0
    %3611 = vadd.xlane.f32.xlu0 %v3610
    %v3612 = vpop.xlane.xlu0 %3611
    %v3613 = vsel %vm2937, %v2778, 0.0
    %3614 = vadd.xlane.f32.xlu0 %v3613
    %v3615 = vpop.xlane.xlu0 %3614
    %v3616 = vsel %vm2937, %v2779, 0.0
    %3617 = vadd.xlane.f32.xlu0 %v3616
    %v3618 = vpop.xlane.xlu0 %3617
    %v3619 = vsel %vm2937, %v2780, 0.0
    %3620 = vadd.xlane.f32.xlu0 %v3619
    %v3621 = vpop.xlane.xlu0 %3620
    %v3622 = vsel %vm2937, %v2781, 0.0
    %3623 = vadd.xlane.f32.xlu0 %v3622
    %v3624 = vpop.xlane.xlu0 %3623
    %v3625 = vsel %vm2937, %v2782, 0.0
    %3626 = vadd.xlane.f32.xlu0 %v3625
    %v3627 = vpop.xlane.xlu0 %3626
    %v3628 = vsel %vm2937, %v2783, 0.0
    %3629 = vadd.xlane.f32.xlu0 %v3628
    %v3630 = vpop.xlane.xlu0 %3629
    %v3631 = vsel %vm2937, %v2784, 0.0
    %3632 = vadd.xlane.f32.xlu0 %v3631
    %v3633 = vpop.xlane.xlu0 %3632
    %v3634 = vsel %vm2937, %v2785, 0.0
    %3635 = vadd.xlane.f32.xlu0 %v3634
    %v3636 = vpop.xlane.xlu0 %3635
    %v3637 = vsel %vm2937, %v2786, 0.0
    %3638 = vadd.xlane.f32.xlu0 %v3637
    %v3639 = vpop.xlane.xlu0 %3638
    %v3640 = vsel %vm2937, %v2787, 0.0
    %3641 = vadd.xlane.f32.xlu0 %v3640
    %v3642 = vpop.xlane.xlu0 %3641
    %v3643 = vsel %vm2937, %v2788, 0.0
    %3644 = vadd.xlane.f32.xlu0 %v3643
    %v3645 = vpop.xlane.xlu0 %3644
    %v3646 = vsel %vm2937, %v2789, 0.0
    %3647 = vadd.xlane.f32.xlu0 %v3646
    %v3648 = vpop.xlane.xlu0 %3647
    %v3649 = vsel %vm2937, %v2790, 0.0
    %3650 = vadd.xlane.f32.xlu0 %v3649
    %v3651 = vpop.xlane.xlu0 %3650
    %v3652 = vsel %vm2937, %v2791, 0.0
    %3653 = vadd.xlane.f32.xlu0 %v3652
    %v3654 = vpop.xlane.xlu0 %3653
    %v3655 = vsel %vm2937, %v2792, 0.0
    %3656 = vadd.xlane.f32.xlu0 %v3655
    %v3657 = vpop.xlane.xlu0 %3656
    %v3658 = vsel %vm2937, %v2793, 0.0
    %3659 = vadd.xlane.f32.xlu0 %v3658
    %v3660 = vpop.xlane.xlu0 %3659
    %v3661 = vsel %vm2937, %v2794, 0.0
    %3662 = vadd.xlane.f32.xlu0 %v3661
    %v3663 = vpop.xlane.xlu0 %3662
    %v3664 = vsel %vm2937, %v2795, 0.0
    %3665 = vadd.xlane.f32.xlu0 %v3664
    %v3666 = vpop.xlane.xlu0 %3665
    %v3667 = vsel %vm2937, %v2796, 0.0
    %3668 = vadd.xlane.f32.xlu0 %v3667
    %v3669 = vpop.xlane.xlu0 %3668
    %v3670 = vsel %vm2937, %v2797, 0.0
    %3671 = vadd.xlane.f32.xlu0 %v3670
    %v3672 = vpop.xlane.xlu0 %3671
    %v3673 = vsel %vm2937, %v2798, 0.0
    %3674 = vadd.xlane.f32.xlu0 %v3673
    %v3675 = vpop.xlane.xlu0 %3674
    %v3676 = vsel %vm2937, %v2799, 0.0
    %3677 = vadd.xlane.f32.xlu0 %v3676
    %v3678 = vpop.xlane.xlu0 %3677
    %v3679 = vsel %vm2937, %v2800, 0.0
    %3680 = vadd.xlane.f32.xlu0 %v3679
    %v3681 = vpop.xlane.xlu0 %3680
    %v3682 = vsel %vm2937, %v2801, 0.0
    %3683 = vadd.xlane.f32.xlu0 %v3682
    %v3684 = vpop.xlane.xlu0 %3683
    %v3685 = vsel %vm2937, %v2802, 0.0
    %3686 = vadd.xlane.f32.xlu0 %v3685
    %v3687 = vpop.xlane.xlu0 %3686
    %v3688 = vsel %vm2937, %v2803, 0.0
    %3689 = vadd.xlane.f32.xlu0 %v3688
    %v3690 = vpop.xlane.xlu0 %3689
    %v3691 = vsel %vm2937, %v2804, 0.0
    %3692 = vadd.xlane.f32.xlu0 %v3691
    %v3693 = vpop.xlane.xlu0 %3692
    %v3694 = vsel %vm2937, %v2805, 0.0
    %3695 = vadd.xlane.f32.xlu0 %v3694
    %v3696 = vpop.xlane.xlu0 %3695
    %v3697 = vsel %vm2937, %v2806, 0.0
    %3698 = vadd.xlane.f32.xlu0 %v3697
    %v3699 = vpop.xlane.xlu0 %3698
    %v3700 = vsel %vm2937, %v2807, 0.0
    %3701 = vadd.xlane.f32.xlu0 %v3700
    %v3702 = vpop.xlane.xlu0 %3701
    %v3703 = vsel %vm2937, %v2808, 0.0
    %3704 = vadd.xlane.f32.xlu0 %v3703
    %v3705 = vpop.xlane.xlu0 %3704
    %v3706 = vsel %vm2937, %v2809, 0.0
    %3707 = vadd.xlane.f32.xlu0 %v3706
    %v3708 = vpop.xlane.xlu0 %3707
    %v3709 = vsel %vm2937, %v2810, 0.0
    %3710 = vadd.xlane.f32.xlu0 %v3709
    %v3711 = vpop.xlane.xlu0 %3710
    %v3712 = vsel %vm2937, %v2811, 0.0
    %3713 = vadd.xlane.f32.xlu0 %v3712
    %v3714 = vpop.xlane.xlu0 %3713
    %v3715 = vsel %vm2937, %v2812, 0.0
    %3716 = vadd.xlane.f32.xlu0 %v3715
    %v3717 = vpop.xlane.xlu0 %3716
    %v3718 = vsel %vm2937, %v2813, 0.0
    %3719 = vadd.xlane.f32.xlu0 %v3718
    %v3720 = vpop.xlane.xlu0 %3719
    %v3721 = vsel %vm2937, %v2814, 0.0
    %3722 = vadd.xlane.f32.xlu0 %v3721
    %v3723 = vpop.xlane.xlu0 %3722
    %v3724 = vsel %vm2937, %v2815, 0.0
    %3725 = vadd.xlane.f32.xlu0 %v3724
    %v3726 = vpop.xlane.xlu0 %3725
    %v3727 = vsel %vm2937, %v2816, 0.0
    %3728 = vadd.xlane.f32.xlu0 %v3727
    %v3729 = vpop.xlane.xlu0 %3728
    %v3730 = vsel %vm2937, %v2817, 0.0
    %3731 = vadd.xlane.f32.xlu0 %v3730
    %v3732 = vpop.xlane.xlu0 %3731
    %v3733 = vsel %vm2937, %v2818, 0.0
    %3734 = vadd.xlane.f32.xlu0 %v3733
    %v3735 = vpop.xlane.xlu0 %3734
    %v3736 = vsel %vm2937, %v2819, 0.0
    %3737 = vadd.xlane.f32.xlu0 %v3736
    %v3738 = vpop.xlane.xlu0 %3737
    %v3739 = vsel %vm2937, %v2820, 0.0
    %3740 = vadd.xlane.f32.xlu0 %v3739
    %v3741 = vpop.xlane.xlu0 %3740
    %v3742 = vsel %vm2937, %v2821, 0.0
    %3743 = vadd.xlane.f32.xlu0 %v3742
    %v3744 = vpop.xlane.xlu0 %3743
    %v3745 = vsel %vm2937, %v2822, 0.0
    %3746 = vadd.xlane.f32.xlu0 %v3745
    %v3747 = vpop.xlane.xlu0 %3746
    %v3748 = vsel %vm2937, %v2823, 0.0
    %3749 = vadd.xlane.f32.xlu0 %v3748
    %v3750 = vpop.xlane.xlu0 %3749
    %v3751 = vsel %vm2937, %v2824, 0.0
    %3752 = vadd.xlane.f32.xlu0 %v3751
    %v3753 = vpop.xlane.xlu0 %3752
    %v3754 = vsel %vm2937, %v2825, 0.0
    %3755 = vadd.xlane.f32.xlu0 %v3754
    %v3756 = vpop.xlane.xlu0 %3755
    %v3757 = vsel %vm2937, %v2826, 0.0
    %3758 = vadd.xlane.f32.xlu0 %v3757
    %v3759 = vpop.xlane.xlu0 %3758
    %v3760 = vsel %vm2937, %v2827, 0.0
    %3761 = vadd.xlane.f32.xlu0 %v3760
    %v3762 = vpop.xlane.xlu0 %3761
    %v3763 = vsel %vm2937, %v2828, 0.0
    %3764 = vadd.xlane.f32.xlu0 %v3763
    %v3765 = vpop.xlane.xlu0 %3764
    %v3766 = vsel %vm2937, %v2829, 0.0
    %3767 = vadd.xlane.f32.xlu0 %v3766
    %v3768 = vpop.xlane.xlu0 %3767
    %v3769 = vsel %vm2937, %v2830, 0.0
    %3770 = vadd.xlane.f32.xlu0 %v3769
    %v3771 = vpop.xlane.xlu0 %3770
    %v3772 = vsel %vm2937, %v2831, 0.0
    %3773 = vadd.xlane.f32.xlu0 %v3772
    %v3774 = vpop.xlane.xlu0 %3773
    %v3775 = vsel %vm2937, %v2832, 0.0
    %3776 = vadd.xlane.f32.xlu0 %v3775
    %v3777 = vpop.xlane.xlu0 %3776
    %v3778 = vsel %vm2937, %v2833, 0.0
    %3779 = vadd.xlane.f32.xlu0 %v3778
    %v3780 = vpop.xlane.xlu0 %3779
    %v3781 = vsel %vm2937, %v2834, 0.0
    %3782 = vadd.xlane.f32.xlu0 %v3781
    %v3783 = vpop.xlane.xlu0 %3782
    %v3784 = vsel %vm2937, %v2835, 0.0
    %3785 = vadd.xlane.f32.xlu0 %v3784
    %v3786 = vpop.xlane.xlu0 %3785
    %v3787 = vsel %vm2937, %v2836, 0.0
    %3788 = vadd.xlane.f32.xlu0 %v3787
    %v3789 = vpop.xlane.xlu0 %3788
    %v3790 = vsel %vm2937, %v2837, 0.0
    %3791 = vadd.xlane.f32.xlu0 %v3790
    %v3792 = vpop.xlane.xlu0 %3791
    %v3793 = vsel %vm2937, %v2838, 0.0
    %3794 = vadd.xlane.f32.xlu0 %v3793
    %v3795 = vpop.xlane.xlu0 %3794
    %v3796 = vsel %vm2937, %v2839, 0.0
    %3797 = vadd.xlane.f32.xlu0 %v3796
    %v3798 = vpop.xlane.xlu0 %3797
    %v3799 = vsel %vm2937, %v2840, 0.0
    %3800 = vadd.xlane.f32.xlu0 %v3799
    %v3801 = vpop.xlane.xlu0 %3800
    %v3802 = vsel %vm2937, %v2841, 0.0
    %3803 = vadd.xlane.f32.xlu0 %v3802
    %v3804 = vpop.xlane.xlu0 %3803
    %v3805 = vsel %vm2937, %v2842, 0.0
    %3806 = vadd.xlane.f32.xlu0 %v3805
    %v3807 = vpop.xlane.xlu0 %3806
    %v3808 = vsel %vm2937, %v2843, 0.0
    %3809 = vadd.xlane.f32.xlu0 %v3808
    %v3810 = vpop.xlane.xlu0 %3809
    %v3811 = vsel %vm2937, %v2844, 0.0
    %3812 = vadd.xlane.f32.xlu0 %v3811
    %v3813 = vpop.xlane.xlu0 %3812
    %v3814 = vsel %vm2937, %v2845, 0.0
    %3815 = vadd.xlane.f32.xlu0 %v3814
    %v3816 = vpop.xlane.xlu0 %3815
    %v3817 = vsel %vm2937, %v2846, 0.0
    %3818 = vadd.xlane.f32.xlu0 %v3817
    %v3819 = vpop.xlane.xlu0 %3818
    %v3820 = vsel %vm2937, %v2847, 0.0
    %3821 = vadd.xlane.f32.xlu0 %v3820
    %v3822 = vpop.xlane.xlu0 %3821
    %v3823 = vsel %vm2937, %v2848, 0.0
    %3824 = vadd.xlane.f32.xlu0 %v3823
    %v3825 = vpop.xlane.xlu0 %3824
    %v3826 = vsel %vm2937, %v2849, 0.0
    %3827 = vadd.xlane.f32.xlu0 %v3826
    %v3828 = vpop.xlane.xlu0 %3827
    %v3829 = vsel %vm2937, %v2850, 0.0
    %3830 = vadd.xlane.f32.xlu0 %v3829
    %v3831 = vpop.xlane.xlu0 %3830
    %v3832 = vsel %vm2937, %v2851, 0.0
    %3833 = vadd.xlane.f32.xlu0 %v3832
    %v3834 = vpop.xlane.xlu0 %3833
    %v3835 = vsel %vm2937, %v2852, 0.0
    %3836 = vadd.xlane.f32.xlu0 %v3835
    %v3837 = vpop.xlane.xlu0 %3836
    %v3838 = vsel %vm2937, %v2853, 0.0
    %3839 = vadd.xlane.f32.xlu0 %v3838
    %v3840 = vpop.xlane.xlu0 %3839
    %v3841 = vsel %vm2937, %v2854, 0.0
    %3842 = vadd.xlane.f32.xlu0 %v3841
    %v3843 = vpop.xlane.xlu0 %3842
    %v3844 = vsel %vm2937, %v2855, 0.0
    %3845 = vadd.xlane.f32.xlu0 %v3844
    %v3846 = vpop.xlane.xlu0 %3845
    %v3847 = vsel %vm2937, %v2856, 0.0
    %3848 = vadd.xlane.f32.xlu0 %v3847
    %v3849 = vpop.xlane.xlu0 %3848
    %v3850 = vsel %vm2937, %v2857, 0.0
    %3851 = vadd.xlane.f32.xlu0 %v3850
    %v3852 = vpop.xlane.xlu0 %3851
    %v3853 = vsel %vm2937, %v2858, 0.0
    %3854 = vadd.xlane.f32.xlu0 %v3853
    %v3855 = vpop.xlane.xlu0 %3854
    %v3856 = vsel %vm2937, %v2859, 0.0
    %3857 = vadd.xlane.f32.xlu0 %v3856
    %v3858 = vpop.xlane.xlu0 %3857
    %v3859 = vsel %vm2937, %v2860, 0.0
    %3860 = vadd.xlane.f32.xlu0 %v3859
    %v3861 = vpop.xlane.xlu0 %3860
    %v3862 = vsel %vm2937, %v2861, 0.0
    %3863 = vadd.xlane.f32.xlu0 %v3862
    %v3864 = vpop.xlane.xlu0 %3863
    %v3865 = vsel %vm2937, %v2862, 0.0
    %3866 = vadd.xlane.f32.xlu0 %v3865
    %v3867 = vpop.xlane.xlu0 %3866
    %v3868 = vsel %vm2937, %v2863, 0.0
    %3869 = vadd.xlane.f32.xlu0 %v3868
    %v3870 = vpop.xlane.xlu0 %3869
    %v3871 = vsel %vm2937, %v2864, 0.0
    %3872 = vadd.xlane.f32.xlu0 %v3871
    %v3873 = vpop.xlane.xlu0 %3872
    %v3874 = vsel %vm2937, %v2865, 0.0
    %3875 = vadd.xlane.f32.xlu0 %v3874
    %v3876 = vpop.xlane.xlu0 %3875
    %v3877 = vsel %vm2937, %v2866, 0.0
    %3878 = vadd.xlane.f32.xlu0 %v3877
    %v3879 = vpop.xlane.xlu0 %3878
    %v3880 = vsel %vm2937, %v2867, 0.0
    %3881 = vadd.xlane.f32.xlu0 %v3880
    %v3882 = vpop.xlane.xlu0 %3881
    %v3883 = vsel %vm2937, %v2868, 0.0
    %3884 = vadd.xlane.f32.xlu0 %v3883
    %v3885 = vpop.xlane.xlu0 %3884
    %v3886 = vsel %vm2937, %v2869, 0.0
    %3887 = vadd.xlane.f32.xlu0 %v3886
    %v3888 = vpop.xlane.xlu0 %3887
    %v3889 = vsel %vm2937, %v2870, 0.0
    %3890 = vadd.xlane.f32.xlu0 %v3889
    %v3891 = vpop.xlane.xlu0 %3890
    %v3892 = vsel %vm2937, %v2871, 0.0
    %3893 = vadd.xlane.f32.xlu0 %v3892
    %v3894 = vpop.xlane.xlu0 %3893
    %v3895 = vsel %vm2937, %v2872, 0.0
    %3896 = vadd.xlane.f32.xlu0 %v3895
    %v3897 = vpop.xlane.xlu0 %3896
    %v3898 = vsel %vm2937, %v2873, 0.0
    %3899 = vadd.xlane.f32.xlu0 %v3898
    %v3900 = vpop.xlane.xlu0 %3899
    %v3901 = vsel %vm2937, %v2874, 0.0
    %3902 = vadd.xlane.f32.xlu0 %v3901
    %v3903 = vpop.xlane.xlu0 %3902
    %v3904 = vsel %vm2937, %v2875, 0.0
    %3905 = vadd.xlane.f32.xlu0 %v3904
    %v3906 = vpop.xlane.xlu0 %3905
    %v3907 = vsel %vm2937, %v2876, 0.0
    %3908 = vadd.xlane.f32.xlu0 %v3907
    %v3909 = vpop.xlane.xlu0 %3908
    %v3910 = vsel %vm2937, %v2877, 0.0
    %3911 = vadd.xlane.f32.xlu0 %v3910
    %v3912 = vpop.xlane.xlu0 %3911
    %v3913 = vsel %vm2937, %v2878, 0.0
    %3914 = vadd.xlane.f32.xlu0 %v3913
    %v3915 = vpop.xlane.xlu0 %3914
    %v3916 = vsel %vm2937, %v2879, 0.0
    %3917 = vadd.xlane.f32.xlu0 %v3916
    %v3918 = vpop.xlane.xlu0 %3917
    %v3919 = vsel %vm2937, %v2880, 0.0
    %3920 = vadd.xlane.f32.xlu0 %v3919
    %v3921 = vpop.xlane.xlu0 %3920
    %v3922 = vsel %vm2937, %v2881, 0.0
    %3923 = vadd.xlane.f32.xlu0 %v3922
    %v3924 = vpop.xlane.xlu0 %3923
    %v3925 = vsel %vm2937, %v2882, 0.0
    %3926 = vadd.xlane.f32.xlu0 %v3925
    %v3927 = vpop.xlane.xlu0 %3926
    %v3928 = vsel %vm2937, %v2883, 0.0
    %3929 = vadd.xlane.f32.xlu0 %v3928
    %v3930 = vpop.xlane.xlu0 %3929
    %v3931 = vsel %vm2937, %v2884, 0.0
    %3932 = vadd.xlane.f32.xlu0 %v3931
    %v3933 = vpop.xlane.xlu0 %3932
    %v3934 = vsel %vm2937, %v2885, 0.0
    %3935 = vadd.xlane.f32.xlu0 %v3934
    %v3936 = vpop.xlane.xlu0 %3935
    %v3937 = vsel %vm2937, %v2886, 0.0
    %3938 = vadd.xlane.f32.xlu0 %v3937
    %v3939 = vpop.xlane.xlu0 %3938
    %v3940 = vsel %vm2937, %v2887, 0.0
    %3941 = vadd.xlane.f32.xlu0 %v3940
    %v3942 = vpop.xlane.xlu0 %3941
    %v3943 = vsel %vm2937, %v2888, 0.0
    %3944 = vadd.xlane.f32.xlu0 %v3943
    %v3945 = vpop.xlane.xlu0 %3944
    %v3946 = vsel %vm2937, %v2889, 0.0
    %3947 = vadd.xlane.f32.xlu0 %v3946
    %v3948 = vpop.xlane.xlu0 %3947
    %v3949 = vsel %vm2937, %v2890, 0.0
    %3950 = vadd.xlane.f32.xlu0 %v3949
    %v3951 = vpop.xlane.xlu0 %3950
    %v3952 = vsel %vm2937, %v2891, 0.0
    %3953 = vadd.xlane.f32.xlu0 %v3952
    %v3954 = vpop.xlane.xlu0 %3953
    %v3955 = vsel %vm2937, %v2892, 0.0
    %3956 = vadd.xlane.f32.xlu0 %v3955
    %v3957 = vpop.xlane.xlu0 %3956
    %v3958 = vsel %vm2937, %v2893, 0.0
    %3959 = vadd.xlane.f32.xlu0 %v3958
    %v3960 = vpop.xlane.xlu0 %3959
    %v3961 = vsel %vm2937, %v2894, 0.0
    %3962 = vadd.xlane.f32.xlu0 %v3961
    %v3963 = vpop.xlane.xlu0 %3962
    %v3964 = vsel %vm2937, %v2895, 0.0
    %3965 = vadd.xlane.f32.xlu0 %v3964
    %v3966 = vpop.xlane.xlu0 %3965
    %v3967 = vsel %vm2937, %v2896, 0.0
    %3968 = vadd.xlane.f32.xlu0 %v3967
    %v3969 = vpop.xlane.xlu0 %3968
    %v3970 = vsel %vm2937, %v2897, 0.0
    %3971 = vadd.xlane.f32.xlu0 %v3970
    %v3972 = vpop.xlane.xlu0 %3971
    %v3973 = vsel %vm2937, %v2898, 0.0
    %3974 = vadd.xlane.f32.xlu0 %v3973
    %v3975 = vpop.xlane.xlu0 %3974
    %v3976 = vsel %vm2937, %v2899, 0.0
    %3977 = vadd.xlane.f32.xlu0 %v3976
    %v3978 = vpop.xlane.xlu0 %3977
    %v3979 = vsel %vm2937, %v2900, 0.0
    %3980 = vadd.xlane.f32.xlu0 %v3979
    %v3981 = vpop.xlane.xlu0 %3980
    %v3982 = vsel %vm2937, %v2901, 0.0
    %3983 = vadd.xlane.f32.xlu0 %v3982
    %v3984 = vpop.xlane.xlu0 %3983
    %v3985 = vsel %vm2937, %v2902, 0.0
    %3986 = vadd.xlane.f32.xlu0 %v3985
    %v3987 = vpop.xlane.xlu0 %3986
    %v3988 = vsel %vm2937, %v2903, 0.0
    %3989 = vadd.xlane.f32.xlu0 %v3988
    %v3990 = vpop.xlane.xlu0 %3989
    %v3991 = vsel %vm2937, %v2904, 0.0
    %3992 = vadd.xlane.f32.xlu0 %v3991
    %v3993 = vpop.xlane.xlu0 %3992
    %v3994 = vsel %vm2937, %v2905, 0.0
    %3995 = vadd.xlane.f32.xlu0 %v3994
    %v3996 = vpop.xlane.xlu0 %3995
    %v3997 = vsel %vm2937, %v2906, 0.0
    %3998 = vadd.xlane.f32.xlu0 %v3997
    %v3999 = vpop.xlane.xlu0 %3998
    %v4000 = vsel %vm2937, %v2907, 0.0
    %4001 = vadd.xlane.f32.xlu0 %v4000
    %v4002 = vpop.xlane.xlu0 %4001
    %v4003 = vsel %vm2937, %v2908, 0.0
    %4004 = vadd.xlane.f32.xlu0 %v4003
    %v4005 = vpop.xlane.xlu0 %4004
    %v4006 = vsel %vm2937, %v2909, 0.0
    %4007 = vadd.xlane.f32.xlu0 %v4006
    %v4008 = vpop.xlane.xlu0 %4007
    %v4009 = vsel %vm2937, %v2910, 0.0
    %4010 = vadd.xlane.f32.xlu0 %v4009
    %v4011 = vpop.xlane.xlu0 %4010
    %v4012 = vsel %vm2937, %v2911, 0.0
    %4013 = vadd.xlane.f32.xlu0 %v4012
    %v4014 = vpop.xlane.xlu0 %4013
    %v4015 = vsel %vm2937, %v2912, 0.0
    %4016 = vadd.xlane.f32.xlu0 %v4015
    %v4017 = vpop.xlane.xlu0 %4016
    %v4018 = vsel %vm2937, %v2913, 0.0
    %4019 = vadd.xlane.f32.xlu0 %v4018
    %v4020 = vpop.xlane.xlu0 %4019
    %v4021 = vsel %vm2937, %v2914, 0.0
    %4022 = vadd.xlane.f32.xlu0 %v4021
    %v4023 = vpop.xlane.xlu0 %4022
    %v4024 = vsel %vm2937, %v2915, 0.0
    %4025 = vadd.xlane.f32.xlu0 %v4024
    %v4026 = vpop.xlane.xlu0 %4025
    %v4027 = vsel %vm2937, %v2916, 0.0
    %4028 = vadd.xlane.f32.xlu0 %v4027
    %v4029 = vpop.xlane.xlu0 %4028
    %v4030 = vsel %vm2937, %v2917, 0.0
    %4031 = vadd.xlane.f32.xlu0 %v4030
    %v4032 = vpop.xlane.xlu0 %4031
    %v4033 = vsel %vm2937, %v2918, 0.0
    %4034 = vadd.xlane.f32.xlu0 %v4033
    %v4035 = vpop.xlane.xlu0 %4034
    %v4036 = vsel %vm2937, %v2919, 0.0
    %4037 = vadd.xlane.f32.xlu0 %v4036
    %v4038 = vpop.xlane.xlu0 %4037
    %v4039 = vsel %vm2937, %v2920, 0.0
    %4040 = vadd.xlane.f32.xlu0 %v4039
    %v4041 = vpop.xlane.xlu0 %4040
    %v4042 = vsel %vm2937, %v2921, 0.0
    %4043 = vadd.xlane.f32.xlu0 %v4042
    %v4044 = vpop.xlane.xlu0 %4043
    %v4045 = vsel %vm2937, %v2922, 0.0
    %4046 = vadd.xlane.f32.xlu0 %v4045
    %v4047 = vpop.xlane.xlu0 %4046
    %v4048 = vsel %vm2937, %v2923, 0.0
    %4049 = vadd.xlane.f32.xlu0 %v4048
    %v4050 = vpop.xlane.xlu0 %4049
    %v4051 = vsel %vm2937, %v2924, 0.0
    %4052 = vadd.xlane.f32.xlu0 %v4051
    %v4053 = vpop.xlane.xlu0 %4052
    %v4054 = vsel %vm2937, %v2925, 0.0
    %4055 = vadd.xlane.f32.xlu0 %v4054
    %v4056 = vpop.xlane.xlu0 %4055
    %v4057 = vsel %vm2937, %v2926, 0.0
    %4058 = vadd.xlane.f32.xlu0 %v4057
    %v4059 = vpop.xlane.xlu0 %4058
    %v4060 = vsel %vm2937, %v2927, 0.0
    %4061 = vadd.xlane.f32.xlu0 %v4060
    %v4062 = vpop.xlane.xlu0 %4061
    %v4063 = vsel %vm2937, %v2928, 0.0
    %4064 = vadd.xlane.f32.xlu0 %v4063
    %v4065 = vpop.xlane.xlu0 %4064
    %v4066 = vsel %vm2937, %v2929, 0.0
    %4067 = vadd.xlane.f32.xlu0 %v4066
    %v4068 = vpop.xlane.xlu0 %4067
    %v4069 = vsel %vm2937, %v2930, 0.0
    %4070 = vadd.xlane.f32.xlu0 %v4069
    %v4071 = vpop.xlane.xlu0 %4070
    %v4072 = vsel %vm2937, %v2931, 0.0
    %4073 = vadd.xlane.f32.xlu0 %v4072
    %v4074 = vpop.xlane.xlu0 %4073
    %v4075 = vsel %vm2937, %v2932, 0.0
    %4076 = vadd.xlane.f32.xlu0 %v4075
    %v4077 = vpop.xlane.xlu0 %4076
    %v4078 = vsel %vm2937, %v2933, 0.0
    %4079 = vadd.xlane.f32.xlu0 %v4078
    %v4080 = vpop.xlane.xlu0 %4079
    %v4081 = vsel %vm2937, %v2934, 0.0
    %4082 = vadd.xlane.f32.xlu0 %v4081
    %v4083 = vpop.xlane.xlu0 %4082
    %v4084 = vsel %vm2937, %v2935, 0.0
    %4085 = vadd.xlane.f32.xlu0 %v4084
    %v4086 = vpop.xlane.xlu0 %4085
    %v4087 = vsel %vm2937, %v2936, 0.0
    %4088 = vadd.xlane.f32.xlu0 %v4087
    %v4089 = vpop.xlane.xlu0 %4088
    %s4090 = sld [smem:[#allocation2]]
    %v4091 = vstv %s4090
    %v4092 = vadd.f32 %v2940, %v4091
    %v4093 = vadd.f32 %v2943, %v4091
    %v4094 = vadd.f32 %v2946, %v4091
    %v4095 = vadd.f32 %v2949, %v4091
    %v4096 = vadd.f32 %v2952, %v4091
    %v4097 = vadd.f32 %v2955, %v4091
    %v4098 = vadd.f32 %v2958, %v4091
    %v4099 = vadd.f32 %v2961, %v4091
    %v4100 = vadd.f32 %v2964, %v4091
    %v4101 = vadd.f32 %v2967, %v4091
    %v4102 = vadd.f32 %v2970, %v4091
    %v4103 = vadd.f32 %v2973, %v4091
    %v4104 = vadd.f32 %v2976, %v4091
    %v4105 = vadd.f32 %v2979, %v4091
    %v4106 = vadd.f32 %v2982, %v4091
    %v4107 = vadd.f32 %v2985, %v4091
    %v4108 = vadd.f32 %v2988, %v4091
    %v4109 = vadd.f32 %v2991, %v4091
    %v4110 = vadd.f32 %v2994, %v4091
    %v4111 = vadd.f32 %v2997, %v4091
    %v4112 = vadd.f32 %v3000, %v4091
    %v4113 = vadd.f32 %v3003, %v4091
    %v4114 = vadd.f32 %v3006, %v4091
    %v4115 = vadd.f32 %v3009, %v4091
    %v4116 = vadd.f32 %v3012, %v4091
    %v4117 = vadd.f32 %v3015, %v4091
    %v4118 = vadd.f32 %v3018, %v4091
    %v4119 = vadd.f32 %v3021, %v4091
    %v4120 = vadd.f32 %v3024, %v4091
    %v4121 = vadd.f32 %v3027, %v4091
    %v4122 = vadd.f32 %v3030, %v4091
    %v4123 = vadd.f32 %v3033, %v4091
    %v4124 = vadd.f32 %v3036, %v4091
    %v4125 = vadd.f32 %v3039, %v4091
    %v4126 = vadd.f32 %v3042, %v4091
    %v4127 = vadd.f32 %v3045, %v4091
    %v4128 = vadd.f32 %v3048, %v4091
    %v4129 = vadd.f32 %v3051, %v4091
    %v4130 = vadd.f32 %v3054, %v4091
    %v4131 = vadd.f32 %v3057, %v4091
    %v4132 = vadd.f32 %v3060, %v4091
    %v4133 = vadd.f32 %v3063, %v4091
    %v4134 = vadd.f32 %v3066, %v4091
    %v4135 = vadd.f32 %v3069, %v4091
    %v4136 = vadd.f32 %v3072, %v4091
    %v4137 = vadd.f32 %v3075, %v4091
    %v4138 = vadd.f32 %v3078, %v4091
    %v4139 = vadd.f32 %v3081, %v4091
    %v4140 = vadd.f32 %v3084, %v4091
    %v4141 = vadd.f32 %v3087, %v4091
    %v4142 = vadd.f32 %v3090, %v4091
    %v4143 = vadd.f32 %v3093, %v4091
    %v4144 = vadd.f32 %v3096, %v4091
    %v4145 = vadd.f32 %v3099, %v4091
    %v4146 = vadd.f32 %v3102, %v4091
    %v4147 = vadd.f32 %v3105, %v4091
    %v4148 = vadd.f32 %v3108, %v4091
    %v4149 = vadd.f32 %v3111, %v4091
    %v4150 = vadd.f32 %v3114, %v4091
    %v4151 = vadd.f32 %v3117, %v4091
    %v4152 = vadd.f32 %v3120, %v4091
    %v4153 = vadd.f32 %v3123, %v4091
    %v4154 = vadd.f32 %v3126, %v4091
    %v4155 = vadd.f32 %v3129, %v4091
    %v4156 = vadd.f32 %v3132, %v4091
    %v4157 = vadd.f32 %v3135, %v4091
    %v4158 = vadd.f32 %v3138, %v4091
    %v4159 = vadd.f32 %v3141, %v4091
    %v4160 = vadd.f32 %v3144, %v4091
    %v4161 = vadd.f32 %v3147, %v4091
    %v4162 = vadd.f32 %v3150, %v4091
    %v4163 = vadd.f32 %v3153, %v4091
    %v4164 = vadd.f32 %v3156, %v4091
    %v4165 = vadd.f32 %v3159, %v4091
    %v4166 = vadd.f32 %v3162, %v4091
    %v4167 = vadd.f32 %v3165, %v4091
    %v4168 = vadd.f32 %v3168, %v4091
    %v4169 = vadd.f32 %v3171, %v4091
    %v4170 = vadd.f32 %v3174, %v4091
    %v4171 = vadd.f32 %v3177, %v4091
    %v4172 = vadd.f32 %v3180, %v4091
    %v4173 = vadd.f32 %v3183, %v4091
    %v4174 = vadd.f32 %v3186, %v4091
    %v4175 = vadd.f32 %v3189, %v4091
    %v4176 = vadd.f32 %v3192, %v4091
    %v4177 = vadd.f32 %v3195, %v4091
    %v4178 = vadd.f32 %v3198, %v4091
    %v4179 = vadd.f32 %v3201, %v4091
    %v4180 = vadd.f32 %v3204, %v4091
    %v4181 = vadd.f32 %v3207, %v4091
    %v4182 = vadd.f32 %v3210, %v4091
    %v4183 = vadd.f32 %v3213, %v4091
    %v4184 = vadd.f32 %v3216, %v4091
    %v4185 = vadd.f32 %v3219, %v4091
    %v4186 = vadd.f32 %v3222, %v4091
    %v4187 = vadd.f32 %v3225, %v4091
    %v4188 = vadd.f32 %v3228, %v4091
    %v4189 = vadd.f32 %v3231, %v4091
    %v4190 = vadd.f32 %v3234, %v4091
    %v4191 = vadd.f32 %v3237, %v4091
    %v4192 = vadd.f32 %v3240, %v4091
    %v4193 = vadd.f32 %v3243, %v4091
    %v4194 = vadd.f32 %v3246, %v4091
    %v4195 = vadd.f32 %v3249, %v4091
    %v4196 = vadd.f32 %v3252, %v4091
    %v4197 = vadd.f32 %v3255, %v4091
    %v4198 = vadd.f32 %v3258, %v4091
    %v4199 = vadd.f32 %v3261, %v4091
    %v4200 = vadd.f32 %v3264, %v4091
    %v4201 = vadd.f32 %v3267, %v4091
    %v4202 = vadd.f32 %v3270, %v4091
    %v4203 = vadd.f32 %v3273, %v4091
    %v4204 = vadd.f32 %v3276, %v4091
    %v4205 = vadd.f32 %v3279, %v4091
    %v4206 = vadd.f32 %v3282, %v4091
    %v4207 = vadd.f32 %v3285, %v4091
    %v4208 = vadd.f32 %v3288, %v4091
    %v4209 = vadd.f32 %v3291, %v4091
    %v4210 = vadd.f32 %v3294, %v4091
    %v4211 = vadd.f32 %v3297, %v4091
    %v4212 = vadd.f32 %v3300, %v4091
    %v4213 = vadd.f32 %v3303, %v4091
    %v4214 = vadd.f32 %v3306, %v4091
    %v4215 = vadd.f32 %v3309, %v4091
    %v4216 = vadd.f32 %v3312, %v4091
    %v4217 = vadd.f32 %v3315, %v4091
    %v4218 = vadd.f32 %v3318, %v4091
    %v4219 = vadd.f32 %v3321, %v4091
    %v4220 = vadd.f32 %v3324, %v4091
    %v4221 = vadd.f32 %v3327, %v4091
    %v4222 = vadd.f32 %v3330, %v4091
    %v4223 = vadd.f32 %v3333, %v4091
    %v4224 = vadd.f32 %v3336, %v4091
    %v4225 = vadd.f32 %v3339, %v4091
    %v4226 = vadd.f32 %v3342, %v4091
    %v4227 = vadd.f32 %v3345, %v4091
    %v4228 = vadd.f32 %v3348, %v4091
    %v4229 = vadd.f32 %v3351, %v4091
    %v4230 = vadd.f32 %v3354, %v4091
    %v4231 = vadd.f32 %v3357, %v4091
    %v4232 = vadd.f32 %v3360, %v4091
    %v4233 = vadd.f32 %v3363, %v4091
    %v4234 = vadd.f32 %v3366, %v4091
    %v4235 = vadd.f32 %v3369, %v4091
    %v4236 = vadd.f32 %v3372, %v4091
    %v4237 = vadd.f32 %v3375, %v4091
    %v4238 = vadd.f32 %v3378, %v4091
    %v4239 = vadd.f32 %v3381, %v4091
    %v4240 = vadd.f32 %v3384, %v4091
    %v4241 = vadd.f32 %v3387, %v4091
    %v4242 = vadd.f32 %v3390, %v4091
    %v4243 = vadd.f32 %v3393, %v4091
    %v4244 = vadd.f32 %v3396, %v4091
    %v4245 = vadd.f32 %v3399, %v4091
    %v4246 = vadd.f32 %v3402, %v4091
    %v4247 = vadd.f32 %v3405, %v4091
    %v4248 = vadd.f32 %v3408, %v4091
    %v4249 = vadd.f32 %v3411, %v4091
    %v4250 = vadd.f32 %v3414, %v4091
    %v4251 = vadd.f32 %v3417, %v4091
    %v4252 = vadd.f32 %v3420, %v4091
    %v4253 = vadd.f32 %v3423, %v4091
    %v4254 = vadd.f32 %v3426, %v4091
    %v4255 = vadd.f32 %v3429, %v4091
    %v4256 = vadd.f32 %v3432, %v4091
    %v4257 = vadd.f32 %v3435, %v4091
    %v4258 = vadd.f32 %v3438, %v4091
    %v4259 = vadd.f32 %v3441, %v4091
    %v4260 = vadd.f32 %v3444, %v4091
    %v4261 = vadd.f32 %v3447, %v4091
    %v4262 = vadd.f32 %v3450, %v4091
    %v4263 = vadd.f32 %v3453, %v4091
    %v4264 = vadd.f32 %v3456, %v4091
    %v4265 = vadd.f32 %v3459, %v4091
    %v4266 = vadd.f32 %v3462, %v4091
    %v4267 = vadd.f32 %v3465, %v4091
    %v4268 = vadd.f32 %v3468, %v4091
    %v4269 = vadd.f32 %v3471, %v4091
    %v4270 = vadd.f32 %v3474, %v4091
    %v4271 = vadd.f32 %v3477, %v4091
    %v4272 = vadd.f32 %v3480, %v4091
    %v4273 = vadd.f32 %v3483, %v4091
    %v4274 = vadd.f32 %v3486, %v4091
    %v4275 = vadd.f32 %v3489, %v4091
    %v4276 = vadd.f32 %v3492, %v4091
    %v4277 = vadd.f32 %v3495, %v4091
    %v4278 = vadd.f32 %v3498, %v4091
    %v4279 = vadd.f32 %v3501, %v4091
    %v4280 = vadd.f32 %v3504, %v4091
    %v4281 = vadd.f32 %v3507, %v4091
    %v4282 = vadd.f32 %v3510, %v4091
    %v4283 = vadd.f32 %v3513, %v4091
    %v4284 = vadd.f32 %v3516, %v4091
    %v4285 = vadd.f32 %v3519, %v4091
    %v4286 = vadd.f32 %v3522, %v4091
    %v4287 = vadd.f32 %v3525, %v4091
    %v4288 = vadd.f32 %v3528, %v4091
    %v4289 = vadd.f32 %v3531, %v4091
    %v4290 = vadd.f32 %v3534, %v4091
    %v4291 = vadd.f32 %v3537, %v4091
    %v4292 = vadd.f32 %v3540, %v4091
    %v4293 = vadd.f32 %v3543, %v4091
    %v4294 = vadd.f32 %v3546, %v4091
    %v4295 = vadd.f32 %v3549, %v4091
    %v4296 = vadd.f32 %v3552, %v4091
    %v4297 = vadd.f32 %v3555, %v4091
    %v4298 = vadd.f32 %v3558, %v4091
    %v4299 = vadd.f32 %v3561, %v4091
    %v4300 = vadd.f32 %v3564, %v4091
    %v4301 = vadd.f32 %v3567, %v4091
    %v4302 = vadd.f32 %v3570, %v4091
    %v4303 = vadd.f32 %v3573, %v4091
    %v4304 = vadd.f32 %v3576, %v4091
    %v4305 = vadd.f32 %v3579, %v4091
    %v4306 = vadd.f32 %v3582, %v4091
    %v4307 = vadd.f32 %v3585, %v4091
    %v4308 = vadd.f32 %v3588, %v4091
    %v4309 = vadd.f32 %v3591, %v4091
    %v4310 = vadd.f32 %v3594, %v4091
    %v4311 = vadd.f32 %v3597, %v4091
    %v4312 = vadd.f32 %v3600, %v4091
    %v4313 = vadd.f32 %v3603, %v4091
    %v4314 = vadd.f32 %v3606, %v4091
    %v4315 = vadd.f32 %v3609, %v4091
    %v4316 = vadd.f32 %v3612, %v4091
    %v4317 = vadd.f32 %v3615, %v4091
    %v4318 = vadd.f32 %v3618, %v4091
    %v4319 = vadd.f32 %v3621, %v4091
    %v4320 = vadd.f32 %v3624, %v4091
    %v4321 = vadd.f32 %v3627, %v4091
    %v4322 = vadd.f32 %v3630, %v4091
    %v4323 = vadd.f32 %v3633, %v4091
    %v4324 = vadd.f32 %v3636, %v4091
    %v4325 = vadd.f32 %v3639, %v4091
    %v4326 = vadd.f32 %v3642, %v4091
    %v4327 = vadd.f32 %v3645, %v4091
    %v4328 = vadd.f32 %v3648, %v4091
    %v4329 = vadd.f32 %v3651, %v4091
    %v4330 = vadd.f32 %v3654, %v4091
    %v4331 = vadd.f32 %v3657, %v4091
    %v4332 = vadd.f32 %v3660, %v4091
    %v4333 = vadd.f32 %v3663, %v4091
    %v4334 = vadd.f32 %v3666, %v4091
    %v4335 = vadd.f32 %v3669, %v4091
    %v4336 = vadd.f32 %v3672, %v4091
    %v4337 = vadd.f32 %v3675, %v4091
    %v4338 = vadd.f32 %v3678, %v4091
    %v4339 = vadd.f32 %v3681, %v4091
    %v4340 = vadd.f32 %v3684, %v4091
    %v4341 = vadd.f32 %v3687, %v4091
    %v4342 = vadd.f32 %v3690, %v4091
    %v4343 = vadd.f32 %v3693, %v4091
    %v4344 = vadd.f32 %v3696, %v4091
    %v4345 = vadd.f32 %v3699, %v4091
    %v4346 = vadd.f32 %v3702, %v4091
    %v4347 = vadd.f32 %v3705, %v4091
    %v4348 = vadd.f32 %v3708, %v4091
    %v4349 = vadd.f32 %v3711, %v4091
    %v4350 = vadd.f32 %v3714, %v4091
    %v4351 = vadd.f32 %v3717, %v4091
    %v4352 = vadd.f32 %v3720, %v4091
    %v4353 = vadd.f32 %v3723, %v4091
    %v4354 = vadd.f32 %v3726, %v4091
    %v4355 = vadd.f32 %v3729, %v4091
    %v4356 = vadd.f32 %v3732, %v4091
    %v4357 = vadd.f32 %v3735, %v4091
    %v4358 = vadd.f32 %v3738, %v4091
    %v4359 = vadd.f32 %v3741, %v4091
    %v4360 = vadd.f32 %v3744, %v4091
    %v4361 = vadd.f32 %v3747, %v4091
    %v4362 = vadd.f32 %v3750, %v4091
    %v4363 = vadd.f32 %v3753, %v4091
    %v4364 = vadd.f32 %v3756, %v4091
    %v4365 = vadd.f32 %v3759, %v4091
    %v4366 = vadd.f32 %v3762, %v4091
    %v4367 = vadd.f32 %v3765, %v4091
    %v4368 = vadd.f32 %v3768, %v4091
    %v4369 = vadd.f32 %v3771, %v4091
    %v4370 = vadd.f32 %v3774, %v4091
    %v4371 = vadd.f32 %v3777, %v4091
    %v4372 = vadd.f32 %v3780, %v4091
    %v4373 = vadd.f32 %v3783, %v4091
    %v4374 = vadd.f32 %v3786, %v4091
    %v4375 = vadd.f32 %v3789, %v4091
    %v4376 = vadd.f32 %v3792, %v4091
    %v4377 = vadd.f32 %v3795, %v4091
    %v4378 = vadd.f32 %v3798, %v4091
    %v4379 = vadd.f32 %v3801, %v4091
    %v4380 = vadd.f32 %v3804, %v4091
    %v4381 = vadd.f32 %v3807, %v4091
    %v4382 = vadd.f32 %v3810, %v4091
    %v4383 = vadd.f32 %v3813, %v4091
    %v4384 = vadd.f32 %v3816, %v4091
    %v4385 = vadd.f32 %v3819, %v4091
    %v4386 = vadd.f32 %v3822, %v4091
    %v4387 = vadd.f32 %v3825, %v4091
    %v4388 = vadd.f32 %v3828, %v4091
    %v4389 = vadd.f32 %v3831, %v4091
    %v4390 = vadd.f32 %v3834, %v4091
    %v4391 = vadd.f32 %v3837, %v4091
    %v4392 = vadd.f32 %v3840, %v4091
    %v4393 = vadd.f32 %v3843, %v4091
    %v4394 = vadd.f32 %v3846, %v4091
    %v4395 = vadd.f32 %v3849, %v4091
    %v4396 = vadd.f32 %v3852, %v4091
    %v4397 = vadd.f32 %v3855, %v4091
    %v4398 = vadd.f32 %v3858, %v4091
    %v4399 = vadd.f32 %v3861, %v4091
    %v4400 = vadd.f32 %v3864, %v4091
    %v4401 = vadd.f32 %v3867, %v4091
    %v4402 = vadd.f32 %v3870, %v4091
    %v4403 = vadd.f32 %v3873, %v4091
    %v4404 = vadd.f32 %v3876, %v4091
    %v4405 = vadd.f32 %v3879, %v4091
    %v4406 = vadd.f32 %v3882, %v4091
    %v4407 = vadd.f32 %v3885, %v4091
    %v4408 = vadd.f32 %v3888, %v4091
    %v4409 = vadd.f32 %v3891, %v4091
    %v4410 = vadd.f32 %v3894, %v4091
    %v4411 = vadd.f32 %v3897, %v4091
    %v4412 = vadd.f32 %v3900, %v4091
    %v4413 = vadd.f32 %v3903, %v4091
    %v4414 = vadd.f32 %v3906, %v4091
    %v4415 = vadd.f32 %v3909, %v4091
    %v4416 = vadd.f32 %v3912, %v4091
    %v4417 = vadd.f32 %v3915, %v4091
    %v4418 = vadd.f32 %v3918, %v4091
    %v4419 = vadd.f32 %v3921, %v4091
    %v4420 = vadd.f32 %v3924, %v4091
    %v4421 = vadd.f32 %v3927, %v4091
    %v4422 = vadd.f32 %v3930, %v4091
    %v4423 = vadd.f32 %v3933, %v4091
    %v4424 = vadd.f32 %v3936, %v4091
    %v4425 = vadd.f32 %v3939, %v4091
    %v4426 = vadd.f32 %v3942, %v4091
    %v4427 = vadd.f32 %v3945, %v4091
    %v4428 = vadd.f32 %v3948, %v4091
    %v4429 = vadd.f32 %v3951, %v4091
    %v4430 = vadd.f32 %v3954, %v4091
    %v4431 = vadd.f32 %v3957, %v4091
    %v4432 = vadd.f32 %v3960, %v4091
    %v4433 = vadd.f32 %v3963, %v4091
    %v4434 = vadd.f32 %v3966, %v4091
    %v4435 = vadd.f32 %v3969, %v4091
    %v4436 = vadd.f32 %v3972, %v4091
    %v4437 = vadd.f32 %v3975, %v4091
    %v4438 = vadd.f32 %v3978, %v4091
    %v4439 = vadd.f32 %v3981, %v4091
    %v4440 = vadd.f32 %v3984, %v4091
    %v4441 = vadd.f32 %v3987, %v4091
    %v4442 = vadd.f32 %v3990, %v4091
    %v4443 = vadd.f32 %v3993, %v4091
    %v4444 = vadd.f32 %v3996, %v4091
    %v4445 = vadd.f32 %v3999, %v4091
    %v4446 = vadd.f32 %v4002, %v4091
    %v4447 = vadd.f32 %v4005, %v4091
    %v4448 = vadd.f32 %v4008, %v4091
    %v4449 = vadd.f32 %v4011, %v4091
    %v4450 = vadd.f32 %v4014, %v4091
    %v4451 = vadd.f32 %v4017, %v4091
    %v4452 = vadd.f32 %v4020, %v4091
    %v4453 = vadd.f32 %v4023, %v4091
    %v4454 = vadd.f32 %v4026, %v4091
    %v4455 = vadd.f32 %v4029, %v4091
    %v4456 = vadd.f32 %v4032, %v4091
    %v4457 = vadd.f32 %v4035, %v4091
    %v4458 = vadd.f32 %v4038, %v4091
    %v4459 = vadd.f32 %v4041, %v4091
    %v4460 = vadd.f32 %v4044, %v4091
    %v4461 = vadd.f32 %v4047, %v4091
    %v4462 = vadd.f32 %v4050, %v4091
    %v4463 = vadd.f32 %v4053, %v4091
    %v4464 = vadd.f32 %v4056, %v4091
    %v4465 = vadd.f32 %v4059, %v4091
    %v4466 = vadd.f32 %v4062, %v4091
    %v4467 = vadd.f32 %v4065, %v4091
    %v4468 = vadd.f32 %v4068, %v4091
    %v4469 = vadd.f32 %v4071, %v4091
    %v4470 = vadd.f32 %v4074, %v4091
    %v4471 = vadd.f32 %v4077, %v4091
    %v4472 = vadd.f32 %v4080, %v4091
    %v4473 = vadd.f32 %v4083, %v4091
    %v4474 = vadd.f32 %v4086, %v4091
    %v4475 = vadd.f32 %v4089, %v4091
    %v4492 = vlaneseq
    %v4493 = vand.u32 %v4492, 127
    %v4494 = vperm.slane %v4092, %v4493
    %v4495 = vadd.s32 %v4493, 4294967288
    %v4496 = vperm.slane %v4093, %v4495
    %vm4497 = vcmask 130112
    %v4498 = vsel %vm4497, %v4496, %v4494
    %v4499 = vadd.s32 %v4493, 4294967280
    %v4500 = vperm.slane %v4094, %v4499
    %vm4501 = vcmask 195712
    %v4502 = vsel %vm4501, %v4500, %v4498
    %v4503 = vadd.s32 %v4493, 4294967272
    %v4504 = vperm.slane %v4095, %v4503
    %vm4505 = vcmask 261312
    %v4506 = vsel %vm4505, %v4504, %v4502
    %v4507 = vadd.s32 %v4493, 4294967264
    %v4508 = vperm.slane %v4096, %v4507
    %vm4509 = vcmask 326912
    %v4510 = vsel %vm4509, %v4508, %v4506
    %v4511 = vadd.s32 %v4493, 4294967256
    %v4512 = vperm.slane %v4097, %v4511
    %vm4513 = vcmask 392512
    %v4514 = vsel %vm4513, %v4512, %v4510
    %v4515 = vadd.s32 %v4493, 4294967248
    %v4516 = vperm.slane %v4098, %v4515
    %vm4517 = vcmask 458112
    %v4518 = vsel %vm4517, %v4516, %v4514
    %v4519 = vadd.s32 %v4493, 4294967240
    %v4520 = vperm.slane %v4099, %v4519
    %vm4521 = vcmask 523712
    %v4522 = vsel %vm4521, %v4520, %v4518
    %v4523 = vadd.s32 %v4493, 4294967232
    %v4524 = vperm.slane %v4100, %v4523
    %vm4525 = vcmask 589312
    %v4526 = vsel %vm4525, %v4524, %v4522
    %v4527 = vadd.s32 %v4493, 4294967224
    %v4528 = vperm.slane %v4101, %v4527
    %vm4529 = vcmask 654912
    %v4530 = vsel %vm4529, %v4528, %v4526
    %v4531 = vadd.s32 %v4493, 4294967216
    %v4532 = vperm.slane %v4102, %v4531
    %vm4533 = vcmask 720512
    %v4534 = vsel %vm4533, %v4532, %v4530
    %v4535 = vadd.s32 %v4493, 4294967208
    %v4536 = vperm.slane %v4103, %v4535
    %vm4537 = vcmask 786112
    %v4538 = vsel %vm4537, %v4536, %v4534
    %v4539 = vadd.s32 %v4493, 4294967200
    %v4540 = vperm.slane %v4104, %v4539
    %vm4541 = vcmask 851712
    %v4542 = vsel %vm4541, %v4540, %v4538
    %v4543 = vadd.s32 %v4493, 4294967192
    %v4544 = vperm.slane %v4105, %v4543
    %vm4545 = vcmask 917312
    %v4546 = vsel %vm4545, %v4544, %v4542
    %v4547 = vadd.s32 %v4493, 4294967184
    %v4548 = vperm.slane %v4106, %v4547
    %vm4549 = vcmask 982912
    %v4550 = vsel %vm4549, %v4548, %v4546
    %v4551 = vadd.s32 %v4493, 4294967176
    %v4552 = vperm.slane %v4107, %v4551
    %vm4553 = vcmask 1048512
    %v4554 = vsel %vm4553, %v4552, %v4550
    %4555 = vst [vmem:[#allocation3] ss:$24 sm:$0x1] %v4554
    %4556 = vst [vmem:[#allocation3] ss:$24 sm:$0x0] %v4554
    %v4573 = vperm.slane %v4108, %v4493
    %v4574 = vperm.slane %v4109, %v4495
    %v4575 = vsel %vm4497, %v4574, %v4573
    %v4576 = vperm.slane %v4110, %v4499
    %v4577 = vsel %vm4501, %v4576, %v4575
    %v4578 = vperm.slane %v4111, %v4503
    %v4579 = vsel %vm4505, %v4578, %v4577
    %v4580 = vperm.slane %v4112, %v4507
    %v4581 = vsel %vm4509, %v4580, %v4579
    %v4582 = vperm.slane %v4113, %v4511
    %v4583 = vsel %vm4513, %v4582, %v4581
    %v4584 = vperm.slane %v4114, %v4515
    %v4585 = vsel %vm4517, %v4584, %v4583
    %v4586 = vperm.slane %v4115, %v4519
    %v4587 = vsel %vm4521, %v4586, %v4585
    %v4588 = vperm.slane %v4116, %v4523
    %v4589 = vsel %vm4525, %v4588, %v4587
    %v4590 = vperm.slane %v4117, %v4527
    %v4591 = vsel %vm4529, %v4590, %v4589
    %v4592 = vperm.slane %v4118, %v4531
    %v4593 = vsel %vm4533, %v4592, %v4591
    %v4594 = vperm.slane %v4119, %v4535
    %v4595 = vsel %vm4537, %v4594, %v4593
    %v4596 = vperm.slane %v4120, %v4539
    %v4597 = vsel %vm4541, %v4596, %v4595
    %v4598 = vperm.slane %v4121, %v4543
    %v4599 = vsel %vm4545, %v4598, %v4597
    %v4600 = vperm.slane %v4122, %v4547
    %v4601 = vsel %vm4549, %v4600, %v4599
    %v4602 = vperm.slane %v4123, %v4551
    %v4603 = vsel %vm4553, %v4602, %v4601
    %s4604 = scalar_lea.vmem [#allocation3], 1
    %4605 = vst [vmem:[%s4604] ss:$24 sm:$0x1] %v4603
    %4606 = vst [vmem:[%s4604] ss:$24 sm:$0x0] %v4603
    %v4623 = vperm.slane %v4124, %v4493
    %v4624 = vperm.slane %v4125, %v4495
    %v4625 = vsel %vm4497, %v4624, %v4623
    %v4626 = vperm.slane %v4126, %v4499
    %v4627 = vsel %vm4501, %v4626, %v4625
    %v4628 = vperm.slane %v4127, %v4503
    %v4629 = vsel %vm4505, %v4628, %v4627
    %v4630 = vperm.slane %v4128, %v4507
    %v4631 = vsel %vm4509, %v4630, %v4629
    %v4632 = vperm.slane %v4129, %v4511
    %v4633 = vsel %vm4513, %v4632, %v4631
    %v4634 = vperm.slane %v4130, %v4515
    %v4635 = vsel %vm4517, %v4634, %v4633
    %v4636 = vperm.slane %v4131, %v4519
    %v4637 = vsel %vm4521, %v4636, %v4635
    %v4638 = vperm.slane %v4132, %v4523
    %v4639 = vsel %vm4525, %v4638, %v4637
    %v4640 = vperm.slane %v4133, %v4527
    %v4641 = vsel %vm4529, %v4640, %v4639
    %v4642 = vperm.slane %v4134, %v4531
    %v4643 = vsel %vm4533, %v4642, %v4641
    %v4644 = vperm.slane %v4135, %v4535
    %v4645 = vsel %vm4537, %v4644, %v4643
    %v4646 = vperm.slane %v4136, %v4539
    %v4647 = vsel %vm4541, %v4646, %v4645
    %v4648 = vperm.slane %v4137, %v4543
    %v4649 = vsel %vm4545, %v4648, %v4647
    %v4650 = vperm.slane %v4138, %v4547
    %v4651 = vsel %vm4549, %v4650, %v4649
    %v4652 = vperm.slane %v4139, %v4551
    %v4653 = vsel %vm4553, %v4652, %v4651
    %s4654 = scalar_lea.vmem [#allocation3], 2
    %4655 = vst [vmem:[%s4654] ss:$24 sm:$0x1] %v4653
    %4656 = vst [vmem:[%s4654] ss:$24 sm:$0x0] %v4653
    %v4673 = vperm.slane %v4140, %v4493
    %v4674 = vperm.slane %v4141, %v4495
    %v4675 = vsel %vm4497, %v4674, %v4673
    %v4676 = vperm.slane %v4142, %v4499
    %v4677 = vsel %vm4501, %v4676, %v4675
    %v4678 = vperm.slane %v4143, %v4503
    %v4679 = vsel %vm4505, %v4678, %v4677
    %v4680 = vperm.slane %v4144, %v4507
    %v4681 = vsel %vm4509, %v4680, %v4679
    %v4682 = vperm.slane %v4145, %v4511
    %v4683 = vsel %vm4513, %v4682, %v4681
    %v4684 = vperm.slane %v4146, %v4515
    %v4685 = vsel %vm4517, %v4684, %v4683
    %v4686 = vperm.slane %v4147, %v4519
    %v4687 = vsel %vm4521, %v4686, %v4685
    %v4688 = vperm.slane %v4148, %v4523
    %v4689 = vsel %vm4525, %v4688, %v4687
    %v4690 = vperm.slane %v4149, %v4527
    %v4691 = vsel %vm4529, %v4690, %v4689
    %v4692 = vperm.slane %v4150, %v4531
    %v4693 = vsel %vm4533, %v4692, %v4691
    %v4694 = vperm.slane %v4151, %v4535
    %v4695 = vsel %vm4537, %v4694, %v4693
    %v4696 = vperm.slane %v4152, %v4539
    %v4697 = vsel %vm4541, %v4696, %v4695
    %v4698 = vperm.slane %v4153, %v4543
    %v4699 = vsel %vm4545, %v4698, %v4697
    %v4700 = vperm.slane %v4154, %v4547
    %v4701 = vsel %vm4549, %v4700, %v4699
    %v4702 = vperm.slane %v4155, %v4551
    %v4703 = vsel %vm4553, %v4702, %v4701
    %s4704 = scalar_lea.vmem [#allocation3], 3
    %4705 = vst [vmem:[%s4704] ss:$24 sm:$0x1] %v4703
    %4706 = vst [vmem:[%s4704] ss:$24 sm:$0x0] %v4703
    %v4723 = vperm.slane %v4156, %v4493
    %v4724 = vperm.slane %v4157, %v4495
    %v4725 = vsel %vm4497, %v4724, %v4723
    %v4726 = vperm.slane %v4158, %v4499
    %v4727 = vsel %vm4501, %v4726, %v4725
    %v4728 = vperm.slane %v4159, %v4503
    %v4729 = vsel %vm4505, %v4728, %v4727
    %v4730 = vperm.slane %v4160, %v4507
    %v4731 = vsel %vm4509, %v4730, %v4729
    %v4732 = vperm.slane %v4161, %v4511
    %v4733 = vsel %vm4513, %v4732, %v4731
    %v4734 = vperm.slane %v4162, %v4515
    %v4735 = vsel %vm4517, %v4734, %v4733
    %v4736 = vperm.slane %v4163, %v4519
    %v4737 = vsel %vm4521, %v4736, %v4735
    %v4738 = vperm.slane %v4164, %v4523
    %v4739 = vsel %vm4525, %v4738, %v4737
    %v4740 = vperm.slane %v4165, %v4527
    %v4741 = vsel %vm4529, %v4740, %v4739
    %v4742 = vperm.slane %v4166, %v4531
    %v4743 = vsel %vm4533, %v4742, %v4741
    %v4744 = vperm.slane %v4167, %v4535
    %v4745 = vsel %vm4537, %v4744, %v4743
    %v4746 = vperm.slane %v4168, %v4539
    %v4747 = vsel %vm4541, %v4746, %v4745
    %v4748 = vperm.slane %v4169, %v4543
    %v4749 = vsel %vm4545, %v4748, %v4747
    %v4750 = vperm.slane %v4170, %v4547
    %v4751 = vsel %vm4549, %v4750, %v4749
    %v4752 = vperm.slane %v4171, %v4551
    %v4753 = vsel %vm4553, %v4752, %v4751
    %s4754 = scalar_lea.vmem [#allocation3], 4
    %4755 = vst [vmem:[%s4754] ss:$24 sm:$0x1] %v4753
    %4756 = vst [vmem:[%s4754] ss:$24 sm:$0x0] %v4753
    %v4773 = vperm.slane %v4172, %v4493
    %v4774 = vperm.slane %v4173, %v4495
    %v4775 = vsel %vm4497, %v4774, %v4773
    %v4776 = vperm.slane %v4174, %v4499
    %v4777 = vsel %vm4501, %v4776, %v4775
    %v4778 = vperm.slane %v4175, %v4503
    %v4779 = vsel %vm4505, %v4778, %v4777
    %v4780 = vperm.slane %v4176, %v4507
    %v4781 = vsel %vm4509, %v4780, %v4779
    %v4782 = vperm.slane %v4177, %v4511
    %v4783 = vsel %vm4513, %v4782, %v4781
    %v4784 = vperm.slane %v4178, %v4515
    %v4785 = vsel %vm4517, %v4784, %v4783
    %v4786 = vperm.slane %v4179, %v4519
    %v4787 = vsel %vm4521, %v4786, %v4785
    %v4788 = vperm.slane %v4180, %v4523
    %v4789 = vsel %vm4525, %v4788, %v4787
    %v4790 = vperm.slane %v4181, %v4527
    %v4791 = vsel %vm4529, %v4790, %v4789
    %v4792 = vperm.slane %v4182, %v4531
    %v4793 = vsel %vm4533, %v4792, %v4791
    %v4794 = vperm.slane %v4183, %v4535
    %v4795 = vsel %vm4537, %v4794, %v4793
    %v4796 = vperm.slane %v4184, %v4539
    %v4797 = vsel %vm4541, %v4796, %v4795
    %v4798 = vperm.slane %v4185, %v4543
    %v4799 = vsel %vm4545, %v4798, %v4797
    %v4800 = vperm.slane %v4186, %v4547
    %v4801 = vsel %vm4549, %v4800, %v4799
    %v4802 = vperm.slane %v4187, %v4551
    %v4803 = vsel %vm4553, %v4802, %v4801
    %s4804 = scalar_lea.vmem [#allocation3], 5
    %4805 = vst [vmem:[%s4804] ss:$24 sm:$0x1] %v4803
    %4806 = vst [vmem:[%s4804] ss:$24 sm:$0x0] %v4803
    %v4823 = vperm.slane %v4188, %v4493
    %v4824 = vperm.slane %v4189, %v4495
    %v4825 = vsel %vm4497, %v4824, %v4823
    %v4826 = vperm.slane %v4190, %v4499
    %v4827 = vsel %vm4501, %v4826, %v4825
    %v4828 = vperm.slane %v4191, %v4503
    %v4829 = vsel %vm4505, %v4828, %v4827
    %v4830 = vperm.slane %v4192, %v4507
    %v4831 = vsel %vm4509, %v4830, %v4829
    %v4832 = vperm.slane %v4193, %v4511
    %v4833 = vsel %vm4513, %v4832, %v4831
    %v4834 = vperm.slane %v4194, %v4515
    %v4835 = vsel %vm4517, %v4834, %v4833
    %v4836 = vperm.slane %v4195, %v4519
    %v4837 = vsel %vm4521, %v4836, %v4835
    %v4838 = vperm.slane %v4196, %v4523
    %v4839 = vsel %vm4525, %v4838, %v4837
    %v4840 = vperm.slane %v4197, %v4527
    %v4841 = vsel %vm4529, %v4840, %v4839
    %v4842 = vperm.slane %v4198, %v4531
    %v4843 = vsel %vm4533, %v4842, %v4841
    %v4844 = vperm.slane %v4199, %v4535
    %v4845 = vsel %vm4537, %v4844, %v4843
    %v4846 = vperm.slane %v4200, %v4539
    %v4847 = vsel %vm4541, %v4846, %v4845
    %v4848 = vperm.slane %v4201, %v4543
    %v4849 = vsel %vm4545, %v4848, %v4847
    %v4850 = vperm.slane %v4202, %v4547
    %v4851 = vsel %vm4549, %v4850, %v4849
    %v4852 = vperm.slane %v4203, %v4551
    %v4853 = vsel %vm4553, %v4852, %v4851
    %s4854 = scalar_lea.vmem [#allocation3], 6
    %4855 = vst [vmem:[%s4854] ss:$24 sm:$0x1] %v4853
    %4856 = vst [vmem:[%s4854] ss:$24 sm:$0x0] %v4853
    %v4873 = vperm.slane %v4204, %v4493
    %v4874 = vperm.slane %v4205, %v4495
    %v4875 = vsel %vm4497, %v4874, %v4873
    %v4876 = vperm.slane %v4206, %v4499
    %v4877 = vsel %vm4501, %v4876, %v4875
    %v4878 = vperm.slane %v4207, %v4503
    %v4879 = vsel %vm4505, %v4878, %v4877
    %v4880 = vperm.slane %v4208, %v4507
    %v4881 = vsel %vm4509, %v4880, %v4879
    %v4882 = vperm.slane %v4209, %v4511
    %v4883 = vsel %vm4513, %v4882, %v4881
    %v4884 = vperm.slane %v4210, %v4515
    %v4885 = vsel %vm4517, %v4884, %v4883
    %v4886 = vperm.slane %v4211, %v4519
    %v4887 = vsel %vm4521, %v4886, %v4885
    %v4888 = vperm.slane %v4212, %v4523
    %v4889 = vsel %vm4525, %v4888, %v4887
    %v4890 = vperm.slane %v4213, %v4527
    %v4891 = vsel %vm4529, %v4890, %v4889
    %v4892 = vperm.slane %v4214, %v4531
    %v4893 = vsel %vm4533, %v4892, %v4891
    %v4894 = vperm.slane %v4215, %v4535
    %v4895 = vsel %vm4537, %v4894, %v4893
    %v4896 = vperm.slane %v4216, %v4539
    %v4897 = vsel %vm4541, %v4896, %v4895
    %v4898 = vperm.slane %v4217, %v4543
    %v4899 = vsel %vm4545, %v4898, %v4897
    %v4900 = vperm.slane %v4218, %v4547
    %v4901 = vsel %vm4549, %v4900, %v4899
    %v4902 = vperm.slane %v4219, %v4551
    %v4903 = vsel %vm4553, %v4902, %v4901
    %s4904 = scalar_lea.vmem [#allocation3], 7
    %4905 = vst [vmem:[%s4904] ss:$24 sm:$0x1] %v4903
    %4906 = vst [vmem:[%s4904] ss:$24 sm:$0x0] %v4903
    %v4923 = vperm.slane %v4220, %v4493
    %v4924 = vperm.slane %v4221, %v4495
    %v4925 = vsel %vm4497, %v4924, %v4923
    %v4926 = vperm.slane %v4222, %v4499
    %v4927 = vsel %vm4501, %v4926, %v4925
    %v4928 = vperm.slane %v4223, %v4503
    %v4929 = vsel %vm4505, %v4928, %v4927
    %v4930 = vperm.slane %v4224, %v4507
    %v4931 = vsel %vm4509, %v4930, %v4929
    %v4932 = vperm.slane %v4225, %v4511
    %v4933 = vsel %vm4513, %v4932, %v4931
    %v4934 = vperm.slane %v4226, %v4515
    %v4935 = vsel %vm4517, %v4934, %v4933
    %v4936 = vperm.slane %v4227, %v4519
    %v4937 = vsel %vm4521, %v4936, %v4935
    %v4938 = vperm.slane %v4228, %v4523
    %v4939 = vsel %vm4525, %v4938, %v4937
    %v4940 = vperm.slane %v4229, %v4527
    %v4941 = vsel %vm4529, %v4940, %v4939
    %v4942 = vperm.slane %v4230, %v4531
    %v4943 = vsel %vm4533, %v4942, %v4941
    %v4944 = vperm.slane %v4231, %v4535
    %v4945 = vsel %vm4537, %v4944, %v4943
    %v4946 = vperm.slane %v4232, %v4539
    %v4947 = vsel %vm4541, %v4946, %v4945
    %v4948 = vperm.slane %v4233, %v4543
    %v4949 = vsel %vm4545, %v4948, %v4947
    %v4950 = vperm.slane %v4234, %v4547
    %v4951 = vsel %vm4549, %v4950, %v4949
    %v4952 = vperm.slane %v4235, %v4551
    %v4953 = vsel %vm4553, %v4952, %v4951
    %s4954 = scalar_lea.vmem [#allocation3], 8
    %4955 = vst [vmem:[%s4954] ss:$24 sm:$0x1] %v4953
    %4956 = vst [vmem:[%s4954] ss:$24 sm:$0x0] %v4953
    %v4973 = vperm.slane %v4236, %v4493
    %v4974 = vperm.slane %v4237, %v4495
    %v4975 = vsel %vm4497, %v4974, %v4973
    %v4976 = vperm.slane %v4238, %v4499
    %v4977 = vsel %vm4501, %v4976, %v4975
    %v4978 = vperm.slane %v4239, %v4503
    %v4979 = vsel %vm4505, %v4978, %v4977
    %v4980 = vperm.slane %v4240, %v4507
    %v4981 = vsel %vm4509, %v4980, %v4979
    %v4982 = vperm.slane %v4241, %v4511
    %v4983 = vsel %vm4513, %v4982, %v4981
    %v4984 = vperm.slane %v4242, %v4515
    %v4985 = vsel %vm4517, %v4984, %v4983
    %v4986 = vperm.slane %v4243, %v4519
    %v4987 = vsel %vm4521, %v4986, %v4985
    %v4988 = vperm.slane %v4244, %v4523
    %v4989 = vsel %vm4525, %v4988, %v4987
    %v4990 = vperm.slane %v4245, %v4527
    %v4991 = vsel %vm4529, %v4990, %v4989
    %v4992 = vperm.slane %v4246, %v4531
    %v4993 = vsel %vm4533, %v4992, %v4991
    %v4994 = vperm.slane %v4247, %v4535
    %v4995 = vsel %vm4537, %v4994, %v4993
    %v4996 = vperm.slane %v4248, %v4539
    %v4997 = vsel %vm4541, %v4996, %v4995
    %v4998 = vperm.slane %v4249, %v4543
    %v4999 = vsel %vm4545, %v4998, %v4997
    %v5000 = vperm.slane %v4250, %v4547
    %v5001 = vsel %vm4549, %v5000, %v4999
    %v5002 = vperm.slane %v4251, %v4551
    %v5003 = vsel %vm4553, %v5002, %v5001
    %s5004 = scalar_lea.vmem [#allocation3], 9
    %5005 = vst [vmem:[%s5004] ss:$24 sm:$0x1] %v5003
    %5006 = vst [vmem:[%s5004] ss:$24 sm:$0x0] %v5003
    %v5023 = vperm.slane %v4252, %v4493
    %v5024 = vperm.slane %v4253, %v4495
    %v5025 = vsel %vm4497, %v5024, %v5023
    %v5026 = vperm.slane %v4254, %v4499
    %v5027 = vsel %vm4501, %v5026, %v5025
    %v5028 = vperm.slane %v4255, %v4503
    %v5029 = vsel %vm4505, %v5028, %v5027
    %v5030 = vperm.slane %v4256, %v4507
    %v5031 = vsel %vm4509, %v5030, %v5029
    %v5032 = vperm.slane %v4257, %v4511
    %v5033 = vsel %vm4513, %v5032, %v5031
    %v5034 = vperm.slane %v4258, %v4515
    %v5035 = vsel %vm4517, %v5034, %v5033
    %v5036 = vperm.slane %v4259, %v4519
    %v5037 = vsel %vm4521, %v5036, %v5035
    %v5038 = vperm.slane %v4260, %v4523
    %v5039 = vsel %vm4525, %v5038, %v5037
    %v5040 = vperm.slane %v4261, %v4527
    %v5041 = vsel %vm4529, %v5040, %v5039
    %v5042 = vperm.slane %v4262, %v4531
    %v5043 = vsel %vm4533, %v5042, %v5041
    %v5044 = vperm.slane %v4263, %v4535
    %v5045 = vsel %vm4537, %v5044, %v5043
    %v5046 = vperm.slane %v4264, %v4539
    %v5047 = vsel %vm4541, %v5046, %v5045
    %v5048 = vperm.slane %v4265, %v4543
    %v5049 = vsel %vm4545, %v5048, %v5047
    %v5050 = vperm.slane %v4266, %v4547
    %v5051 = vsel %vm4549, %v5050, %v5049
    %v5052 = vperm.slane %v4267, %v4551
    %v5053 = vsel %vm4553, %v5052, %v5051
    %s5054 = scalar_lea.vmem [#allocation3], 10
    %5055 = vst [vmem:[%s5054] ss:$24 sm:$0x1] %v5053
    %5056 = vst [vmem:[%s5054] ss:$24 sm:$0x0] %v5053
    %v5073 = vperm.slane %v4268, %v4493
    %v5074 = vperm.slane %v4269, %v4495
    %v5075 = vsel %vm4497, %v5074, %v5073
    %v5076 = vperm.slane %v4270, %v4499
    %v5077 = vsel %vm4501, %v5076, %v5075
    %v5078 = vperm.slane %v4271, %v4503
    %v5079 = vsel %vm4505, %v5078, %v5077
    %v5080 = vperm.slane %v4272, %v4507
    %v5081 = vsel %vm4509, %v5080, %v5079
    %v5082 = vperm.slane %v4273, %v4511
    %v5083 = vsel %vm4513, %v5082, %v5081
    %v5084 = vperm.slane %v4274, %v4515
    %v5085 = vsel %vm4517, %v5084, %v5083
    %v5086 = vperm.slane %v4275, %v4519
    %v5087 = vsel %vm4521, %v5086, %v5085
    %v5088 = vperm.slane %v4276, %v4523
    %v5089 = vsel %vm4525, %v5088, %v5087
    %v5090 = vperm.slane %v4277, %v4527
    %v5091 = vsel %vm4529, %v5090, %v5089
    %v5092 = vperm.slane %v4278, %v4531
    %v5093 = vsel %vm4533, %v5092, %v5091
    %v5094 = vperm.slane %v4279, %v4535
    %v5095 = vsel %vm4537, %v5094, %v5093
    %v5096 = vperm.slane %v4280, %v4539
    %v5097 = vsel %vm4541, %v5096, %v5095
    %v5098 = vperm.slane %v4281, %v4543
    %v5099 = vsel %vm4545, %v5098, %v5097
    %v5100 = vperm.slane %v4282, %v4547
    %v5101 = vsel %vm4549, %v5100, %v5099
    %v5102 = vperm.slane %v4283, %v4551
    %v5103 = vsel %vm4553, %v5102, %v5101
    %s5104 = scalar_lea.vmem [#allocation3], 11
    %5105 = vst [vmem:[%s5104] ss:$24 sm:$0x1] %v5103
    %5106 = vst [vmem:[%s5104] ss:$24 sm:$0x0] %v5103
    %v5123 = vperm.slane %v4284, %v4493
    %v5124 = vperm.slane %v4285, %v4495
    %v5125 = vsel %vm4497, %v5124, %v5123
    %v5126 = vperm.slane %v4286, %v4499
    %v5127 = vsel %vm4501, %v5126, %v5125
    %v5128 = vperm.slane %v4287, %v4503
    %v5129 = vsel %vm4505, %v5128, %v5127
    %v5130 = vperm.slane %v4288, %v4507
    %v5131 = vsel %vm4509, %v5130, %v5129
    %v5132 = vperm.slane %v4289, %v4511
    %v5133 = vsel %vm4513, %v5132, %v5131
    %v5134 = vperm.slane %v4290, %v4515
    %v5135 = vsel %vm4517, %v5134, %v5133
    %v5136 = vperm.slane %v4291, %v4519
    %v5137 = vsel %vm4521, %v5136, %v5135
    %v5138 = vperm.slane %v4292, %v4523
    %v5139 = vsel %vm4525, %v5138, %v5137
    %v5140 = vperm.slane %v4293, %v4527
    %v5141 = vsel %vm4529, %v5140, %v5139
    %v5142 = vperm.slane %v4294, %v4531
    %v5143 = vsel %vm4533, %v5142, %v5141
    %v5144 = vperm.slane %v4295, %v4535
    %v5145 = vsel %vm4537, %v5144, %v5143
    %v5146 = vperm.slane %v4296, %v4539
    %v5147 = vsel %vm4541, %v5146, %v5145
    %v5148 = vperm.slane %v4297, %v4543
    %v5149 = vsel %vm4545, %v5148, %v5147
    %v5150 = vperm.slane %v4298, %v4547
    %v5151 = vsel %vm4549, %v5150, %v5149
    %v5152 = vperm.slane %v4299, %v4551
    %v5153 = vsel %vm4553, %v5152, %v5151
    %s5154 = scalar_lea.vmem [#allocation3], 12
    %5155 = vst [vmem:[%s5154] ss:$24 sm:$0x1] %v5153
    %5156 = vst [vmem:[%s5154] ss:$24 sm:$0x0] %v5153
    %v5173 = vperm.slane %v4300, %v4493
    %v5174 = vperm.slane %v4301, %v4495
    %v5175 = vsel %vm4497, %v5174, %v5173
    %v5176 = vperm.slane %v4302, %v4499
    %v5177 = vsel %vm4501, %v5176, %v5175
    %v5178 = vperm.slane %v4303, %v4503
    %v5179 = vsel %vm4505, %v5178, %v5177
    %v5180 = vperm.slane %v4304, %v4507
    %v5181 = vsel %vm4509, %v5180, %v5179
    %v5182 = vperm.slane %v4305, %v4511
    %v5183 = vsel %vm4513, %v5182, %v5181
    %v5184 = vperm.slane %v4306, %v4515
    %v5185 = vsel %vm4517, %v5184, %v5183
    %v5186 = vperm.slane %v4307, %v4519
    %v5187 = vsel %vm4521, %v5186, %v5185
    %v5188 = vperm.slane %v4308, %v4523
    %v5189 = vsel %vm4525, %v5188, %v5187
    %v5190 = vperm.slane %v4309, %v4527
    %v5191 = vsel %vm4529, %v5190, %v5189
    %v5192 = vperm.slane %v4310, %v4531
    %v5193 = vsel %vm4533, %v5192, %v5191
    %v5194 = vperm.slane %v4311, %v4535
    %v5195 = vsel %vm4537, %v5194, %v5193
    %v5196 = vperm.slane %v4312, %v4539
    %v5197 = vsel %vm4541, %v5196, %v5195
    %v5198 = vperm.slane %v4313, %v4543
    %v5199 = vsel %vm4545, %v5198, %v5197
    %v5200 = vperm.slane %v4314, %v4547
    %v5201 = vsel %vm4549, %v5200, %v5199
    %v5202 = vperm.slane %v4315, %v4551
    %v5203 = vsel %vm4553, %v5202, %v5201
    %s5204 = scalar_lea.vmem [#allocation3], 13
    %5205 = vst [vmem:[%s5204] ss:$24 sm:$0x1] %v5203
    %5206 = vst [vmem:[%s5204] ss:$24 sm:$0x0] %v5203
    %v5223 = vperm.slane %v4316, %v4493
    %v5224 = vperm.slane %v4317, %v4495
    %v5225 = vsel %vm4497, %v5224, %v5223
    %v5226 = vperm.slane %v4318, %v4499
    %v5227 = vsel %vm4501, %v5226, %v5225
    %v5228 = vperm.slane %v4319, %v4503
    %v5229 = vsel %vm4505, %v5228, %v5227
    %v5230 = vperm.slane %v4320, %v4507
    %v5231 = vsel %vm4509, %v5230, %v5229
    %v5232 = vperm.slane %v4321, %v4511
    %v5233 = vsel %vm4513, %v5232, %v5231
    %v5234 = vperm.slane %v4322, %v4515
    %v5235 = vsel %vm4517, %v5234, %v5233
    %v5236 = vperm.slane %v4323, %v4519
    %v5237 = vsel %vm4521, %v5236, %v5235
    %v5238 = vperm.slane %v4324, %v4523
    %v5239 = vsel %vm4525, %v5238, %v5237
    %v5240 = vperm.slane %v4325, %v4527
    %v5241 = vsel %vm4529, %v5240, %v5239
    %v5242 = vperm.slane %v4326, %v4531
    %v5243 = vsel %vm4533, %v5242, %v5241
    %v5244 = vperm.slane %v4327, %v4535
    %v5245 = vsel %vm4537, %v5244, %v5243
    %v5246 = vperm.slane %v4328, %v4539
    %v5247 = vsel %vm4541, %v5246, %v5245
    %v5248 = vperm.slane %v4329, %v4543
    %v5249 = vsel %vm4545, %v5248, %v5247
    %v5250 = vperm.slane %v4330, %v4547
    %v5251 = vsel %vm4549, %v5250, %v5249
    %v5252 = vperm.slane %v4331, %v4551
    %v5253 = vsel %vm4553, %v5252, %v5251
    %s5254 = scalar_lea.vmem [#allocation3], 14
    %5255 = vst [vmem:[%s5254] ss:$24 sm:$0x1] %v5253
    %5256 = vst [vmem:[%s5254] ss:$24 sm:$0x0] %v5253
    %v5273 = vperm.slane %v4332, %v4493
    %v5274 = vperm.slane %v4333, %v4495
    %v5275 = vsel %vm4497, %v5274, %v5273
    %v5276 = vperm.slane %v4334, %v4499
    %v5277 = vsel %vm4501, %v5276, %v5275
    %v5278 = vperm.slane %v4335, %v4503
    %v5279 = vsel %vm4505, %v5278, %v5277
    %v5280 = vperm.slane %v4336, %v4507
    %v5281 = vsel %vm4509, %v5280, %v5279
    %v5282 = vperm.slane %v4337, %v4511
    %v5283 = vsel %vm4513, %v5282, %v5281
    %v5284 = vperm.slane %v4338, %v4515
    %v5285 = vsel %vm4517, %v5284, %v5283
    %v5286 = vperm.slane %v4339, %v4519
    %v5287 = vsel %vm4521, %v5286, %v5285
    %v5288 = vperm.slane %v4340, %v4523
    %v5289 = vsel %vm4525, %v5288, %v5287
    %v5290 = vperm.slane %v4341, %v4527
    %v5291 = vsel %vm4529, %v5290, %v5289
    %v5292 = vperm.slane %v4342, %v4531
    %v5293 = vsel %vm4533, %v5292, %v5291
    %v5294 = vperm.slane %v4343, %v4535
    %v5295 = vsel %vm4537, %v5294, %v5293
    %v5296 = vperm.slane %v4344, %v4539
    %v5297 = vsel %vm4541, %v5296, %v5295
    %v5298 = vperm.slane %v4345, %v4543
    %v5299 = vsel %vm4545, %v5298, %v5297
    %v5300 = vperm.slane %v4346, %v4547
    %v5301 = vsel %vm4549, %v5300, %v5299
    %v5302 = vperm.slane %v4347, %v4551
    %v5303 = vsel %vm4553, %v5302, %v5301
    %s5304 = scalar_lea.vmem [#allocation3], 15
    %5305 = vst [vmem:[%s5304] ss:$24 sm:$0x1] %v5303
    %5306 = vst [vmem:[%s5304] ss:$24 sm:$0x0] %v5303
    %v5323 = vperm.slane %v4348, %v4493
    %v5324 = vperm.slane %v4349, %v4495
    %v5325 = vsel %vm4497, %v5324, %v5323
    %v5326 = vperm.slane %v4350, %v4499
    %v5327 = vsel %vm4501, %v5326, %v5325
    %v5328 = vperm.slane %v4351, %v4503
    %v5329 = vsel %vm4505, %v5328, %v5327
    %v5330 = vperm.slane %v4352, %v4507
    %v5331 = vsel %vm4509, %v5330, %v5329
    %v5332 = vperm.slane %v4353, %v4511
    %v5333 = vsel %vm4513, %v5332, %v5331
    %v5334 = vperm.slane %v4354, %v4515
    %v5335 = vsel %vm4517, %v5334, %v5333
    %v5336 = vperm.slane %v4355, %v4519
    %v5337 = vsel %vm4521, %v5336, %v5335
    %v5338 = vperm.slane %v4356, %v4523
    %v5339 = vsel %vm4525, %v5338, %v5337
    %v5340 = vperm.slane %v4357, %v4527
    %v5341 = vsel %vm4529, %v5340, %v5339
    %v5342 = vperm.slane %v4358, %v4531
    %v5343 = vsel %vm4533, %v5342, %v5341
    %v5344 = vperm.slane %v4359, %v4535
    %v5345 = vsel %vm4537, %v5344, %v5343
    %v5346 = vperm.slane %v4360, %v4539
    %v5347 = vsel %vm4541, %v5346, %v5345
    %v5348 = vperm.slane %v4361, %v4543
    %v5349 = vsel %vm4545, %v5348, %v5347
    %v5350 = vperm.slane %v4362, %v4547
    %v5351 = vsel %vm4549, %v5350, %v5349
    %v5352 = vperm.slane %v4363, %v4551
    %v5353 = vsel %vm4553, %v5352, %v5351
    %s5354 = scalar_lea.vmem [#allocation3], 16
    %5355 = vst [vmem:[%s5354] ss:$24 sm:$0x1] %v5353
    %5356 = vst [vmem:[%s5354] ss:$24 sm:$0x0] %v5353
    %v5373 = vperm.slane %v4364, %v4493
    %v5374 = vperm.slane %v4365, %v4495
    %v5375 = vsel %vm4497, %v5374, %v5373
    %v5376 = vperm.slane %v4366, %v4499
    %v5377 = vsel %vm4501, %v5376, %v5375
    %v5378 = vperm.slane %v4367, %v4503
    %v5379 = vsel %vm4505, %v5378, %v5377
    %v5380 = vperm.slane %v4368, %v4507
    %v5381 = vsel %vm4509, %v5380, %v5379
    %v5382 = vperm.slane %v4369, %v4511
    %v5383 = vsel %vm4513, %v5382, %v5381
    %v5384 = vperm.slane %v4370, %v4515
    %v5385 = vsel %vm4517, %v5384, %v5383
    %v5386 = vperm.slane %v4371, %v4519
    %v5387 = vsel %vm4521, %v5386, %v5385
    %v5388 = vperm.slane %v4372, %v4523
    %v5389 = vsel %vm4525, %v5388, %v5387
    %v5390 = vperm.slane %v4373, %v4527
    %v5391 = vsel %vm4529, %v5390, %v5389
    %v5392 = vperm.slane %v4374, %v4531
    %v5393 = vsel %vm4533, %v5392, %v5391
    %v5394 = vperm.slane %v4375, %v4535
    %v5395 = vsel %vm4537, %v5394, %v5393
    %v5396 = vperm.slane %v4376, %v4539
    %v5397 = vsel %vm4541, %v5396, %v5395
    %v5398 = vperm.slane %v4377, %v4543
    %v5399 = vsel %vm4545, %v5398, %v5397
    %v5400 = vperm.slane %v4378, %v4547
    %v5401 = vsel %vm4549, %v5400, %v5399
    %v5402 = vperm.slane %v4379, %v4551
    %v5403 = vsel %vm4553, %v5402, %v5401
    %s5404 = scalar_lea.vmem [#allocation3], 17
    %5405 = vst [vmem:[%s5404] ss:$24 sm:$0x1] %v5403
    %5406 = vst [vmem:[%s5404] ss:$24 sm:$0x0] %v5403
    %v5423 = vperm.slane %v4380, %v4493
    %v5424 = vperm.slane %v4381, %v4495
    %v5425 = vsel %vm4497, %v5424, %v5423
    %v5426 = vperm.slane %v4382, %v4499
    %v5427 = vsel %vm4501, %v5426, %v5425
    %v5428 = vperm.slane %v4383, %v4503
    %v5429 = vsel %vm4505, %v5428, %v5427
    %v5430 = vperm.slane %v4384, %v4507
    %v5431 = vsel %vm4509, %v5430, %v5429
    %v5432 = vperm.slane %v4385, %v4511
    %v5433 = vsel %vm4513, %v5432, %v5431
    %v5434 = vperm.slane %v4386, %v4515
    %v5435 = vsel %vm4517, %v5434, %v5433
    %v5436 = vperm.slane %v4387, %v4519
    %v5437 = vsel %vm4521, %v5436, %v5435
    %v5438 = vperm.slane %v4388, %v4523
    %v5439 = vsel %vm4525, %v5438, %v5437
    %v5440 = vperm.slane %v4389, %v4527
    %v5441 = vsel %vm4529, %v5440, %v5439
    %v5442 = vperm.slane %v4390, %v4531
    %v5443 = vsel %vm4533, %v5442, %v5441
    %v5444 = vperm.slane %v4391, %v4535
    %v5445 = vsel %vm4537, %v5444, %v5443
    %v5446 = vperm.slane %v4392, %v4539
    %v5447 = vsel %vm4541, %v5446, %v5445
    %v5448 = vperm.slane %v4393, %v4543
    %v5449 = vsel %vm4545, %v5448, %v5447
    %v5450 = vperm.slane %v4394, %v4547
    %v5451 = vsel %vm4549, %v5450, %v5449
    %v5452 = vperm.slane %v4395, %v4551
    %v5453 = vsel %vm4553, %v5452, %v5451
    %s5454 = scalar_lea.vmem [#allocation3], 18
    %5455 = vst [vmem:[%s5454] ss:$24 sm:$0x1] %v5453
    %5456 = vst [vmem:[%s5454] ss:$24 sm:$0x0] %v5453
    %v5473 = vperm.slane %v4396, %v4493
    %v5474 = vperm.slane %v4397, %v4495
    %v5475 = vsel %vm4497, %v5474, %v5473
    %v5476 = vperm.slane %v4398, %v4499
    %v5477 = vsel %vm4501, %v5476, %v5475
    %v5478 = vperm.slane %v4399, %v4503
    %v5479 = vsel %vm4505, %v5478, %v5477
    %v5480 = vperm.slane %v4400, %v4507
    %v5481 = vsel %vm4509, %v5480, %v5479
    %v5482 = vperm.slane %v4401, %v4511
    %v5483 = vsel %vm4513, %v5482, %v5481
    %v5484 = vperm.slane %v4402, %v4515
    %v5485 = vsel %vm4517, %v5484, %v5483
    %v5486 = vperm.slane %v4403, %v4519
    %v5487 = vsel %vm4521, %v5486, %v5485
    %v5488 = vperm.slane %v4404, %v4523
    %v5489 = vsel %vm4525, %v5488, %v5487
    %v5490 = vperm.slane %v4405, %v4527
    %v5491 = vsel %vm4529, %v5490, %v5489
    %v5492 = vperm.slane %v4406, %v4531
    %v5493 = vsel %vm4533, %v5492, %v5491
    %v5494 = vperm.slane %v4407, %v4535
    %v5495 = vsel %vm4537, %v5494, %v5493
    %v5496 = vperm.slane %v4408, %v4539
    %v5497 = vsel %vm4541, %v5496, %v5495
    %v5498 = vperm.slane %v4409, %v4543
    %v5499 = vsel %vm4545, %v5498, %v5497
    %v5500 = vperm.slane %v4410, %v4547
    %v5501 = vsel %vm4549, %v5500, %v5499
    %v5502 = vperm.slane %v4411, %v4551
    %v5503 = vsel %vm4553, %v5502, %v5501
    %s5504 = scalar_lea.vmem [#allocation3], 19
    %5505 = vst [vmem:[%s5504] ss:$24 sm:$0x1] %v5503
    %5506 = vst [vmem:[%s5504] ss:$24 sm:$0x0] %v5503
    %v5523 = vperm.slane %v4412, %v4493
    %v5524 = vperm.slane %v4413, %v4495
    %v5525 = vsel %vm4497, %v5524, %v5523
    %v5526 = vperm.slane %v4414, %v4499
    %v5527 = vsel %vm4501, %v5526, %v5525
    %v5528 = vperm.slane %v4415, %v4503
    %v5529 = vsel %vm4505, %v5528, %v5527
    %v5530 = vperm.slane %v4416, %v4507
    %v5531 = vsel %vm4509, %v5530, %v5529
    %v5532 = vperm.slane %v4417, %v4511
    %v5533 = vsel %vm4513, %v5532, %v5531
    %v5534 = vperm.slane %v4418, %v4515
    %v5535 = vsel %vm4517, %v5534, %v5533
    %v5536 = vperm.slane %v4419, %v4519
    %v5537 = vsel %vm4521, %v5536, %v5535
    %v5538 = vperm.slane %v4420, %v4523
    %v5539 = vsel %vm4525, %v5538, %v5537
    %v5540 = vperm.slane %v4421, %v4527
    %v5541 = vsel %vm4529, %v5540, %v5539
    %v5542 = vperm.slane %v4422, %v4531
    %v5543 = vsel %vm4533, %v5542, %v5541
    %v5544 = vperm.slane %v4423, %v4535
    %v5545 = vsel %vm4537, %v5544, %v5543
    %v5546 = vperm.slane %v4424, %v4539
    %v5547 = vsel %vm4541, %v5546, %v5545
    %v5548 = vperm.slane %v4425, %v4543
    %v5549 = vsel %vm4545, %v5548, %v5547
    %v5550 = vperm.slane %v4426, %v4547
    %v5551 = vsel %vm4549, %v5550, %v5549
    %v5552 = vperm.slane %v4427, %v4551
    %v5553 = vsel %vm4553, %v5552, %v5551
    %s5554 = scalar_lea.vmem [#allocation3], 20
    %5555 = vst [vmem:[%s5554] ss:$24 sm:$0x1] %v5553
    %5556 = vst [vmem:[%s5554] ss:$24 sm:$0x0] %v5553
    %v5573 = vperm.slane %v4428, %v4493
    %v5574 = vperm.slane %v4429, %v4495
    %v5575 = vsel %vm4497, %v5574, %v5573
    %v5576 = vperm.slane %v4430, %v4499
    %v5577 = vsel %vm4501, %v5576, %v5575
    %v5578 = vperm.slane %v4431, %v4503
    %v5579 = vsel %vm4505, %v5578, %v5577
    %v5580 = vperm.slane %v4432, %v4507
    %v5581 = vsel %vm4509, %v5580, %v5579
    %v5582 = vperm.slane %v4433, %v4511
    %v5583 = vsel %vm4513, %v5582, %v5581
    %v5584 = vperm.slane %v4434, %v4515
    %v5585 = vsel %vm4517, %v5584, %v5583
    %v5586 = vperm.slane %v4435, %v4519
    %v5587 = vsel %vm4521, %v5586, %v5585
    %v5588 = vperm.slane %v4436, %v4523
    %v5589 = vsel %vm4525, %v5588, %v5587
    %v5590 = vperm.slane %v4437, %v4527
    %v5591 = vsel %vm4529, %v5590, %v5589
    %v5592 = vperm.slane %v4438, %v4531
    %v5593 = vsel %vm4533, %v5592, %v5591
    %v5594 = vperm.slane %v4439, %v4535
    %v5595 = vsel %vm4537, %v5594, %v5593
    %v5596 = vperm.slane %v4440, %v4539
    %v5597 = vsel %vm4541, %v5596, %v5595
    %v5598 = vperm.slane %v4441, %v4543
    %v5599 = vsel %vm4545, %v5598, %v5597
    %v5600 = vperm.slane %v4442, %v4547
    %v5601 = vsel %vm4549, %v5600, %v5599
    %v5602 = vperm.slane %v4443, %v4551
    %v5603 = vsel %vm4553, %v5602, %v5601
    %s5604 = scalar_lea.vmem [#allocation3], 21
    %5605 = vst [vmem:[%s5604] ss:$24 sm:$0x1] %v5603
    %5606 = vst [vmem:[%s5604] ss:$24 sm:$0x0] %v5603
    %v5623 = vperm.slane %v4444, %v4493
    %v5624 = vperm.slane %v4445, %v4495
    %v5625 = vsel %vm4497, %v5624, %v5623
    %v5626 = vperm.slane %v4446, %v4499
    %v5627 = vsel %vm4501, %v5626, %v5625
    %v5628 = vperm.slane %v4447, %v4503
    %v5629 = vsel %vm4505, %v5628, %v5627
    %v5630 = vperm.slane %v4448, %v4507
    %v5631 = vsel %vm4509, %v5630, %v5629
    %v5632 = vperm.slane %v4449, %v4511
    %v5633 = vsel %vm4513, %v5632, %v5631
    %v5634 = vperm.slane %v4450, %v4515
    %v5635 = vsel %vm4517, %v5634, %v5633
    %v5636 = vperm.slane %v4451, %v4519
    %v5637 = vsel %vm4521, %v5636, %v5635
    %v5638 = vperm.slane %v4452, %v4523
    %v5639 = vsel %vm4525, %v5638, %v5637
    %v5640 = vperm.slane %v4453, %v4527
    %v5641 = vsel %vm4529, %v5640, %v5639
    %v5642 = vperm.slane %v4454, %v4531
    %v5643 = vsel %vm4533, %v5642, %v5641
    %v5644 = vperm.slane %v4455, %v4535
    %v5645 = vsel %vm4537, %v5644, %v5643
    %v5646 = vperm.slane %v4456, %v4539
    %v5647 = vsel %vm4541, %v5646, %v5645
    %v5648 = vperm.slane %v4457, %v4543
    %v5649 = vsel %vm4545, %v5648, %v5647
    %v5650 = vperm.slane %v4458, %v4547
    %v5651 = vsel %vm4549, %v5650, %v5649
    %v5652 = vperm.slane %v4459, %v4551
    %v5653 = vsel %vm4553, %v5652, %v5651
    %s5654 = scalar_lea.vmem [#allocation3], 22
    %5655 = vst [vmem:[%s5654] ss:$24 sm:$0x1] %v5653
    %5656 = vst [vmem:[%s5654] ss:$24 sm:$0x0] %v5653
    %v5673 = vperm.slane %v4460, %v4493
    %v5674 = vperm.slane %v4461, %v4495
    %v5675 = vsel %vm4497, %v5674, %v5673
    %v5676 = vperm.slane %v4462, %v4499
    %v5677 = vsel %vm4501, %v5676, %v5675
    %v5678 = vperm.slane %v4463, %v4503
    %v5679 = vsel %vm4505, %v5678, %v5677
    %v5680 = vperm.slane %v4464, %v4507
    %v5681 = vsel %vm4509, %v5680, %v5679
    %v5682 = vperm.slane %v4465, %v4511
    %v5683 = vsel %vm4513, %v5682, %v5681
    %v5684 = vperm.slane %v4466, %v4515
    %v5685 = vsel %vm4517, %v5684, %v5683
    %v5686 = vperm.slane %v4467, %v4519
    %v5687 = vsel %vm4521, %v5686, %v5685
    %v5688 = vperm.slane %v4468, %v4523
    %v5689 = vsel %vm4525, %v5688, %v5687
    %v5690 = vperm.slane %v4469, %v4527
    %v5691 = vsel %vm4529, %v5690, %v5689
    %v5692 = vperm.slane %v4470, %v4531
    %v5693 = vsel %vm4533, %v5692, %v5691
    %v5694 = vperm.slane %v4471, %v4535
    %v5695 = vsel %vm4537, %v5694, %v5693
    %v5696 = vperm.slane %v4472, %v4539
    %v5697 = vsel %vm4541, %v5696, %v5695
    %v5698 = vperm.slane %v4473, %v4543
    %v5699 = vsel %vm4545, %v5698, %v5697
    %v5700 = vperm.slane %v4474, %v4547
    %v5701 = vsel %vm4549, %v5700, %v5699
    %v5702 = vperm.slane %v4475, %v4551
    %v5703 = vsel %vm4553, %v5702, %v5701
    %s5704 = scalar_lea.vmem [#allocation3], 23
    %5705 = vst [vmem:[%s5704] ss:$24 sm:$0x1] %v5703
    %5706 = vst [vmem:[%s5704] ss:$24 sm:$0x0] %v5703
    // Predicated region
    $region22: #{tpu_custom_call.1} parent=1 // pred_check
      _
    $region23: #{tpu_custom_call.1} parent=1 // pred_check_branch
      %5708 = sbr.rel (0) target = $region25
    $region24: #{tpu_custom_call.1} parent=1 // pred_region
      %5710 = vsyncadd [#allocation4], 0
      %s5711 = sshll.u32 [#allocation3], 4
      %s5712 = int_to_ptr.vmem [resolvable:$true] %s5711
      %s5713 = sshll.u32 %s5, 4
      %s5714 = int_to_ptr.hbm [resolvable:$true] %s5713
      %5719 = dma.vmem_to_hbm [thread:$0]  %s5712, 384, %s5714, [#allocation4], 128, 128, 8
    $region25: #{tpu_custom_call.1} parent=1 // pred_fallthru
      _
    // Predicated region
    $region26: #{tpu_custom_call.1} parent=1 // pred_check
      _
    $region27: #{tpu_custom_call.1} parent=1 // pred_check_branch
      %5721 = sbr.rel (0) target = $region29
    $region28: #{tpu_custom_call.1} parent=1 // pred_region
      %5723 = dma.done [#allocation4], 384
    $region29: #{tpu_custom_call.1} parent=1 // pred_fallthru
      _
    %5724 = vsyncpa [#allocation4], 1

</llo_original>
